<compile_context>
chip_gen: v6e
topology: v6e:2x2x1
jax: 0.10.0
libtpu: 0.0.40
codegen_flags: <defaults>
</compile_context>

<pallas_src>
import functools

import jax
import jax.numpy as jnp
from jax.experimental import pallas as pl
from jax.experimental.pallas import tpu as pltpu

EPS = 1e-5
LANE = 128
_VMEM_LIMIT = 32 * 1024 * 1024      # scoped-VMEM request; safe on v5e/v6e (128 MiB) and v7x (64 MiB)
_DEFAULT_TILE_M = 512               # rows per grid step (512-1024 recommended, multiple of 16)


def _round_up(x, m):
    return ((x + m - 1) // m) * m


# ---------------------------------------------------------------- Pallas kernels

def _stage0_kernel(p0_ref, xs_ref, w0_ref, wsk_ref,
                   z0_ref, zs_ref, s0_ref, q0_ref, ss_ref, qs_ref):
    """conv0 (im2col matmul) + skip 1x1 matmul; accumulate per-channel BN statistics.

    Grid: (Mp // TM,), axis "arbitrary".  Weights are grid-resident (constant index_map);
    the four (1, Cp) statistic outputs are grid-resident accumulators (init at step 0).
    The pre-BN tensors go back to HBM as bf16; statistics are taken from the f32 MXU
    results so mean/var stay f32-exact.  Conv biases are omitted (training BN cancels them).
    """
    @pl.when(pl.program_id(0) == 0)
    def _init():
        s0_ref[...] = jnp.zeros_like(s0_ref)
        q0_ref[...] = jnp.zeros_like(q0_ref)
        ss_ref[...] = jnp.zeros_like(ss_ref)
        qs_ref[...] = jnp.zeros_like(qs_ref)

    z0 = jnp.dot(p0_ref[...], w0_ref[...], preferred_element_type=jnp.float32)
    zs = jnp.dot(xs_ref[...], wsk_ref[...], preferred_element_type=jnp.float32)
    s0_ref[...] += jnp.sum(z0, axis=0, keepdims=True)
    q0_ref[...] += jnp.sum(z0 * z0, axis=0, keepdims=True)
    ss_ref[...] += jnp.sum(zs, axis=0, keepdims=True)
    qs_ref[...] += jnp.sum(zs * zs, axis=0, keepdims=True)
    z0_ref[...] = z0.astype(z0_ref.dtype)
    zs_ref[...] = zs.astype(zs_ref.dtype)


def _conv1_fused_kernel(zf_ref, sc0_ref, sh0_ref, w_ref,
                        z1_ref, s_ref, q_ref, yb_ref, acc_ref, *, wp, wo, ho):
    """Fused BN0+ReLU, conv1 (3x3 stride 1, implicit im2col) and BN1 statistics.

    zf_ref:   (1, S, Cp) bf16 -- one zero-padded pre-BN conv0 image, spatial dims flattened
                                 (1 top / 2 bottom / 1 left / 1 right pad), S = (Ho+3)*Wp.
    sc0/sh0:  (1, Cp)   f32   -- precomputed BN0 per-channel scale/shift (grid-resident).
    w_ref:    (9, Cp, Cp) bf16 -- tap-major conv1 weights (grid-resident).
    z1_ref:   (1, L, Cp) bf16  -- pre-BN conv1 output at padded width, L = Ho*Wp.
    s_ref/q_ref: (1, Cp) f32 grid-resident sum / sum-of-squares accumulators.
    yb_ref:   (S, Cp) bf16 VMEM scratch -- BN0+ReLU'd (and pad-masked) conv1 input image.
    acc_ref:  (L, Cp) f32 VMEM scratch accumulator.

    Because the image is flattened row-major at padded width Wp, the input rows needed by
    tap (kh, kw) are exactly the contiguous flat rows [kh*Wp + kw, kh*Wp + kw + L).
    """
    @pl.when(pl.program_id(0) == 0)
    def _init():
        s_ref[...] = jnp.zeros_like(s_ref)
        q_ref[...] = jnp.zeros_like(q_ref)

    # BN0 affine + ReLU with the conv zero-padding re-imposed (pad positions must stay 0
    # even though relu(shift) may be > 0).  Flat row r -> padded (row, col) = (r//Wp, r%Wp);
    # the valid interior is rows [1, Ho] and cols [1, Wo] (no division needed for the row
    # test: row>=1 <=> r>=Wp, row<=Ho <=> r<(Ho+1)*Wp).
    r = jax.lax.broadcasted_iota(jnp.int32, yb_ref.shape, 0)
    c = r % wp
    valid = (r >= wp) & (r < (ho + 1) * wp) & (c >= 1) & (c <= wo)
    y = zf_ref[0].astype(jnp.float32) * sc0_ref[...] + sh0_ref[...]
    y = jnp.where(valid, jnp.maximum(y, 0.0), 0.0)
    yb_ref[...] = y.astype(yb_ref.dtype)

    # conv1 as 9 shifted tap matmuls against the VMEM-resident masked image.
    acc_ref[...] = jnp.zeros_like(acc_ref)
    L = acc_ref.shape[0]
    for kh in range(3):
        for kw in range(3):
            off = kh * wp + kw                       # static flat-row offset of this tap
            acc_ref[...] += jnp.dot(yb_ref[off:off + L, :], w_ref[3 * kh + kw],
                                    preferred_element_type=jnp.float32)

    # zero the (Wp - Wo) garbage columns of each output row (horizontal pad positions)
    # before accumulating statistics and writing the tile back (bf16).
    col = jax.lax.broadcasted_iota(jnp.int32, acc_ref.shape, 0) % wp
    z1 = jnp.where(col < wo, acc_ref[...], 0.0)
    s_ref[...] += jnp.sum(z1, axis=0, keepdims=True)
    q_ref[...] += jnp.sum(z1 * z1, axis=0, keepdims=True)
    z1_ref[0] = z1.astype(z1_ref.dtype)


def _residual_bn_relu_kernel(z1_ref, zs_ref, sc1_ref, sh1_ref, scs_ref, shs_ref, o_ref):
    """out = relu(bn1(z1) + bn_skip(zs)) with precomputed per-channel scale/shift (f32 math)."""
    y = (z1_ref[...].astype(jnp.float32) * sc1_ref[...] + sh1_ref[...]
         + zs_ref[...].astype(jnp.float32) * scs_ref[...] + shs_ref[...])
    o_ref[...] = jnp.maximum(y, 0.0)


# ---------------------------------------------------------------- JAX glue

def _im2col_3x3(x_nhwc, stride):
    """3x3 patches with padding=1 -> (N*Ho*Wo, 9*C); column order (kh, kw, c)."""
    N, H, W, C = x_nhwc.shape
    Ho = (H - 1) // stride + 1
    Wo = (W - 1) // stride + 1
    xp = jnp.pad(x_nhwc, ((0, 0), (1, 1), (1, 1), (0, 0)))
    cols = []
    for kh in range(3):
        for kw in range(3):
            cols.append(xp[:, kh:kh + (Ho - 1) * stride + 1:stride,
                           kw:kw + (Wo - 1) * stride + 1:stride, :])
    p = jnp.concatenate(cols, axis=-1)
    return p.reshape(N * Ho * Wo, 9 * C), (Ho, Wo)
# TODO(synk): conv0 (stride 2) still materializes im2col patches in HBM; an implicit
# stride-2 formulation (space-to-depth phases) would cut that input traffic as well.


def _bn_affine(s, q, count, gamma, beta):
    """Per-channel scale/shift from accumulated sum / sum-of-squares (one-sweep variance)."""
    mean = s / count
    var = jnp.maximum(q / count - mean * mean, 0.0)   # guard tiny negative from cancellation
    inv_std = jax.lax.rsqrt(var + EPS)
    scale = gamma * inv_std
    shift = beta - mean * scale
    return scale, shift


def resnet_layer_forward(x_nchw, params, downsample=True, tile_m=None):
    stride = 2 if downsample else 1
    x = jnp.transpose(x_nchw, (0, 2, 3, 1)).astype(jnp.float32)        # NHWC
    N, H, W, Cin = x.shape
    Cout = params["w0"].shape[-1]
    Cp = _round_up(Cout, LANE)                                         # lane-dense channels
    dcp = Cp - Cout

    # ---- glue: conv0 patches + skip samples, row tiling -------------------------------
    p0, (Ho, Wo) = _im2col_3x3(x, stride)                              # (M, 9*Cin)
    M = N * Ho * Wo
    tm = _DEFAULT_TILE_M if tile_m is None else tile_m
    TM = min(_round_up(tm, 16), _round_up(M, 16))                      # 16: bf16 sublane pack
    Mp = _round_up(M, TM)
    n_tiles = Mp // TM

    K0 = 9 * Cin
    p0 = jnp.pad(p0, ((0, Mp - M), (0, 0))).astype(jnp.bfloat16)
    xs = x[:, ::stride, ::stride, :].reshape(M, Cin)                   # 1x1-conv stride-s samples
    xs = jnp.pad(xs, ((0, Mp - M), (0, 0))).astype(jnp.bfloat16)

    w0 = jnp.pad(params["w0"], ((0, 0), (0, 0), (0, 0), (0, dcp)))
    w0 = w0.reshape(K0, Cp).astype(jnp.bfloat16)
    wsk = jnp.pad(params["wsk"], ((0, 0), (0, dcp))).astype(jnp.bfloat16)

    g0 = jnp.pad(params["g0"], ((0, 0), (0, dcp)))
    be0 = jnp.pad(params["be0"], ((0, 0), (0, dcp)))
    g1 = jnp.pad(params["g1"], ((0, 0), (0, dcp)))
    be1 = jnp.pad(params["be1"], ((0, 0), (0, dcp)))
    gsk = jnp.pad(params["gsk"], ((0, 0), (0, dcp)))
    besk = jnp.pad(params["besk"], ((0, 0), (0, dcp)))

    stat = jax.ShapeDtypeStruct((1, Cp), jnp.float32)
    cparams_acc = pltpu.CompilerParams(dimension_semantics=("arbitrary",),
                                       vmem_limit_bytes=_VMEM_LIMIT)
    cparams_par = pltpu.CompilerParams(dimension_semantics=("parallel",),
                                       vmem_limit_bytes=_VMEM_LIMIT)

    # ---- pass 1: conv0 & skip matmuls (bf16 out) + BN statistics (f32) -----------------
    z0, zs, s0, q0, ss, qs = pl.pallas_call(
        _stage0_kernel,
        grid=(n_tiles,),
        in_specs=[
            pl.BlockSpec((TM, K0), lambda i: (i, 0)),
            pl.BlockSpec((TM, Cin), lambda i: (i, 0)),
            pl.BlockSpec((K0, Cp), lambda i: (0, 0)),       # resident weights
            pl.BlockSpec((Cin, Cp), lambda i: (0, 0)),
        ],
        out_specs=(
            pl.BlockSpec((TM, Cp), lambda i: (i, 0)),
            pl.BlockSpec((TM, Cp), lambda i: (i, 0)),
            pl.BlockSpec((1, Cp), lambda i: (0, 0)),        # resident stat accumulators
            pl.BlockSpec((1, Cp), lambda i: (0, 0)),
            pl.BlockSpec((1, Cp), lambda i: (0, 0)),
            pl.BlockSpec((1, Cp), lambda i: (0, 0)),
        ),
        out_shape=(
            jax.ShapeDtypeStruct((Mp, Cp), jnp.bfloat16),
            jax.ShapeDtypeStruct((Mp, Cp), jnp.bfloat16),
            stat, stat, stat, stat,
        ),
        compiler_params=cparams_acc,
    )(p0, xs, w0, wsk)

    # per-channel BN0 / BN_skip affine (tiny (1, Cp) math, done in glue)
    sc0, sh0 = _bn_affine(s0, q0, M, g0, be0)
    scs, shs = _bn_affine(ss, qs, M, gsk, besk)

    # ---- pass 2: conv1 with fused BN0+ReLU on its input + BN1 stats (grid over batch) ---
    Wp = Wo + 2
    S = (Ho + 3) * Wp            # extra bottom pad row keeps every tap a single flat slice
    L = Ho * Wp                  # conv1 output rows per image, at padded width
    z0_img = z0[:M].reshape(N, Ho, Wo, Cp)
    z0_flat = jnp.pad(z0_img, ((0, 0), (1, 2), (1, 1), (0, 0))).reshape(N, S, Cp)

    w1 = jnp.pad(params["w1"], ((0, 0), (0, 0), (0, dcp), (0, dcp)))
    w1 = w1.reshape(9, Cp, Cp).astype(jnp.bfloat16)

    z1f, s1, q1 = pl.pallas_call(
        functools.partial(_conv1_fused_kernel, wp=Wp, wo=Wo, ho=Ho),
        grid=(N,),
        in_specs=[
            pl.BlockSpec((1, S, Cp), lambda n: (n, 0, 0)),
            pl.BlockSpec((1, Cp), lambda n: (0, 0)),          # resident BN0 scale/shift
            pl.BlockSpec((1, Cp), lambda n: (0, 0)),
            pl.BlockSpec((9, Cp, Cp), lambda n: (0, 0, 0)),   # resident tap weights
        ],
        out_specs=(
            pl.BlockSpec((1, L, Cp), lambda n: (n, 0, 0)),
            pl.BlockSpec((1, Cp), lambda n: (0, 0)),
            pl.BlockSpec((1, Cp), lambda n: (0, 0)),
        ),
        out_shape=(
            jax.ShapeDtypeStruct((N, L, Cp), jnp.bfloat16),
            stat, stat,
        ),
        scratch_shapes=[pltpu.VMEM((S, Cp), jnp.bfloat16),
                        pltpu.VMEM((L, Cp), jnp.float32)],
        compiler_params=cparams_acc,
    )(z0_flat, sc0, sh0, w1)

    sc1, sh1 = _bn_affine(s1, q1, M, g1, be1)

    # strip the padded-width columns, re-tile by rows for the fused final pass
    z1 = z1f.reshape(N, Ho, Wp, Cp)[:, :, :Wo, :].reshape(M, Cp)
    z1 = jnp.pad(z1, ((0, Mp - M), (0, 0)))

    # ---- pass 3: out = relu(bn1(z1) + bn_skip(zs)) --------------------------------------
    out_full = pl.pallas_call(
        _residual_bn_relu_kernel,
        grid=(n_tiles,),
        in_specs=[
            pl.BlockSpec((TM, Cp), lambda i: (i, 0)),
            pl.BlockSpec((TM, Cp), lambda i: (i, 0)),
            pl.BlockSpec((1, Cp), lambda i: (0, 0)),
            pl.BlockSpec((1, Cp), lambda i: (0, 0)),
            pl.BlockSpec((1, Cp), lambda i: (0, 0)),
            pl.BlockSpec((1, Cp), lambda i: (0, 0)),
        ],
        out_specs=pl.BlockSpec((TM, Cp), lambda i: (i, 0)),
        out_shape=jax.ShapeDtypeStruct((Mp, Cp), jnp.float32),
        compiler_params=cparams_par,
    )(z1, zs, sc1, sh1, scs, shs)

    out = out_full[:M, :Cout].reshape(N, Ho, Wo, Cout)
    return jnp.transpose(out, (0, 3, 1, 2))                  # back to NCHW


# ---------------------------------------------------------------- pure-JAX reference

def _ref_forward(x_nchw, params, downsample=True):
    stride = 2 if downsample else 1
    dn = ("NHWC", "HWIO", "NHWC")
    x = jnp.transpose(x_nchw, (0, 2, 3, 1)).astype(jnp.float32)

    def conv(xx, w, b, s, pad):
        y = jax.lax.conv_general_dilated(xx, w, (s, s), pad, dimension_numbers=dn,
                                         precision=jax.lax.Precision.HIGHEST)
        return y + b.reshape(1, 1, 1, -1)

    def bn(z, g, be):
        mean = jnp.mean(z, axis=(0, 1, 2), keepdims=True)
        var = jnp.mean((z - mean) ** 2, axis=(0, 1, 2), keepdims=True)
        return (z - mean) / jnp.sqrt(var + EPS) * g.reshape(1, 1, 1, -1) + be.reshape(1, 1, 1, -1)

    h = jax.nn.relu(bn(conv(x, params["w0"], params["b0"], stride, ((1, 1), (1, 1))),
                       params["g0"], params["be0"]))
    h = bn(conv(h, params["w1"], params["b1"], 1, ((1, 1), (1, 1))),
           params["g1"], params["be1"])
    wsk4 = params["wsk"].reshape(1, 1, *params["wsk"].shape)
    s = bn(conv(x, wsk4, params["bsk"], stride, ((0, 0), (0, 0))),
           params["gsk"], params["besk"])
    return jnp.transpose(jax.nn.relu(h + s), (0, 3, 1, 2))


def init_params(key, cin, cout):
    ks = jax.random.split(key, 6)
    f32 = jnp.float32
    return {
        # conv0: 3x3, cin -> cout  (HWIO)
        "w0": 0.1 * jax.random.normal(ks[0], (3, 3, cin, cout), f32),
        "b0": 0.1 * jax.random.normal(ks[1], (1, cout), f32),
        # conv1: 3x3, cout -> cout
        "w1": 0.1 * jax.random.normal(ks[2], (3, 3, cout, cout), f32),
        "b1": 0.1 * jax.random.normal(ks[3], (1, cout), f32),
        # skip conv: 1x1, cin -> cout
        "wsk": 0.1 * jax.random.normal(ks[4], (cin, cout), f32),
        "bsk": 0.1 * jax.random.normal(ks[5], (1, cout), f32),
        # BatchNorm affine params (PyTorch default init: weight=1, bias=0)
        "g0": jnp.ones((1, cout), f32), "be0": jnp.zeros((1, cout), f32),
        "g1": jnp.ones((1, cout), f32), "be1": jnp.zeros((1, cout), f32),
        "gsk": jnp.ones((1, cout), f32), "besk": jnp.zeros((1, cout), f32),
    }


if __name__ == "__main__":
    key = jax.random.PRNGKey(0)
    kx, kp = jax.random.split(key)

    N, Cin, H, W = 2, 4, 16, 16
    Cout = 8
    x = jax.random.normal(kx, (N, Cin, H, W), jnp.float32)   # NCHW, like PyTorch
    params = init_params(kp, Cin, Cout)

    # tile_m=64 keeps the toy problem multi-tile so the cross-tile BN accumulation path runs.
    fwd = jax.jit(functools.partial(resnet_layer_forward, downsample=True, tile_m=64))
    out = jax.block_until_ready(fwd(x, params))
    assert out.shape == (N, Cout, H // 2, W // 2), out.shape

    ref = jax.block_until_ready(_ref_forward(x, params, downsample=True))
    # Kernel uses bf16 MXU operands AND bf16 intermediate activations (f32 accumulation /
    # BN statistics); reference is full f32, so tolerance is set for bf16-grade numerics
    # through two BatchNorm-normalized matmul stages.
    if not jnp.allclose(out, ref, atol=7.5e-2, rtol=5e-2):
        raise AssertionError(f"mismatch vs reference: max err "
                             f"{float(jnp.max(jnp.abs(out - ref)))}")

    print("KERNEL_OK")
</pallas_src>

<mosaic_0001>
module attributes {stable_mosaic.version = 11 : i64} {
  func.func @_stage0_kernel(%arg0: i32, %arg1: memref<64x36xbf16, #tpu.memory_space<vmem>>, %arg2: memref<64x4xbf16, #tpu.memory_space<vmem>>, %arg3: memref<36x128xbf16, #tpu.memory_space<vmem>>, %arg4: memref<4x128xbf16, #tpu.memory_space<vmem>>, %arg5: memref<64x128xbf16, #tpu.memory_space<vmem>>, %arg6: memref<64x128xbf16, #tpu.memory_space<vmem>>, %arg7: memref<1x128xf32, #tpu.memory_space<vmem>>, %arg8: memref<1x128xf32, #tpu.memory_space<vmem>>, %arg9: memref<1x128xf32, #tpu.memory_space<vmem>>, %arg10: memref<1x128xf32, #tpu.memory_space<vmem>>) attributes {dimension_semantics = [#tpu.dimension_semantics<arbitrary>], iteration_bounds = array<i64: 2>, scalar_prefetch = 0 : i64, scratch_operands = 0 : i64, tpu.core_type = #tpu.core_type<tc>, window_params = [{transform_indices = @transform_0, window_bounds = array<i64: 64, 36>}, {transform_indices = @transform_1, window_bounds = array<i64: 64, 4>}, {pipeline_mode = #tpu.pipeline_mode<synchronous>, transform_indices = @transform_2, window_bounds = array<i64: 36, 128>}, {pipeline_mode = #tpu.pipeline_mode<synchronous>, transform_indices = @transform_3, window_bounds = array<i64: 4, 128>}, {transform_indices = @transform_4, window_bounds = array<i64: 64, 128>}, {transform_indices = @transform_5, window_bounds = array<i64: 64, 128>}, {pipeline_mode = #tpu.pipeline_mode<synchronous>, transform_indices = @transform_6, window_bounds = array<i64: 1, 128>}, {pipeline_mode = #tpu.pipeline_mode<synchronous>, transform_indices = @transform_7, window_bounds = array<i64: 1, 128>}, {pipeline_mode = #tpu.pipeline_mode<synchronous>, transform_indices = @transform_8, window_bounds = array<i64: 1, 128>}, {pipeline_mode = #tpu.pipeline_mode<synchronous>, transform_indices = @transform_9, window_bounds = array<i64: 1, 128>}]} {
    %c0_i32 = arith.constant 0 : i32
    %0 = arith.cmpi eq, %arg0, %c0_i32 : i32
    %1 = arith.extui %0 : i1 to i32
    %c0_i32_0 = arith.constant 0 : i32
    %2 = arith.cmpi ne, %1, %c0_i32_0 : i32
    scf.if %2 {
      %cst_33 = arith.constant 0.000000e+00 : f32
      %35 = vector.broadcast %cst_33 : f32 to vector<1x128xf32>
      %c0_34 = arith.constant 0 : index
      %c0_35 = arith.constant 0 : index
      %36 = vector.load %arg7[%c0_34, %c0_35] : memref<1x128xf32, #tpu.memory_space<vmem>>, vector<1x128xf32>
      tpu.vector_store %arg7[%c0_34, %c0_35], %35 {strides = array<i32>} : memref<1x128xf32, #tpu.memory_space<vmem>>, vector<1x128xf32>,
      %cst_36 = arith.constant 0.000000e+00 : f32
      %37 = vector.broadcast %cst_36 : f32 to vector<1x128xf32>
      %c0_37 = arith.constant 0 : index
      %c0_38 = arith.constant 0 : index
      %38 = vector.load %arg8[%c0_37, %c0_38] : memref<1x128xf32, #tpu.memory_space<vmem>>, vector<1x128xf32>
      tpu.vector_store %arg8[%c0_37, %c0_38], %37 {strides = array<i32>} : memref<1x128xf32, #tpu.memory_space<vmem>>, vector<1x128xf32>,
      %cst_39 = arith.constant 0.000000e+00 : f32
      %39 = vector.broadcast %cst_39 : f32 to vector<1x128xf32>
      %c0_40 = arith.constant 0 : index
      %c0_41 = arith.constant 0 : index
      %40 = vector.load %arg9[%c0_40, %c0_41] : memref<1x128xf32, #tpu.memory_space<vmem>>, vector<1x128xf32>
      tpu.vector_store %arg9[%c0_40, %c0_41], %39 {strides = array<i32>} : memref<1x128xf32, #tpu.memory_space<vmem>>, vector<1x128xf32>,
      %cst_42 = arith.constant 0.000000e+00 : f32
      %41 = vector.broadcast %cst_42 : f32 to vector<1x128xf32>
      %c0_43 = arith.constant 0 : index
      %c0_44 = arith.constant 0 : index
      %42 = vector.load %arg10[%c0_43, %c0_44] : memref<1x128xf32, #tpu.memory_space<vmem>>, vector<1x128xf32>
      tpu.vector_store %arg10[%c0_43, %c0_44], %41 {strides = array<i32>} : memref<1x128xf32, #tpu.memory_space<vmem>>, vector<1x128xf32>,
    } else {
    }
    %c0 = arith.constant 0 : index
    %c0_1 = arith.constant 0 : index
    %3 = vector.load %arg1[%c0, %c0_1] : memref<64x36xbf16, #tpu.memory_space<vmem>>, vector<64x36xbf16>
    %c0_2 = arith.constant 0 : index
    %c0_3 = arith.constant 0 : index
    %4 = vector.load %arg3[%c0_2, %c0_3] : memref<36x128xbf16, #tpu.memory_space<vmem>>, vector<36x128xbf16>
    %cst = arith.constant dense<0.000000e+00> : vector<64x128xf32>
    %5 = tpu.matmul %3, %4, %cst {dimension_numbers = #tpu.dot_dimension_numbers<[1], [0], [0], [1], [0, 0, 1, 1], [], []>} : vector<64x36xbf16>, vector<36x128xbf16>, vector<64x128xf32> -> vector<64x128xf32>
    %c0_4 = arith.constant 0 : index
    %c0_5 = arith.constant 0 : index
    %6 = vector.load %arg2[%c0_4, %c0_5] : memref<64x4xbf16, #tpu.memory_space<vmem>>, vector<64x4xbf16>
    %c0_6 = arith.constant 0 : index
    %c0_7 = arith.constant 0 : index
    %7 = vector.load %arg4[%c0_6, %c0_7] : memref<4x128xbf16, #tpu.memory_space<vmem>>, vector<4x128xbf16>
    %cst_8 = arith.constant dense<0.000000e+00> : vector<64x128xf32>
    %8 = tpu.matmul %6, %7, %cst_8 {dimension_numbers = #tpu.dot_dimension_numbers<[1], [0], [0], [1], [0, 0, 1, 1], [], []>} : vector<64x4xbf16>, vector<4x128xbf16>, vector<64x128xf32> -> vector<64x128xf32>
    %c0_9 = arith.constant 0 : index
    %c0_10 = arith.constant 0 : index
    %9 = vector.load %arg7[%c0_9, %c0_10] : memref<1x128xf32, #tpu.memory_space<vmem>>, vector<1x128xf32>
    %cst_11 = arith.constant dense<0.000000e+00> : vector<128xf32>
    %10 = vector.multi_reduction <add>, %5, %cst_11 [0] : vector<64x128xf32> to vector<128xf32>
    %11 = vector.shape_cast %10 : vector<128xf32> to vector<1x128xf32>
    %12 = arith.addf %9, %11 : vector<1x128xf32>
    %c0_12 = arith.constant 0 : index
    %c0_13 = arith.constant 0 : index
    %13 = vector.load %arg7[%c0_12, %c0_13] : memref<1x128xf32, #tpu.memory_space<vmem>>, vector<1x128xf32>
    tpu.vector_store %arg7[%c0_12, %c0_13], %12 {strides = array<i32>} : memref<1x128xf32, #tpu.memory_space<vmem>>, vector<1x128xf32>,
    %c0_14 = arith.constant 0 : index
    %c0_15 = arith.constant 0 : index
    %14 = vector.load %arg8[%c0_14, %c0_15] : memref<1x128xf32, #tpu.memory_space<vmem>>, vector<1x128xf32>
    %15 = arith.mulf %5, %5 : vector<64x128xf32>
    %cst_16 = arith.constant dense<0.000000e+00> : vector<128xf32>
    %16 = vector.multi_reduction <add>, %15, %cst_16 [0] : vector<64x128xf32> to vector<128xf32>
    %17 = vector.shape_cast %16 : vector<128xf32> to vector<1x128xf32>
    %18 = arith.addf %14, %17 : vector<1x128xf32>
    %c0_17 = arith.constant 0 : index
    %c0_18 = arith.constant 0 : index
    %19 = vector.load %arg8[%c0_17, %c0_18] : memref<1x128xf32, #tpu.memory_space<vmem>>, vector<1x128xf32>
    tpu.vector_store %arg8[%c0_17, %c0_18], %18 {strides = array<i32>} : memref<1x128xf32, #tpu.memory_space<vmem>>, vector<1x128xf32>,
    %c0_19 = arith.constant 0 : index
    %c0_20 = arith.constant 0 : index
    %20 = vector.load %arg9[%c0_19, %c0_20] : memref<1x128xf32, #tpu.memory_space<vmem>>, vector<1x128xf32>
    %cst_21 = arith.constant dense<0.000000e+00> : vector<128xf32>
    %21 = vector.multi_reduction <add>, %8, %cst_21 [0] : vector<64x128xf32> to vector<128xf32>
    %22 = vector.shape_cast %21 : vector<128xf32> to vector<1x128xf32>
    %23 = arith.addf %20, %22 : vector<1x128xf32>
    %c0_22 = arith.constant 0 : index
    %c0_23 = arith.constant 0 : index
    %24 = vector.load %arg9[%c0_22, %c0_23] : memref<1x128xf32, #tpu.memory_space<vmem>>, vector<1x128xf32>
    tpu.vector_store %arg9[%c0_22, %c0_23], %23 {strides = array<i32>} : memref<1x128xf32, #tpu.memory_space<vmem>>, vector<1x128xf32>,
    %c0_24 = arith.constant 0 : index
    %c0_25 = arith.constant 0 : index
    %25 = vector.load %arg10[%c0_24, %c0_25] : memref<1x128xf32, #tpu.memory_space<vmem>>, vector<1x128xf32>
    %26 = arith.mulf %8, %8 : vector<64x128xf32>
    %cst_26 = arith.constant dense<0.000000e+00> : vector<128xf32>
    %27 = vector.multi_reduction <add>, %26, %cst_26 [0] : vector<64x128xf32> to vector<128xf32>
    %28 = vector.shape_cast %27 : vector<128xf32> to vector<1x128xf32>
    %29 = arith.addf %25, %28 : vector<1x128xf32>
    %c0_27 = arith.constant 0 : index
    %c0_28 = arith.constant 0 : index
    %30 = vector.load %arg10[%c0_27, %c0_28] : memref<1x128xf32, #tpu.memory_space<vmem>>, vector<1x128xf32>
    tpu.vector_store %arg10[%c0_27, %c0_28], %29 {strides = array<i32>} : memref<1x128xf32, #tpu.memory_space<vmem>>, vector<1x128xf32>,
    %31 = arith.truncf %5 : vector<64x128xf32> to vector<64x128xbf16>
    %c0_29 = arith.constant 0 : index
    %c0_30 = arith.constant 0 : index
    %32 = vector.load %arg5[%c0_29, %c0_30] : memref<64x128xbf16, #tpu.memory_space<vmem>>, vector<64x128xbf16>
    tpu.vector_store %arg5[%c0_29, %c0_30], %31 {strides = array<i32>} : memref<64x128xbf16, #tpu.memory_space<vmem>>, vector<64x128xbf16>,
    %33 = arith.truncf %8 : vector<64x128xf32> to vector<64x128xbf16>
    %c0_31 = arith.constant 0 : index
    %c0_32 = arith.constant 0 : index
    %34 = vector.load %arg6[%c0_31, %c0_32] : memref<64x128xbf16, #tpu.memory_space<vmem>>, vector<64x128xbf16>
    tpu.vector_store %arg6[%c0_31, %c0_32], %33 {strides = array<i32>} : memref<64x128xbf16, #tpu.memory_space<vmem>>, vector<64x128xbf16>,
    return
  }
  func.func @transform_0(%arg0: i32) -> (i32, i32) {
    %c0_i32 = arith.constant 0 : i32
    %c0_i32_0 = arith.constant 0 : i32
    return %arg0, %c0_i32 : i32, i32
  }
  func.func @transform_1(%arg0: i32) -> (i32, i32) {
    %c0_i32 = arith.constant 0 : i32
    %c0_i32_0 = arith.constant 0 : i32
    return %arg0, %c0_i32 : i32, i32
  }
  func.func @transform_2(%arg0: i32) -> (i32, i32) {
    %c0_i32 = arith.constant 0 : i32
    %c0_i32_0 = arith.constant 0 : i32
    %c0_i32_1 = arith.constant 0 : i32
    return %c0_i32, %c0_i32_0 : i32, i32
  }
  func.func @transform_3(%arg0: i32) -> (i32, i32) {
    %c0_i32 = arith.constant 0 : i32
    %c0_i32_0 = arith.constant 0 : i32
    %c0_i32_1 = arith.constant 0 : i32
    return %c0_i32, %c0_i32_0 : i32, i32
  }
  func.func @transform_4(%arg0: i32) -> (i32, i32) {
    %c0_i32 = arith.constant 0 : i32
    %c0_i32_0 = arith.constant 0 : i32
    return %arg0, %c0_i32 : i32, i32
  }
  func.func @transform_5(%arg0: i32) -> (i32, i32) {
    %c0_i32 = arith.constant 0 : i32
    %c0_i32_0 = arith.constant 0 : i32
    return %arg0, %c0_i32 : i32, i32
  }
  func.func @transform_6(%arg0: i32) -> (i32, i32) {
    %c0_i32 = arith.constant 0 : i32
    %c0_i32_0 = arith.constant 0 : i32
    %c0_i32_1 = arith.constant 0 : i32
    return %c0_i32, %c0_i32_0 : i32, i32
  }
  func.func @transform_7(%arg0: i32) -> (i32, i32) {
    %c0_i32 = arith.constant 0 : i32
    %c0_i32_0 = arith.constant 0 : i32
    %c0_i32_1 = arith.constant 0 : i32
    return %c0_i32, %c0_i32_0 : i32, i32
  }
  func.func @transform_8(%arg0: i32) -> (i32, i32) {
    %c0_i32 = arith.constant 0 : i32
    %c0_i32_0 = arith.constant 0 : i32
    %c0_i32_1 = arith.constant 0 : i32
    return %c0_i32, %c0_i32_0 : i32, i32
  }
  func.func @transform_9(%arg0: i32) -> (i32, i32) {
    %c0_i32 = arith.constant 0 : i32
    %c0_i32_0 = arith.constant 0 : i32
    %c0_i32_1 = arith.constant 0 : i32
    return %c0_i32, %c0_i32_0 : i32, i32
  }
}

module attributes {stable_mosaic.version = 11 : i64} {
  func.func @_conv1_fused_kernel(%arg0: i32, %arg1: memref<1x110x128xbf16, #tpu.memory_space<vmem>>, %arg2: memref<1x128xf32, #tpu.memory_space<vmem>>, %arg3: memref<1x128xf32, #tpu.memory_space<vmem>>, %arg4: memref<9x128x128xbf16, #tpu.memory_space<vmem>>, %arg5: memref<1x80x128xbf16, #tpu.memory_space<vmem>>, %arg6: memref<1x128xf32, #tpu.memory_space<vmem>>, %arg7: memref<1x128xf32, #tpu.memory_space<vmem>>, %arg8: memref<110x128xbf16, #tpu.memory_space<vmem>>, %arg9: memref<80x128xf32, #tpu.memory_space<vmem>>) attributes {dimension_semantics = [#tpu.dimension_semantics<arbitrary>], iteration_bounds = array<i64: 2>, scalar_prefetch = 0 : i64, scratch_operands = 2 : i64, tpu.core_type = #tpu.core_type<tc>, window_params = [{transform_indices = @transform_0, window_bounds = array<i64: 1, 110, 128>}, {pipeline_mode = #tpu.pipeline_mode<synchronous>, transform_indices = @transform_1, window_bounds = array<i64: 1, 128>}, {pipeline_mode = #tpu.pipeline_mode<synchronous>, transform_indices = @transform_2, window_bounds = array<i64: 1, 128>}, {pipeline_mode = #tpu.pipeline_mode<synchronous>, transform_indices = @transform_3, window_bounds = array<i64: 9, 128, 128>}, {transform_indices = @transform_4, window_bounds = array<i64: 1, 80, 128>}, {pipeline_mode = #tpu.pipeline_mode<synchronous>, transform_indices = @transform_5, window_bounds = array<i64: 1, 128>}, {pipeline_mode = #tpu.pipeline_mode<synchronous>, transform_indices = @transform_6, window_bounds = array<i64: 1, 128>}]} {
    %c0_i32 = arith.constant 0 : i32
    %0 = arith.cmpi eq, %arg0, %c0_i32 : i32
    %1 = arith.extui %0 : i1 to i32
    %c0_i32_0 = arith.constant 0 : i32
    %2 = arith.cmpi ne, %1, %c0_i32_0 : i32
    scf.if %2 {
      %cst_118 = arith.constant 0.000000e+00 : f32
      %148 = vector.broadcast %cst_118 : f32 to vector<1x128xf32>
      %c0_119 = arith.constant 0 : index
      %c0_120 = arith.constant 0 : index
      %149 = vector.load %arg6[%c0_119, %c0_120] : memref<1x128xf32, #tpu.memory_space<vmem>>, vector<1x128xf32>
      tpu.vector_store %arg6[%c0_119, %c0_120], %148 {strides = array<i32>} : memref<1x128xf32, #tpu.memory_space<vmem>>, vector<1x128xf32>,
      %cst_121 = arith.constant 0.000000e+00 : f32
      %150 = vector.broadcast %cst_121 : f32 to vector<1x128xf32>
      %c0_122 = arith.constant 0 : index
      %c0_123 = arith.constant 0 : index
      %151 = vector.load %arg7[%c0_122, %c0_123] : memref<1x128xf32, #tpu.memory_space<vmem>>, vector<1x128xf32>
      tpu.vector_store %arg7[%c0_122, %c0_123], %150 {strides = array<i32>} : memref<1x128xf32, #tpu.memory_space<vmem>>, vector<1x128xf32>,
    } else {
    }
    %3 = tpu.iota {dimensions = array<i32: 0>} : vector<110x128xi32>
    %c10_i32 = arith.constant 10 : i32
    %c0_i32_1 = arith.constant 0 : i32
    %4 = arith.cmpi eq, %c10_i32, %c0_i32_1 : i32
    %c1_i32 = arith.constant 1 : i32
    %5 = arith.select %4, %c1_i32, %c10_i32 : i32
    %6 = vector.broadcast %5 : i32 to vector<110x128xi32>
    %7 = arith.remsi %3, %6 : vector<110x128xi32>
    %c0_i32_2 = arith.constant 0 : i32
    %8 = vector.broadcast %c0_i32_2 : i32 to vector<110x128xi32>
    %9 = arith.cmpi ne, %7, %8 : vector<110x128xi32>
    %c0_i32_3 = arith.constant 0 : i32
    %10 = vector.broadcast %c0_i32_3 : i32 to vector<110x128xi32>
    %11 = arith.cmpi slt, %7, %10 : vector<110x128xi32>
    %c0_i32_4 = arith.constant 0 : i32
    %12 = arith.cmpi slt, %5, %c0_i32_4 : i32
    %13 = vector.broadcast %12 : i1 to vector<110x128xi1>
    %14 = vector.broadcast %13 : vector<110x128xi1> to vector<110x128xi1>
    %15 = arith.xori %11, %14 : vector<110x128xi1>
    %16 = arith.andi %15, %9 : vector<110x128xi1>
    %17 = vector.broadcast %5 : i32 to vector<110x128xi32>
    %18 = arith.addi %7, %17 : vector<110x128xi32>
    %19 = arith.select %16, %18, %7 : vector<110x128xi1>, vector<110x128xi32>
    %c10_i32_5 = arith.constant 10 : i32
    %20 = vector.broadcast %c10_i32_5 : i32 to vector<110x128xi32>
    %21 = arith.cmpi sge, %3, %20 : vector<110x128xi32>
    %c90_i32 = arith.constant 90 : i32
    %22 = vector.broadcast %c90_i32 : i32 to vector<110x128xi32>
    %23 = arith.cmpi slt, %3, %22 : vector<110x128xi32>
    %24 = arith.andi %21, %23 : vector<110x128xi1>
    %c1_i32_6 = arith.constant 1 : i32
    %25 = vector.broadcast %c1_i32_6 : i32 to vector<110x128xi32>
    %26 = arith.cmpi sge, %19, %25 : vector<110x128xi32>
    %27 = arith.andi %24, %26 : vector<110x128xi1>
    %c8_i32 = arith.constant 8 : i32
    %28 = vector.broadcast %c8_i32 : i32 to vector<110x128xi32>
    %29 = arith.cmpi sle, %19, %28 : vector<110x128xi32>
    %30 = arith.andi %27, %29 : vector<110x128xi1>
    %c0 = arith.constant 0 : index
    %c0_7 = arith.constant 0 : index
    %c0_8 = arith.constant 0 : index
    %31 = vector.load %arg1[%c0, %c0_7, %c0_8] : memref<1x110x128xbf16, #tpu.memory_space<vmem>>, vector<1x110x128xbf16>
    %32 = vector.shape_cast %31 : vector<1x110x128xbf16> to vector<110x128xbf16>
    %33 = arith.extf %32 : vector<110x128xbf16> to vector<110x128xf32>
    %c0_9 = arith.constant 0 : index
    %c0_10 = arith.constant 0 : index
    %34 = vector.load %arg2[%c0_9, %c0_10] : memref<1x128xf32, #tpu.memory_space<vmem>>, vector<1x128xf32>
    %35 = vector.broadcast %34 : vector<1x128xf32> to vector<110x128xf32>
    %36 = arith.mulf %33, %35 : vector<110x128xf32>
    %c0_11 = arith.constant 0 : index
    %c0_12 = arith.constant 0 : index
    %37 = vector.load %arg3[%c0_11, %c0_12] : memref<1x128xf32, #tpu.memory_space<vmem>>, vector<1x128xf32>
    %38 = vector.broadcast %37 : vector<1x128xf32> to vector<110x128xf32>
    %39 = arith.addf %36, %38 : vector<110x128xf32>
    %cst = arith.constant 0.000000e+00 : f32
    %40 = vector.broadcast %cst : f32 to vector<110x128xf32>
    %41 = arith.maximumf %39, %40 : vector<110x128xf32>
    %cst_13 = arith.constant 0.000000e+00 : f32
    %42 = vector.broadcast %cst_13 : f32 to vector<110x128xf32>
    %43 = arith.select %30, %41, %42 : vector<110x128xi1>, vector<110x128xf32>
    %44 = arith.truncf %43 : vector<110x128xf32> to vector<110x128xbf16>
    %c0_14 = arith.constant 0 : index
    %c0_15 = arith.constant 0 : index
    %45 = vector.load %arg8[%c0_14, %c0_15] : memref<110x128xbf16, #tpu.memory_space<vmem>>, vector<110x128xbf16>
    tpu.vector_store %arg8[%c0_14, %c0_15], %44 {strides = array<i32>} : memref<110x128xbf16, #tpu.memory_space<vmem>>, vector<110x128xbf16>,
    %cst_16 = arith.constant 0.000000e+00 : f32
    %46 = vector.broadcast %cst_16 : f32 to vector<80x128xf32>
    %c0_17 = arith.constant 0 : index
    %c0_18 = arith.constant 0 : index
    %47 = vector.load %arg9[%c0_17, %c0_18] : memref<80x128xf32, #tpu.memory_space<vmem>>, vector<80x128xf32>
    tpu.vector_store %arg9[%c0_17, %c0_18], %46 {strides = array<i32>} : memref<80x128xf32, #tpu.memory_space<vmem>>, vector<80x128xf32>,
    %c0_19 = arith.constant 0 : index
    %c0_20 = arith.constant 0 : index
    %48 = vector.load %arg9[%c0_19, %c0_20] : memref<80x128xf32, #tpu.memory_space<vmem>>, vector<80x128xf32>
    %c0_21 = arith.constant 0 : index
    %c0_22 = arith.constant 0 : index
    %49 = vector.load %arg8[%c0_21, %c0_22] : memref<110x128xbf16, #tpu.memory_space<vmem>>, vector<80x128xbf16>
    %c0_23 = arith.constant 0 : index
    %c0_24 = arith.constant 0 : index
    %c0_25 = arith.constant 0 : index
    %50 = vector.load %arg4[%c0_23, %c0_24, %c0_25] : memref<9x128x128xbf16, #tpu.memory_space<vmem>>, vector<1x128x128xbf16>
    %51 = vector.shape_cast %50 : vector<1x128x128xbf16> to vector<128x128xbf16>
    %cst_26 = arith.constant dense<0.000000e+00> : vector<80x128xf32>
    %52 = tpu.matmul %49, %51, %cst_26 {dimension_numbers = #tpu.dot_dimension_numbers<[1], [0], [0], [1], [0, 0, 1, 1], [], []>} : vector<80x128xbf16>, vector<128x128xbf16>, vector<80x128xf32> -> vector<80x128xf32>
    %53 = arith.addf %48, %52 : vector<80x128xf32>
    %c0_27 = arith.constant 0 : index
    %c0_28 = arith.constant 0 : index
    %54 = vector.load %arg9[%c0_27, %c0_28] : memref<80x128xf32, #tpu.memory_space<vmem>>, vector<80x128xf32>
    tpu.vector_store %arg9[%c0_27, %c0_28], %53 {strides = array<i32>} : memref<80x128xf32, #tpu.memory_space<vmem>>, vector<80x128xf32>,
    %c0_29 = arith.constant 0 : index
    %c0_30 = arith.constant 0 : index
    %55 = vector.load %arg9[%c0_29, %c0_30] : memref<80x128xf32, #tpu.memory_space<vmem>>, vector<80x128xf32>
    %c1 = arith.constant 1 : index
    %c0_31 = arith.constant 0 : index
    %56 = vector.load %arg8[%c1, %c0_31] : memref<110x128xbf16, #tpu.memory_space<vmem>>, vector<80x128xbf16>
    %c1_32 = arith.constant 1 : index
    %c0_33 = arith.constant 0 : index
    %c0_34 = arith.constant 0 : index
    %57 = vector.load %arg4[%c1_32, %c0_33, %c0_34] : memref<9x128x128xbf16, #tpu.memory_space<vmem>>, vector<1x128x128xbf16>
    %58 = vector.shape_cast %57 : vector<1x128x128xbf16> to vector<128x128xbf16>
    %cst_35 = arith.constant dense<0.000000e+00> : vector<80x128xf32>
    %59 = tpu.matmul %56, %58, %cst_35 {dimension_numbers = #tpu.dot_dimension_numbers<[1], [0], [0], [1], [0, 0, 1, 1], [], []>} : vector<80x128xbf16>, vector<128x128xbf16>, vector<80x128xf32> -> vector<80x128xf32>
    %60 = arith.addf %55, %59 : vector<80x128xf32>
    %c0_36 = arith.constant 0 : index
    %c0_37 = arith.constant 0 : index
    %61 = vector.load %arg9[%c0_36, %c0_37] : memref<80x128xf32, #tpu.memory_space<vmem>>, vector<80x128xf32>
    tpu.vector_store %arg9[%c0_36, %c0_37], %60 {strides = array<i32>} : memref<80x128xf32, #tpu.memory_space<vmem>>, vector<80x128xf32>,
    %c0_38 = arith.constant 0 : index
    %c0_39 = arith.constant 0 : index
    %62 = vector.load %arg9[%c0_38, %c0_39] : memref<80x128xf32, #tpu.memory_space<vmem>>, vector<80x128xf32>
    %c2 = arith.constant 2 : index
    %c0_40 = arith.constant 0 : index
    %63 = vector.load %arg8[%c2, %c0_40] : memref<110x128xbf16, #tpu.memory_space<vmem>>, vector<80x128xbf16>
    %c2_41 = arith.constant 2 : index
    %c0_42 = arith.constant 0 : index
    %c0_43 = arith.constant 0 : index
    %64 = vector.load %arg4[%c2_41, %c0_42, %c0_43] : memref<9x128x128xbf16, #tpu.memory_space<vmem>>, vector<1x128x128xbf16>
    %65 = vector.shape_cast %64 : vector<1x128x128xbf16> to vector<128x128xbf16>
    %cst_44 = arith.constant dense<0.000000e+00> : vector<80x128xf32>
    %66 = tpu.matmul %63, %65, %cst_44 {dimension_numbers = #tpu.dot_dimension_numbers<[1], [0], [0], [1], [0, 0, 1, 1], [], []>} : vector<80x128xbf16>, vector<128x128xbf16>, vector<80x128xf32> -> vector<80x128xf32>
    %67 = arith.addf %62, %66 : vector<80x128xf32>
    %c0_45 = arith.constant 0 : index
    %c0_46 = arith.constant 0 : index
    %68 = vector.load %arg9[%c0_45, %c0_46] : memref<80x128xf32, #tpu.memory_space<vmem>>, vector<80x128xf32>
    tpu.vector_store %arg9[%c0_45, %c0_46], %67 {strides = array<i32>} : memref<80x128xf32, #tpu.memory_space<vmem>>, vector<80x128xf32>,
    %c0_47 = arith.constant 0 : index
    %c0_48 = arith.constant 0 : index
    %69 = vector.load %arg9[%c0_47, %c0_48] : memref<80x128xf32, #tpu.memory_space<vmem>>, vector<80x128xf32>
    %c10 = arith.constant 10 : index
    %c0_49 = arith.constant 0 : index
    %70 = vector.load %arg8[%c10, %c0_49] : memref<110x128xbf16, #tpu.memory_space<vmem>>, vector<80x128xbf16>
    %c3 = arith.constant 3 : index
    %c0_50 = arith.constant 0 : index
    %c0_51 = arith.constant 0 : index
    %71 = vector.load %arg4[%c3, %c0_50, %c0_51] : memref<9x128x128xbf16, #tpu.memory_space<vmem>>, vector<1x128x128xbf16>
    %72 = vector.shape_cast %71 : vector<1x128x128xbf16> to vector<128x128xbf16>
    %cst_52 = arith.constant dense<0.000000e+00> : vector<80x128xf32>
    %73 = tpu.matmul %70, %72, %cst_52 {dimension_numbers = #tpu.dot_dimension_numbers<[1], [0], [0], [1], [0, 0, 1, 1], [], []>} : vector<80x128xbf16>, vector<128x128xbf16>, vector<80x128xf32> -> vector<80x128xf32>
    %74 = arith.addf %69, %73 : vector<80x128xf32>
    %c0_53 = arith.constant 0 : index
    %c0_54 = arith.constant 0 : index
    %75 = vector.load %arg9[%c0_53, %c0_54] : memref<80x128xf32, #tpu.memory_space<vmem>>, vector<80x128xf32>
    tpu.vector_store %arg9[%c0_53, %c0_54], %74 {strides = array<i32>} : memref<80x128xf32, #tpu.memory_space<vmem>>, vector<80x128xf32>,
    %c0_55 = arith.constant 0 : index
    %c0_56 = arith.constant 0 : index
    %76 = vector.load %arg9[%c0_55, %c0_56] : memref<80x128xf32, #tpu.memory_space<vmem>>, vector<80x128xf32>
    %c11 = arith.constant 11 : index
    %c0_57 = arith.constant 0 : index
    %77 = vector.load %arg8[%c11, %c0_57] : memref<110x128xbf16, #tpu.memory_space<vmem>>, vector<80x128xbf16>
    %c4 = arith.constant 4 : index
    %c0_58 = arith.constant 0 : index
    %c0_59 = arith.constant 0 : index
    %78 = vector.load %arg4[%c4, %c0_58, %c0_59] : memref<9x128x128xbf16, #tpu.memory_space<vmem>>, vector<1x128x128xbf16>
    %79 = vector.shape_cast %78 : vector<1x128x128xbf16> to vector<128x128xbf16>
    %cst_60 = arith.constant dense<0.000000e+00> : vector<80x128xf32>
    %80 = tpu.matmul %77, %79, %cst_60 {dimension_numbers = #tpu.dot_dimension_numbers<[1], [0], [0], [1], [0, 0, 1, 1], [], []>} : vector<80x128xbf16>, vector<128x128xbf16>, vector<80x128xf32> -> vector<80x128xf32>
    %81 = arith.addf %76, %80 : vector<80x128xf32>
    %c0_61 = arith.constant 0 : index
    %c0_62 = arith.constant 0 : index
    %82 = vector.load %arg9[%c0_61, %c0_62] : memref<80x128xf32, #tpu.memory_space<vmem>>, vector<80x128xf32>
    tpu.vector_store %arg9[%c0_61, %c0_62], %81 {strides = array<i32>} : memref<80x128xf32, #tpu.memory_space<vmem>>, vector<80x128xf32>,
    %c0_63 = arith.constant 0 : index
    %c0_64 = arith.constant 0 : index
    %83 = vector.load %arg9[%c0_63, %c0_64] : memref<80x128xf32, #tpu.memory_space<vmem>>, vector<80x128xf32>
    %c12 = arith.constant 12 : index
    %c0_65 = arith.constant 0 : index
    %84 = vector.load %arg8[%c12, %c0_65] : memref<110x128xbf16, #tpu.memory_space<vmem>>, vector<80x128xbf16>
    %c5 = arith.constant 5 : index
    %c0_66 = arith.constant 0 : index
    %c0_67 = arith.constant 0 : index
    %85 = vector.load %arg4[%c5, %c0_66, %c0_67] : memref<9x128x128xbf16, #tpu.memory_space<vmem>>, vector<1x128x128xbf16>
    %86 = vector.shape_cast %85 : vector<1x128x128xbf16> to vector<128x128xbf16>
    %cst_68 = arith.constant dense<0.000000e+00> : vector<80x128xf32>
    %87 = tpu.matmul %84, %86, %cst_68 {dimension_numbers = #tpu.dot_dimension_numbers<[1], [0], [0], [1], [0, 0, 1, 1], [], []>} : vector<80x128xbf16>, vector<128x128xbf16>, vector<80x128xf32> -> vector<80x128xf32>
    %88 = arith.addf %83, %87 : vector<80x128xf32>
    %c0_69 = arith.constant 0 : index
    %c0_70 = arith.constant 0 : index
    %89 = vector.load %arg9[%c0_69, %c0_70] : memref<80x128xf32, #tpu.memory_space<vmem>>, vector<80x128xf32>
    tpu.vector_store %arg9[%c0_69, %c0_70], %88 {strides = array<i32>} : memref<80x128xf32, #tpu.memory_space<vmem>>, vector<80x128xf32>,
    %c0_71 = arith.constant 0 : index
    %c0_72 = arith.constant 0 : index
    %90 = vector.load %arg9[%c0_71, %c0_72] : memref<80x128xf32, #tpu.memory_space<vmem>>, vector<80x128xf32>
    %c20 = arith.constant 20 : index
    %c0_73 = arith.constant 0 : index
    %91 = vector.load %arg8[%c20, %c0_73] : memref<110x128xbf16, #tpu.memory_space<vmem>>, vector<80x128xbf16>
    %c6 = arith.constant 6 : index
    %c0_74 = arith.constant 0 : index
    %c0_75 = arith.constant 0 : index
    %92 = vector.load %arg4[%c6, %c0_74, %c0_75] : memref<9x128x128xbf16, #tpu.memory_space<vmem>>, vector<1x128x128xbf16>
    %93 = vector.shape_cast %92 : vector<1x128x128xbf16> to vector<128x128xbf16>
    %cst_76 = arith.constant dense<0.000000e+00> : vector<80x128xf32>
    %94 = tpu.matmul %91, %93, %cst_76 {dimension_numbers = #tpu.dot_dimension_numbers<[1], [0], [0], [1], [0, 0, 1, 1], [], []>} : vector<80x128xbf16>, vector<128x128xbf16>, vector<80x128xf32> -> vector<80x128xf32>
    %95 = arith.addf %90, %94 : vector<80x128xf32>
    %c0_77 = arith.constant 0 : index
    %c0_78 = arith.constant 0 : index
    %96 = vector.load %arg9[%c0_77, %c0_78] : memref<80x128xf32, #tpu.memory_space<vmem>>, vector<80x128xf32>
    tpu.vector_store %arg9[%c0_77, %c0_78], %95 {strides = array<i32>} : memref<80x128xf32, #tpu.memory_space<vmem>>, vector<80x128xf32>,
    %c0_79 = arith.constant 0 : index
    %c0_80 = arith.constant 0 : index
    %97 = vector.load %arg9[%c0_79, %c0_80] : memref<80x128xf32, #tpu.memory_space<vmem>>, vector<80x128xf32>
    %c21 = arith.constant 21 : index
    %c0_81 = arith.constant 0 : index
    %98 = vector.load %arg8[%c21, %c0_81] : memref<110x128xbf16, #tpu.memory_space<vmem>>, vector<80x128xbf16>
    %c7 = arith.constant 7 : index
    %c0_82 = arith.constant 0 : index
    %c0_83 = arith.constant 0 : index
    %99 = vector.load %arg4[%c7, %c0_82, %c0_83] : memref<9x128x128xbf16, #tpu.memory_space<vmem>>, vector<1x128x128xbf16>
    %100 = vector.shape_cast %99 : vector<1x128x128xbf16> to vector<128x128xbf16>
    %cst_84 = arith.constant dense<0.000000e+00> : vector<80x128xf32>
    %101 = tpu.matmul %98, %100, %cst_84 {dimension_numbers = #tpu.dot_dimension_numbers<[1], [0], [0], [1], [0, 0, 1, 1], [], []>} : vector<80x128xbf16>, vector<128x128xbf16>, vector<80x128xf32> -> vector<80x128xf32>
    %102 = arith.addf %97, %101 : vector<80x128xf32>
    %c0_85 = arith.constant 0 : index
    %c0_86 = arith.constant 0 : index
    %103 = vector.load %arg9[%c0_85, %c0_86] : memref<80x128xf32, #tpu.memory_space<vmem>>, vector<80x128xf32>
    tpu.vector_store %arg9[%c0_85, %c0_86], %102 {strides = array<i32>} : memref<80x128xf32, #tpu.memory_space<vmem>>, vector<80x128xf32>,
    %c0_87 = arith.constant 0 : index
    %c0_88 = arith.constant 0 : index
    %104 = vector.load %arg9[%c0_87, %c0_88] : memref<80x128xf32, #tpu.memory_space<vmem>>, vector<80x128xf32>
    %c22 = arith.constant 22 : index
    %c0_89 = arith.constant 0 : index
    %105 = vector.load %arg8[%c22, %c0_89] : memref<110x128xbf16, #tpu.memory_space<vmem>>, vector<80x128xbf16>
    %c8 = arith.constant 8 : index
    %c0_90 = arith.constant 0 : index
    %c0_91 = arith.constant 0 : index
    %106 = vector.load %arg4[%c8, %c0_90, %c0_91] : memref<9x128x128xbf16, #tpu.memory_space<vmem>>, vector<1x128x128xbf16>
    %107 = vector.shape_cast %106 : vector<1x128x128xbf16> to vector<128x128xbf16>
    %cst_92 = arith.constant dense<0.000000e+00> : vector<80x128xf32>
    %108 = tpu.matmul %105, %107, %cst_92 {dimension_numbers = #tpu.dot_dimension_numbers<[1], [0], [0], [1], [0, 0, 1, 1], [], []>} : vector<80x128xbf16>, vector<128x128xbf16>, vector<80x128xf32> -> vector<80x128xf32>
    %109 = arith.addf %104, %108 : vector<80x128xf32>
    %c0_93 = arith.constant 0 : index
    %c0_94 = arith.constant 0 : index
    %110 = vector.load %arg9[%c0_93, %c0_94] : memref<80x128xf32, #tpu.memory_space<vmem>>, vector<80x128xf32>
    tpu.vector_store %arg9[%c0_93, %c0_94], %109 {strides = array<i32>} : memref<80x128xf32, #tpu.memory_space<vmem>>, vector<80x128xf32>,
    %111 = tpu.iota {dimensions = array<i32: 0>} : vector<80x128xi32>
    %c10_i32_95 = arith.constant 10 : i32
    %c0_i32_96 = arith.constant 0 : i32
    %112 = arith.cmpi eq, %c10_i32_95, %c0_i32_96 : i32
    %c1_i32_97 = arith.constant 1 : i32
    %113 = arith.select %112, %c1_i32_97, %c10_i32_95 : i32
    %114 = vector.broadcast %113 : i32 to vector<80x128xi32>
    %115 = arith.remsi %111, %114 : vector<80x128xi32>
    %c0_i32_98 = arith.constant 0 : i32
    %116 = vector.broadcast %c0_i32_98 : i32 to vector<80x128xi32>
    %117 = arith.cmpi ne, %115, %116 : vector<80x128xi32>
    %c0_i32_99 = arith.constant 0 : i32
    %118 = vector.broadcast %c0_i32_99 : i32 to vector<80x128xi32>
    %119 = arith.cmpi slt, %115, %118 : vector<80x128xi32>
    %c0_i32_100 = arith.constant 0 : i32
    %120 = arith.cmpi slt, %113, %c0_i32_100 : i32
    %121 = vector.broadcast %120 : i1 to vector<80x128xi1>
    %122 = vector.broadcast %121 : vector<80x128xi1> to vector<80x128xi1>
    %123 = arith.xori %119, %122 : vector<80x128xi1>
    %124 = arith.andi %123, %117 : vector<80x128xi1>
    %125 = vector.broadcast %113 : i32 to vector<80x128xi32>
    %126 = arith.addi %115, %125 : vector<80x128xi32>
    %127 = arith.select %124, %126, %115 : vector<80x128xi1>, vector<80x128xi32>
    %c8_i32_101 = arith.constant 8 : i32
    %128 = vector.broadcast %c8_i32_101 : i32 to vector<80x128xi32>
    %129 = arith.cmpi slt, %127, %128 : vector<80x128xi32>
    %c0_102 = arith.constant 0 : index
    %c0_103 = arith.constant 0 : index
    %130 = vector.load %arg9[%c0_102, %c0_103] : memref<80x128xf32, #tpu.memory_space<vmem>>, vector<80x128xf32>
    %cst_104 = arith.constant 0.000000e+00 : f32
    %131 = vector.broadcast %cst_104 : f32 to vector<80x128xf32>
    %132 = arith.select %129, %130, %131 : vector<80x128xi1>, vector<80x128xf32>
    %c0_105 = arith.constant 0 : index
    %c0_106 = arith.constant 0 : index
    %133 = vector.load %arg6[%c0_105, %c0_106] : memref<1x128xf32, #tpu.memory_space<vmem>>, vector<1x128xf32>
    %cst_107 = arith.constant dense<0.000000e+00> : vector<128xf32>
    %134 = vector.multi_reduction <add>, %132, %cst_107 [0] : vector<80x128xf32> to vector<128xf32>
    %135 = vector.shape_cast %134 : vector<128xf32> to vector<1x128xf32>
    %136 = arith.addf %133, %135 : vector<1x128xf32>
    %c0_108 = arith.constant 0 : index
    %c0_109 = arith.constant 0 : index
    %137 = vector.load %arg6[%c0_108, %c0_109] : memref<1x128xf32, #tpu.memory_space<vmem>>, vector<1x128xf32>
    tpu.vector_store %arg6[%c0_108, %c0_109], %136 {strides = array<i32>} : memref<1x128xf32, #tpu.memory_space<vmem>>, vector<1x128xf32>,
    %c0_110 = arith.constant 0 : index
    %c0_111 = arith.constant 0 : index
    %138 = vector.load %arg7[%c0_110, %c0_111] : memref<1x128xf32, #tpu.memory_space<vmem>>, vector<1x128xf32>
    %139 = arith.mulf %132, %132 : vector<80x128xf32>
    %cst_112 = arith.constant dense<0.000000e+00> : vector<128xf32>
    %140 = vector.multi_reduction <add>, %139, %cst_112 [0] : vector<80x128xf32> to vector<128xf32>
    %141 = vector.shape_cast %140 : vector<128xf32> to vector<1x128xf32>
    %142 = arith.addf %138, %141 : vector<1x128xf32>
    %c0_113 = arith.constant 0 : index
    %c0_114 = arith.constant 0 : index
    %143 = vector.load %arg7[%c0_113, %c0_114] : memref<1x128xf32, #tpu.memory_space<vmem>>, vector<1x128xf32>
    tpu.vector_store %arg7[%c0_113, %c0_114], %142 {strides = array<i32>} : memref<1x128xf32, #tpu.memory_space<vmem>>, vector<1x128xf32>,
    %144 = arith.truncf %132 : vector<80x128xf32> to vector<80x128xbf16>
    %c0_115 = arith.constant 0 : index
    %c0_116 = arith.constant 0 : index
    %c0_117 = arith.constant 0 : index
    %145 = vector.load %arg5[%c0_115, %c0_116, %c0_117] : memref<1x80x128xbf16, #tpu.memory_space<vmem>>, vector<1x80x128xbf16>
    %146 = vector.shape_cast %145 : vector<1x80x128xbf16> to vector<80x128xbf16>
    %147 = vector.shape_cast %144 : vector<80x128xbf16> to vector<1x80x128xbf16>
    tpu.vector_store %arg5[%c0_115, %c0_116, %c0_117], %147 {strides = array<i32>} : memref<1x80x128xbf16, #tpu.memory_space<vmem>>, vector<1x80x128xbf16>,
    return
  }
  func.func @transform_0(%arg0: i32) -> (i32, i32, i32) {
    %c0_i32 = arith.constant 0 : i32
    %c0_i32_0 = arith.constant 0 : i32
    %c0_i32_1 = arith.constant 0 : i32
    return %arg0, %c0_i32, %c0_i32_0 : i32, i32, i32
  }
  func.func @transform_1(%arg0: i32) -> (i32, i32) {
    %c0_i32 = arith.constant 0 : i32
    %c0_i32_0 = arith.constant 0 : i32
    %c0_i32_1 = arith.constant 0 : i32
    return %c0_i32, %c0_i32_0 : i32, i32
  }
  func.func @transform_2(%arg0: i32) -> (i32, i32) {
    %c0_i32 = arith.constant 0 : i32
    %c0_i32_0 = arith.constant 0 : i32
    %c0_i32_1 = arith.constant 0 : i32
    return %c0_i32, %c0_i32_0 : i32, i32
  }
  func.func @transform_3(%arg0: i32) -> (i32, i32, i32) {
    %c0_i32 = arith.constant 0 : i32
    %c0_i32_0 = arith.constant 0 : i32
    %c0_i32_1 = arith.constant 0 : i32
    %c0_i32_2 = arith.constant 0 : i32
    return %c0_i32, %c0_i32_0, %c0_i32_1 : i32, i32, i32
  }
  func.func @transform_4(%arg0: i32) -> (i32, i32, i32) {
    %c0_i32 = arith.constant 0 : i32
    %c0_i32_0 = arith.constant 0 : i32
    %c0_i32_1 = arith.constant 0 : i32
    return %arg0, %c0_i32, %c0_i32_0 : i32, i32, i32
  }
  func.func @transform_5(%arg0: i32) -> (i32, i32) {
    %c0_i32 = arith.constant 0 : i32
    %c0_i32_0 = arith.constant 0 : i32
    %c0_i32_1 = arith.constant 0 : i32
    return %c0_i32, %c0_i32_0 : i32, i32
  }
  func.func @transform_6(%arg0: i32) -> (i32, i32) {
    %c0_i32 = arith.constant 0 : i32
    %c0_i32_0 = arith.constant 0 : i32
    %c0_i32_1 = arith.constant 0 : i32
    return %c0_i32, %c0_i32_0 : i32, i32
  }
}

module attributes {stable_mosaic.version = 11 : i64} {
  func.func @_residual_bn_relu_kernel(%arg0: i32, %arg1: memref<64x128xbf16, #tpu.memory_space<vmem>>, %arg2: memref<64x128xbf16, #tpu.memory_space<vmem>>, %arg3: memref<1x128xf32, #tpu.memory_space<vmem>>, %arg4: memref<1x128xf32, #tpu.memory_space<vmem>>, %arg5: memref<1x128xf32, #tpu.memory_space<vmem>>, %arg6: memref<1x128xf32, #tpu.memory_space<vmem>>, %arg7: memref<64x128xf32, #tpu.memory_space<vmem>>) attributes {dimension_semantics = [#tpu.dimension_semantics<parallel>], iteration_bounds = array<i64: 2>, scalar_prefetch = 0 : i64, scratch_operands = 0 : i64, tpu.core_type = #tpu.core_type<tc>, window_params = [{transform_indices = @transform_0, window_bounds = array<i64: 64, 128>}, {transform_indices = @transform_1, window_bounds = array<i64: 64, 128>}, {pipeline_mode = #tpu.pipeline_mode<synchronous>, transform_indices = @transform_2, window_bounds = array<i64: 1, 128>}, {pipeline_mode = #tpu.pipeline_mode<synchronous>, transform_indices = @transform_3, window_bounds = array<i64: 1, 128>}, {pipeline_mode = #tpu.pipeline_mode<synchronous>, transform_indices = @transform_4, window_bounds = array<i64: 1, 128>}, {pipeline_mode = #tpu.pipeline_mode<synchronous>, transform_indices = @transform_5, window_bounds = array<i64: 1, 128>}, {transform_indices = @transform_6, window_bounds = array<i64: 64, 128>}]} {
    %c0 = arith.constant 0 : index
    %c0_0 = arith.constant 0 : index
    %0 = vector.load %arg1[%c0, %c0_0] : memref<64x128xbf16, #tpu.memory_space<vmem>>, vector<64x128xbf16>
    %1 = arith.extf %0 : vector<64x128xbf16> to vector<64x128xf32>
    %c0_1 = arith.constant 0 : index
    %c0_2 = arith.constant 0 : index
    %2 = vector.load %arg3[%c0_1, %c0_2] : memref<1x128xf32, #tpu.memory_space<vmem>>, vector<1x128xf32>
    %3 = vector.broadcast %2 : vector<1x128xf32> to vector<64x128xf32>
    %4 = arith.mulf %1, %3 : vector<64x128xf32>
    %c0_3 = arith.constant 0 : index
    %c0_4 = arith.constant 0 : index
    %5 = vector.load %arg4[%c0_3, %c0_4] : memref<1x128xf32, #tpu.memory_space<vmem>>, vector<1x128xf32>
    %6 = vector.broadcast %5 : vector<1x128xf32> to vector<64x128xf32>
    %7 = arith.addf %4, %6 : vector<64x128xf32>
    %c0_5 = arith.constant 0 : index
    %c0_6 = arith.constant 0 : index
    %8 = vector.load %arg2[%c0_5, %c0_6] : memref<64x128xbf16, #tpu.memory_space<vmem>>, vector<64x128xbf16>
    %9 = arith.extf %8 : vector<64x128xbf16> to vector<64x128xf32>
    %c0_7 = arith.constant 0 : index
    %c0_8 = arith.constant 0 : index
    %10 = vector.load %arg5[%c0_7, %c0_8] : memref<1x128xf32, #tpu.memory_space<vmem>>, vector<1x128xf32>
    %11 = vector.broadcast %10 : vector<1x128xf32> to vector<64x128xf32>
    %12 = arith.mulf %9, %11 : vector<64x128xf32>
    %13 = arith.addf %7, %12 : vector<64x128xf32>
    %c0_9 = arith.constant 0 : index
    %c0_10 = arith.constant 0 : index
    %14 = vector.load %arg6[%c0_9, %c0_10] : memref<1x128xf32, #tpu.memory_space<vmem>>, vector<1x128xf32>
    %15 = vector.broadcast %14 : vector<1x128xf32> to vector<64x128xf32>
    %16 = arith.addf %13, %15 : vector<64x128xf32>
    %cst = arith.constant 0.000000e+00 : f32
    %17 = vector.broadcast %cst : f32 to vector<64x128xf32>
    %18 = arith.maximumf %16, %17 : vector<64x128xf32>
    %c0_11 = arith.constant 0 : index
    %c0_12 = arith.constant 0 : index
    %19 = vector.load %arg7[%c0_11, %c0_12] : memref<64x128xf32, #tpu.memory_space<vmem>>, vector<64x128xf32>
    tpu.vector_store %arg7[%c0_11, %c0_12], %18 {strides = array<i32>} : memref<64x128xf32, #tpu.memory_space<vmem>>, vector<64x128xf32>,
    return
  }
  func.func @transform_0(%arg0: i32) -> (i32, i32) {
    %c0_i32 = arith.constant 0 : i32
    %c0_i32_0 = arith.constant 0 : i32
    return %arg0, %c0_i32 : i32, i32
  }
  func.func @transform_1(%arg0: i32) -> (i32, i32) {
    %c0_i32 = arith.constant 0 : i32
    %c0_i32_0 = arith.constant 0 : i32
    return %arg0, %c0_i32 : i32, i32
  }
  func.func @transform_2(%arg0: i32) -> (i32, i32) {
    %c0_i32 = arith.constant 0 : i32
    %c0_i32_0 = arith.constant 0 : i32
    %c0_i32_1 = arith.constant 0 : i32
    return %c0_i32, %c0_i32_0 : i32, i32
  }
  func.func @transform_3(%arg0: i32) -> (i32, i32) {
    %c0_i32 = arith.constant 0 : i32
    %c0_i32_0 = arith.constant 0 : i32
    %c0_i32_1 = arith.constant 0 : i32
    return %c0_i32, %c0_i32_0 : i32, i32
  }
  func.func @transform_4(%arg0: i32) -> (i32, i32) {
    %c0_i32 = arith.constant 0 : i32
    %c0_i32_0 = arith.constant 0 : i32
    %c0_i32_1 = arith.constant 0 : i32
    return %c0_i32, %c0_i32_0 : i32, i32
  }
  func.func @transform_5(%arg0: i32) -> (i32, i32) {
    %c0_i32 = arith.constant 0 : i32
    %c0_i32_0 = arith.constant 0 : i32
    %c0_i32_1 = arith.constant 0 : i32
    return %c0_i32, %c0_i32_0 : i32, i32
  }
  func.func @transform_6(%arg0: i32) -> (i32, i32) {
    %c0_i32 = arith.constant 0 : i32
    %c0_i32_0 = arith.constant 0 : i32
    return %arg0, %c0_i32 : i32, i32
  }
}

</mosaic_0001>

<llo_original>
// kernel: resnet_layer_forward.3
$region0: #{resnet_layer_forward.3}
  #allocation0 [shape = 'u32[]', space=smem, size = 0x4, offset = 0x4, fixed_abs, tag = 'smem constant byte address 0x4 - core index']
  #allocation1 [shape = 'u32[144,128]{1,0:T(1,128)}', space=vmem, size = 0x12000, scoped, tag = 'internal scratch']
  %s0 = inlined_call_operand.vmem [shape: bf16[128,36], index: 0, kind: input, shape index: {}]
  %s1 = inlined_call_operand.vmem [shape: bf16[128,4], index: 1, kind: input, shape index: {}]
  %s2 = inlined_call_operand.vmem [shape: bf16[36,128], index: 2, kind: input, shape index: {}]
  %s3 = inlined_call_operand.vmem [shape: bf16[4,128], index: 3, kind: input, shape index: {}]
  %s4 = inlined_call_operand.vmem [shape: bf16[128,128], index: 4, kind: output, shape index: {0}]
  %s5 = inlined_call_operand.vmem [shape: bf16[128,128], index: 5, kind: output, shape index: {1}]
  %s6 = inlined_call_operand.vmem [shape: f32[1,128], index: 6, kind: output, shape index: {2}]
  %s7 = inlined_call_operand.vmem [shape: f32[1,128], index: 7, kind: output, shape index: {3}]
  %s8 = inlined_call_operand.vmem [shape: f32[1,128], index: 8, kind: output, shape index: {4}]
  %s9 = inlined_call_operand.vmem [shape: f32[1,128], index: 9, kind: output, shape index: {5}]
  %10 = xla_tuple %s4, %s5, %s6, %s7, %s8, %s9
  %s11 = sld [smem:[#allocation0]]
  $region93: #{resnet_layer_forward.3} parent=0
    _
  %s13 = ssub.s32 1, %s11
  %s14 = scalar_select 0, %s13, %s11
  loop: start=0, step=1, limit=4
  $region2: #{resnet_layer_forward.3} parent=0 // loop_pre_header
    _
  $region3: #{resnet_layer_forward.3} parent=0 // loop_header
    %s16 = sphi 0, %s20
    %p17 = scmp.ge.s32.totalorder %s16, 4
    %s26 = sphi 0, %s28
    %s29 = sphi 0, %s26
    %s30 = sphi 0, %s29
    %s46 = sphi 0, %s30
    %s52 = sphi 0, %s54
    %s55 = sphi 0, %s52
    %s56 = sphi 0, %s55
    %s72 = sphi 0, %s56
    %s76 = sphi 0, %s76
    %s78 = sphi 0, %s76
    %s79 = sphi 0, %s78
    %s93 = sphi 0, %s79
    %s97 = sphi 0, %s97
    %s99 = sphi 0, %s97
    %s100 = sphi 0, %s99
    %s114 = sphi 0, %s100
    %s120 = sphi 0, %s122
    %s123 = sphi 0, %s120
    %s124 = sphi 0, %s123
    %s140 = sphi 0, %s124
    %s146 = sphi 0, %s148
    %s149 = sphi 0, %s146
    %s150 = sphi 0, %s149
    %s166 = sphi 0, %s150
    %s170 = sphi 0, %s170
    %s172 = sphi 0, %s170
    %s173 = sphi 0, %s172
    %s187 = sphi 0, %s173
    %s191 = sphi 0, %s191
    %s193 = sphi 0, %s191
    %s194 = sphi 0, %s193
    %s208 = sphi 0, %s194
    %s212 = sphi 0, %s212
    %s214 = sphi 0, %s212
    %s215 = sphi 0, %s214
    %s229 = sphi 0, %s215
    %s233 = sphi 0, %s233
    %s235 = sphi 0, %s233
    %s236 = sphi 0, %s235
    %s250 = sphi 0, %s236
  $region4: #{resnet_layer_forward.3} parent=0 // loop_header_branch
    %19 = sbr.rel (%p17) target = $region8
  $region5: #{resnet_layer_forward.3} parent=0 // loop_body
    %s21 = ssub.s32 %s16, 1
    %s22 = ssub.s32 %s16, 2
    %s23 = sadd.s32 %s16, 1
    %s24 = ssub.s32 %s16, %s23
    %p25 = scmp.eq.s32.totalorder %s24, 0
    %s27 = sadd.s32 %s26, 1
    %s28 = scalar_select %p25, %s26, %s27
    %p31 = pneg %p25
    %p32 = scmp.eq.s32.totalorder %s16, 1
    %p33 = por %p31, %p32
    %p34 = scmp.ne.s32.totalorder %s26, %s29
    %p35 = scmp.eq.s32.totalorder %s16, 0
    %p36 = por %p34, %p35
    %p37 = scmp.ne.s32.totalorder %s26, %s29
    %p38 = scmp.eq.s32.totalorder %s21, 1
    %p39 = por %p37, %p38
    %p40 = scmp.ne.s32.totalorder %s29, %s30
    %p41 = scmp.eq.s32.totalorder %s21, 0
    %p42 = por %p40, %p41
    %p43 = scmp.ne.s32.totalorder %s29, %s30
    %p44 = scmp.eq.s32.totalorder %s22, 1
    %p45 = por %p43, %p44
    %p47 = scmp.ne.s32.totalorder %s30, %s46
    %p48 = scmp.eq.s32.totalorder %s22, 0
    %p49 = por %p47, %p48
    %s50 = ssub.s32 %s16, %s23
    %p51 = scmp.eq.s32.totalorder %s50, 0
    %s53 = sadd.s32 %s52, 1
    %s54 = scalar_select %p51, %s52, %s53
    %p57 = pneg %p51
    %p58 = scmp.eq.s32.totalorder %s16, 1
    %p59 = por %p57, %p58
    %p60 = scmp.ne.s32.totalorder %s52, %s55
    %p61 = scmp.eq.s32.totalorder %s16, 0
    %p62 = por %p60, %p61
    %p63 = scmp.ne.s32.totalorder %s52, %s55
    %p64 = scmp.eq.s32.totalorder %s21, 1
    %p65 = por %p63, %p64
    %p66 = scmp.ne.s32.totalorder %s55, %s56
    %p67 = scmp.eq.s32.totalorder %s21, 0
    %p68 = por %p66, %p67
    %p69 = scmp.ne.s32.totalorder %s55, %s56
    %p70 = scmp.eq.s32.totalorder %s22, 1
    %p71 = por %p69, %p70
    %p73 = scmp.ne.s32.totalorder %s56, %s72
    %p74 = scmp.eq.s32.totalorder %s22, 0
    %p75 = por %p73, %p74
    %s77 = sadd.s32 %s76, 1
    %p80 = scmp.eq.s32.totalorder %s16, 1
    %p81 = scmp.ne.s32.totalorder %s76, %s78
    %p82 = scmp.eq.s32.totalorder %s16, 0
    %p83 = por %p81, %p82
    %p84 = scmp.ne.s32.totalorder %s76, %s78
    %p85 = scmp.eq.s32.totalorder %s21, 1
    %p86 = por %p84, %p85
    %p87 = scmp.ne.s32.totalorder %s78, %s79
    %p88 = scmp.eq.s32.totalorder %s21, 0
    %p89 = por %p87, %p88
    %p90 = scmp.ne.s32.totalorder %s78, %s79
    %p91 = scmp.eq.s32.totalorder %s22, 1
    %p92 = por %p90, %p91
    %p94 = scmp.ne.s32.totalorder %s79, %s93
    %p95 = scmp.eq.s32.totalorder %s22, 0
    %p96 = por %p94, %p95
    %s98 = sadd.s32 %s97, 1
    %p101 = scmp.eq.s32.totalorder %s16, 1
    %p102 = scmp.ne.s32.totalorder %s97, %s99
    %p103 = scmp.eq.s32.totalorder %s16, 0
    %p104 = por %p102, %p103
    %p105 = scmp.ne.s32.totalorder %s97, %s99
    %p106 = scmp.eq.s32.totalorder %s21, 1
    %p107 = por %p105, %p106
    %p108 = scmp.ne.s32.totalorder %s99, %s100
    %p109 = scmp.eq.s32.totalorder %s21, 0
    %p110 = por %p108, %p109
    %p111 = scmp.ne.s32.totalorder %s99, %s100
    %p112 = scmp.eq.s32.totalorder %s22, 1
    %p113 = por %p111, %p112
    %p115 = scmp.ne.s32.totalorder %s100, %s114
    %p116 = scmp.eq.s32.totalorder %s22, 0
    %p117 = por %p115, %p116
    %s118 = ssub.s32 %s16, %s23
    %p119 = scmp.eq.s32.totalorder %s118, 0
    %s121 = sadd.s32 %s120, 1
    %s122 = scalar_select %p119, %s120, %s121
    %p125 = pneg %p119
    %p126 = scmp.eq.s32.totalorder %s16, 1
    %p127 = por %p125, %p126
    %p128 = scmp.ne.s32.totalorder %s120, %s123
    %p129 = scmp.eq.s32.totalorder %s16, 0
    %p130 = por %p128, %p129
    %p131 = scmp.ne.s32.totalorder %s120, %s123
    %p132 = scmp.eq.s32.totalorder %s21, 1
    %p133 = por %p131, %p132
    %p134 = scmp.ne.s32.totalorder %s123, %s124
    %p135 = scmp.eq.s32.totalorder %s21, 0
    %p136 = por %p134, %p135
    %p137 = scmp.ne.s32.totalorder %s123, %s124
    %p138 = scmp.eq.s32.totalorder %s22, 1
    %p139 = por %p137, %p138
    %p141 = scmp.ne.s32.totalorder %s124, %s140
    %p142 = scmp.eq.s32.totalorder %s22, 0
    %p143 = por %p141, %p142
    %s144 = ssub.s32 %s16, %s23
    %p145 = scmp.eq.s32.totalorder %s144, 0
    %s147 = sadd.s32 %s146, 1
    %s148 = scalar_select %p145, %s146, %s147
    %p151 = pneg %p145
    %p152 = scmp.eq.s32.totalorder %s16, 1
    %p153 = por %p151, %p152
    %p154 = scmp.ne.s32.totalorder %s146, %s149
    %p155 = scmp.eq.s32.totalorder %s16, 0
    %p156 = por %p154, %p155
    %p157 = scmp.ne.s32.totalorder %s146, %s149
    %p158 = scmp.eq.s32.totalorder %s21, 1
    %p159 = por %p157, %p158
    %p160 = scmp.ne.s32.totalorder %s149, %s150
    %p161 = scmp.eq.s32.totalorder %s21, 0
    %p162 = por %p160, %p161
    %p163 = scmp.ne.s32.totalorder %s149, %s150
    %p164 = scmp.eq.s32.totalorder %s22, 1
    %p165 = por %p163, %p164
    %p167 = scmp.ne.s32.totalorder %s150, %s166
    %p168 = scmp.eq.s32.totalorder %s22, 0
    %p169 = por %p167, %p168
    %s171 = sadd.s32 %s170, 1
    %p174 = scmp.eq.s32.totalorder %s16, 1
    %p175 = scmp.ne.s32.totalorder %s170, %s172
    %p176 = scmp.eq.s32.totalorder %s16, 0
    %p177 = por %p175, %p176
    %p178 = scmp.ne.s32.totalorder %s170, %s172
    %p179 = scmp.eq.s32.totalorder %s21, 1
    %p180 = por %p178, %p179
    %p181 = scmp.ne.s32.totalorder %s172, %s173
    %p182 = scmp.eq.s32.totalorder %s21, 0
    %p183 = por %p181, %p182
    %p184 = scmp.ne.s32.totalorder %s172, %s173
    %p185 = scmp.eq.s32.totalorder %s22, 1
    %p186 = por %p184, %p185
    %p188 = scmp.ne.s32.totalorder %s173, %s187
    %p189 = scmp.eq.s32.totalorder %s22, 0
    %p190 = por %p188, %p189
    %s192 = sadd.s32 %s191, 1
    %p195 = scmp.eq.s32.totalorder %s16, 1
    %p196 = scmp.ne.s32.totalorder %s191, %s193
    %p197 = scmp.eq.s32.totalorder %s16, 0
    %p198 = por %p196, %p197
    %p199 = scmp.ne.s32.totalorder %s191, %s193
    %p200 = scmp.eq.s32.totalorder %s21, 1
    %p201 = por %p199, %p200
    %p202 = scmp.ne.s32.totalorder %s193, %s194
    %p203 = scmp.eq.s32.totalorder %s21, 0
    %p204 = por %p202, %p203
    %p205 = scmp.ne.s32.totalorder %s193, %s194
    %p206 = scmp.eq.s32.totalorder %s22, 1
    %p207 = por %p205, %p206
    %p209 = scmp.ne.s32.totalorder %s194, %s208
    %p210 = scmp.eq.s32.totalorder %s22, 0
    %p211 = por %p209, %p210
    %s213 = sadd.s32 %s212, 1
    %p216 = scmp.eq.s32.totalorder %s16, 1
    %p217 = scmp.ne.s32.totalorder %s212, %s214
    %p218 = scmp.eq.s32.totalorder %s16, 0
    %p219 = por %p217, %p218
    %p220 = scmp.ne.s32.totalorder %s212, %s214
    %p221 = scmp.eq.s32.totalorder %s21, 1
    %p222 = por %p220, %p221
    %p223 = scmp.ne.s32.totalorder %s214, %s215
    %p224 = scmp.eq.s32.totalorder %s21, 0
    %p225 = por %p223, %p224
    %p226 = scmp.ne.s32.totalorder %s214, %s215
    %p227 = scmp.eq.s32.totalorder %s22, 1
    %p228 = por %p226, %p227
    %p230 = scmp.ne.s32.totalorder %s215, %s229
    %p231 = scmp.eq.s32.totalorder %s22, 0
    %p232 = por %p230, %p231
    %s234 = sadd.s32 %s233, 1
    %p237 = scmp.eq.s32.totalorder %s16, 1
    %p238 = scmp.ne.s32.totalorder %s233, %s235
    %p239 = scmp.eq.s32.totalorder %s16, 0
    %p240 = por %p238, %p239
    %p241 = scmp.ne.s32.totalorder %s233, %s235
    %p242 = scmp.eq.s32.totalorder %s21, 1
    %p243 = por %p241, %p242
    %p244 = scmp.ne.s32.totalorder %s235, %s236
    %p245 = scmp.eq.s32.totalorder %s21, 0
    %p246 = por %p244, %p245
    %p247 = scmp.ne.s32.totalorder %s235, %s236
    %p248 = scmp.eq.s32.totalorder %s22, 1
    %p249 = por %p247, %p248
    %p251 = scmp.ne.s32.totalorder %s236, %s250
    %p252 = scmp.eq.s32.totalorder %s22, 0
    %p253 = por %p251, %p252
    %p254 = scmp.le.s32.totalorder 1, %s16
    %p255 = scmp.lt.s32.totalorder %s16, 3
    %p256 = pnand %p254, %p255
    %p257 = pneg %p256
    // Predicated region
    $region9: #{resnet_layer_forward.3} parent=5 // pred_check
      _
    $region10: #{resnet_layer_forward.3} parent=5 // pred_check_branch
      %259 = sbr.rel (%p256) target = $region12
    $region11: #{resnet_layer_forward.3} parent=5 // pred_region
      %s260 = ssub.s32 %s16, 1
      // Predicated region
      $region13: #{resnet_layer_forward.3} parent=11 // pred_check
        %p261 = pneg %p89
      $region14: #{resnet_layer_forward.3} parent=11 // pred_check_branch
        %263 = sbr.rel (%p261) target = $region16
      $region15: #{resnet_layer_forward.3} parent=11 // pred_region
        _
      $region16: #{resnet_layer_forward.3} parent=11 // pred_fallthru
        _
      // Predicated region
      $region17: #{resnet_layer_forward.3} parent=11 // pred_check
        %p264 = pneg %p110
      $region18: #{resnet_layer_forward.3} parent=11 // pred_check_branch
        %266 = sbr.rel (%p264) target = $region20
      $region19: #{resnet_layer_forward.3} parent=11 // pred_region
        _
      $region20: #{resnet_layer_forward.3} parent=11 // pred_fallthru
        _
    $region12: #{resnet_layer_forward.3} parent=5 // pred_fallthru
      _
    %p267 = scmp.lt.s32.totalorder %s16, 2
    // Predicated region
    $region21: #{resnet_layer_forward.3} parent=5 // pred_check
      %p268 = pneg %p267
    $region22: #{resnet_layer_forward.3} parent=5 // pred_check_branch
      %270 = sbr.rel (%p268) target = $region24
    $region23: #{resnet_layer_forward.3} parent=5 // pred_region
      // Predicated region
      $region25: #{resnet_layer_forward.3} parent=23 // pred_check
        %p271 = pneg %p36
      $region26: #{resnet_layer_forward.3} parent=23 // pred_check_branch
        %273 = sbr.rel (%p271) target = $region28
      $region27: #{resnet_layer_forward.3} parent=23 // pred_region
        %s274 = smul.u32 8, %s16
        %p275 = scmp.lt.s32.totalorder %s274, 15
        %s276 = scalar_select %p275, %s274, 15
        %s277 = smul.addr %s276, 4
        %s278 = scalar_lea.vmem %s0, %s277
        %s279 = smul.u32 8, %s16
      $region28: #{resnet_layer_forward.3} parent=23 // pred_fallthru
        _
      // Predicated region
      $region29: #{resnet_layer_forward.3} parent=23 // pred_check
        %p280 = pneg %p62
      $region30: #{resnet_layer_forward.3} parent=23 // pred_check_branch
        %282 = sbr.rel (%p280) target = $region32
      $region31: #{resnet_layer_forward.3} parent=23 // pred_region
        %s283 = smul.u32 8, %s16
        %p284 = scmp.lt.s32.totalorder %s283, 15
        %s285 = scalar_select %p284, %s283, 15
        %s286 = smul.addr %s285, 4
        %s287 = scalar_lea.vmem %s1, %s286
        %s288 = smul.u32 8, %s16
      $region32: #{resnet_layer_forward.3} parent=23 // pred_fallthru
        _
    $region24: #{resnet_layer_forward.3} parent=5 // pred_fallthru
      _
    %p289 = scmp.le.s32.totalorder 1, %s16
    %p290 = scmp.lt.s32.totalorder %s16, 3
    %p291 = pnand %p289, %p290
    %p292 = pneg %p291
    // Predicated region
    $region33: #{resnet_layer_forward.3} parent=5 // pred_check
      _
    $region34: #{resnet_layer_forward.3} parent=5 // pred_check_branch
      %294 = sbr.rel (%p291) target = $region36
    $region35: #{resnet_layer_forward.3} parent=5 // pred_region
      %s295 = ssub.s32 %s16, 1
      %s296 = smul.u32 8, %s21
      %p297 = scmp.lt.s32.totalorder %s296, 15
      %s298 = scalar_select %p297, %s296, 15
      %s299 = smul.addr %s298, 4
      %s300 = scalar_lea.vmem %s0, %s299
      %p301 = pneg %p42
      %p302 = pneg %p39
      %s303 = smul.u32 8, %s21
      %p304 = scmp.lt.s32.totalorder %s303, 15
      %s305 = scalar_select %p304, %s303, 15
      %s306 = smul.addr %s305, 4
      %s307 = scalar_lea.vmem %s1, %s306
      %p308 = pneg %p68
      %p309 = pneg %p65
      %p310 = pneg %p89
      %p311 = pneg %p86
      %p312 = pneg %p110
      %p313 = pneg %p107
      %p314 = pneg %p136
      %p315 = pneg %p133
      %s316 = smul.u32 8, %s21
      %p317 = scmp.lt.s32.totalorder %s316, 15
      %s318 = scalar_select %p317, %s316, 15
      %s319 = smul.addr %s318, 4
      %s320 = scalar_lea.vmem %s4, %s319
      %p321 = pneg %p162
      %p322 = pneg %p159
      %s323 = smul.u32 8, %s21
      %p324 = scmp.lt.s32.totalorder %s323, 15
      %s325 = scalar_select %p324, %s323, 15
      %s326 = smul.addr %s325, 4
      %s327 = scalar_lea.vmem %s5, %s326
      %p328 = pneg %p183
      %p329 = pneg %p180
      %p330 = pneg %p204
      %p331 = pneg %p201
      %p332 = pneg %p225
      %p333 = pneg %p222
      %p334 = pneg %p246
      %p335 = pneg %p243
      %s336 = smul.u32 8, %s21
      %p337 = scmp.lt.s32.totalorder %s336, 15
      %s338 = scalar_select %p337, %s336, 15
      %s339 = smul.addr %s338, 4
      %s340 = scalar_lea.vmem %s0, %s339
      %s341 = smul.u32 8, %s21
      %s342 = smul.u32 8, %s21
      %p343 = scmp.lt.s32.totalorder %s342, 15
      %s344 = scalar_select %p343, %s342, 15
      %s345 = smul.addr %s344, 4
      %s346 = scalar_lea.vmem %s1, %s345
      %s347 = smul.u32 8, %s21
      %s348 = smul.u32 8, %s21
      %p349 = scmp.lt.s32.totalorder %s348, 15
      %s350 = scalar_select %p349, %s348, 15
      %s351 = smul.addr %s350, 4
      %s352 = scalar_lea.vmem %s4, %s351
      %s353 = smul.u32 8, %s21
      %s354 = smul.u32 8, %s21
      %p355 = scmp.lt.s32.totalorder %s354, 15
      %s356 = scalar_select %p355, %s354, 15
      %s357 = smul.addr %s356, 4
      %s358 = scalar_lea.vmem %s5, %s357
      %s359 = smul.u32 8, %s21
      %p361 = scmp.eq.s32.totalorder %s21, 0
      // Predicated region
      $region37: #{resnet_layer_forward.3} parent=35 // pred_check
        %p362 = pneg %p361
      $region38: #{resnet_layer_forward.3} parent=35 // pred_check_branch
        %364 = sbr.rel (%p362) target = $region40
      $region39: #{resnet_layer_forward.3} parent=35 // pred_region
        %365 = vst [vmem:[%s6] sm:$0x1] 0.0
        %366 = vst [vmem:[%s7] sm:$0x1] 0.0
        %367 = vst [vmem:[%s8] sm:$0x1] 0.0
        %368 = vst [vmem:[%s9] sm:$0x1] 0.0
      $region40: #{resnet_layer_forward.3} parent=35 // pred_fallthru
        _
      %v369 = vld [vmem:[%s340] sm:$0xf]
      %v370 = vld [vmem:[%s340 + $0x4] sm:$0xf]
      %v371 = vld [vmem:[%s340 + $0x8] sm:$0xf]
      %v372 = vld [vmem:[%s340 + $0xc] sm:$0xf]
      %v373 = vld [vmem:[%s340 + $0x10] sm:$0xf]
      %v374 = vld [vmem:[%s340 + $0x14] sm:$0xf]
      %v375 = vld [vmem:[%s340 + $0x18] sm:$0xf]
      %v376 = vld [vmem:[%s340 + $0x1c] sm:$0xf]
      %v377 = vld [vmem:[%s2] sm:$0xf]
      %v378 = vld [vmem:[%s2 + $0x4] sm:$0xf]
      %v379 = vld [vmem:[%s2 + $0x8] sm:$0xf]
      %v380 = vld [vmem:[%s2 + $0xc] sm:$0xf]
      %v381 = vld [vmem:[%s2 + $0x10] sm:$0x3]
      %v390 = vunpack.c.l.b16 %v369
      %v391 = vunpack.c.l.b16 %v370
      %v392 = vunpack.c.l.b16 %v371
      %v393 = vunpack.c.l.b16 %v372
      %v394 = vunpack.c.l.b16 %v373
      %v395 = vunpack.c.l.b16 %v374
      %v396 = vunpack.c.l.b16 %v375
      %v397 = vunpack.c.l.b16 %v376
      %v398 = vpack.c.b16 %v391, %v390
      %v399 = vpack.c.b16 %v393, %v392
      %v400 = vpack.c.b16 %v395, %v394
      %v401 = vpack.c.b16 %v397, %v396
      %v407 = vunpack.c.l.b16 %v377
      %v408 = vunpack.c.l.b16 %v378
      %v409 = vunpack.c.l.b16 %v379
      %v410 = vunpack.c.l.b16 %v380
      %v411 = vunpack.c.l.b16 %v381
      %v412 = vpack.c.b16 %v408, %v407
      %v413 = vpack.c.b16 %v410, %v409
      %v414 = vpack.c.b16 %v411, %v411
      %vm417 = vcmask 293888
      %v419 = vsel %vm417, %v398, 0
      %v422 = vsel %vm417, %v399, 0
      %v425 = vsel %vm417, %v400, 0
      %v428 = vsel %vm417, %v401, 0
      %vm430 = vcmask 1041408
      %v432 = vsel %vm430, %v414, 0
      %434 = vmatprep.subr.bf16.mxu0 0
      %435 = vmatpush1.bf16.msra.mxu0 0
      %436 = vmatprep.subr.bf16.mxu0 0
      %437 = vmatpush1.bf16.msra.mxu0 0
      %438 = vmatprep.subr.bf16.mxu0 0
      %439 = vmatpush1.bf16.msra.mxu0 0
      %440 = vmatprep.subr.bf16.mxu0 0
      %441 = vmatpush1.bf16.msra.mxu0 0
      %442 = vmatprep.subr.bf16.mxu0 0
      %443 = vmatpush1.bf16.msra.mxu0 0
      %444 = vmatprep.subr.bf16.mxu0 0
      %445 = vmatpush1.bf16.msra.mxu0 %v432
      %446 = vmatprep.subr.bf16.mxu0 0
      %447 = vmatpush1.bf16.msra.mxu0 %v413
      %448 = vmatprep.subr.bf16.mxu0 0
      %449 = vmatpush1.bf16.msra.mxu0 %v412
      %450 = vmatprep.subr.bf16.mxu0 0
      %451 = vmatpush2.bf16.msra.mxu0 0
      %452 = vmatprep.subr.bf16.mxu0 0
      %453 = vmatpush2.bf16.msra.mxu0 0
      %454 = vmatprep.subr.bf16.mxu0 0
      %455 = vmatpush2.bf16.msra.mxu0 0
      %456 = vmatprep.subr.bf16.mxu0 0
      %457 = vmatpush2.bf16.msra.mxu0 0
      %458 = vmatprep.subr.bf16.mxu0 0
      %459 = vmatpush2.bf16.msra.mxu0 0
      %460 = vmatprep.subr.bf16.mxu0 0
      %461 = vmatpush2.bf16.msra.mxu0 0
      %462 = vmatprep.subr.bf16.mxu0 0
      %463 = vmatpush2.bf16.msra.mxu0 0
      %464 = vmatprep.subr.bf16.mxu0 0
      %465 = vmatpush2.bf16.msra.mxu0 0
      %466 = vmatprep.mubr.bf16.mxu0 0
      %467 = vmatmul.mubr.bf16.gmra.mxu0 %v419
      %v468 = vpop.f32.mrf.mxu0
      %v469 = vadd.f32 0.0, %v468
      %v470 = vpop.f32.mrf.mxu0
      %v471 = vpop.f32.mrf.mxu0
      %v472 = vadd.f32 0.0, %v471
      %v473 = vpop.f32.mrf.mxu0
      %474 = vmatprep.mubr.bf16.mxu0 0
      %475 = vmatmul.mubr.bf16.gmra.mxu0 %v422
      %v476 = vpop.f32.mrf.mxu0
      %v477 = vadd.f32 0.0, %v476
      %v478 = vpop.f32.mrf.mxu0
      %v479 = vpop.f32.mrf.mxu0
      %v480 = vadd.f32 0.0, %v479
      %v481 = vpop.f32.mrf.mxu0
      %482 = vmatprep.mubr.bf16.mxu0 0
      %483 = vmatmul.mubr.bf16.gmra.mxu0 %v425
      %v484 = vpop.f32.mrf.mxu0
      %v485 = vadd.f32 0.0, %v484
      %v486 = vpop.f32.mrf.mxu0
      %v487 = vpop.f32.mrf.mxu0
      %v488 = vadd.f32 0.0, %v487
      %v489 = vpop.f32.mrf.mxu0
      %490 = vmatprep.mubr.bf16.mxu0 0
      %491 = vmatmul.mubr.bf16.gmra.mxu0 %v428
      %v492 = vpop.f32.mrf.mxu0
      %v493 = vadd.f32 0.0, %v492
      %v494 = vpop.f32.mrf.mxu0
      %v495 = vpop.f32.mrf.mxu0
      %v496 = vadd.f32 0.0, %v495
      %v497 = vpop.f32.mrf.mxu0
      %498 = vdwg.mxu0
      %v499 = vld [vmem:[%s346] sm:$0xf]
      %v500 = vld [vmem:[%s346 + $0x4] sm:$0xf]
      %v501 = vld [vmem:[%s346 + $0x8] sm:$0xf]
      %v502 = vld [vmem:[%s346 + $0xc] sm:$0xf]
      %v503 = vld [vmem:[%s346 + $0x10] sm:$0xf]
      %v504 = vld [vmem:[%s346 + $0x14] sm:$0xf]
      %v505 = vld [vmem:[%s346 + $0x18] sm:$0xf]
      %v506 = vld [vmem:[%s346 + $0x1c] sm:$0xf]
      %v507 = vld [vmem:[%s3] sm:$0x3]
      %v516 = vunpack.c.l.b16 %v499
      %v517 = vunpack.c.l.b16 %v500
      %v518 = vunpack.c.l.b16 %v501
      %v519 = vunpack.c.l.b16 %v502
      %v520 = vunpack.c.l.b16 %v503
      %v521 = vunpack.c.l.b16 %v504
      %v522 = vunpack.c.l.b16 %v505
      %v523 = vunpack.c.l.b16 %v506
      %v524 = vpack.c.b16 %v517, %v516
      %v525 = vpack.c.b16 %v519, %v518
      %v526 = vpack.c.b16 %v521, %v520
      %v527 = vpack.c.b16 %v523, %v522
      %vm528 = vcmask 31744
      %v530 = vsel %vm528, %v524, 0
      %v533 = vsel %vm528, %v525, 0
      %v536 = vsel %vm528, %v526, 0
      %v539 = vsel %vm528, %v527, 0
      %v542 = vsel %vm430, %v507, 0
      %544 = vmatprep.subr.bf16.mxu0 0
      %545 = vmatpush1.bf16.msra.mxu0 0
      %546 = vmatprep.subr.bf16.mxu0 0
      %547 = vmatpush1.bf16.msra.mxu0 0
      %548 = vmatprep.subr.bf16.mxu0 0
      %549 = vmatpush1.bf16.msra.mxu0 0
      %550 = vmatprep.subr.bf16.mxu0 0
      %551 = vmatpush1.bf16.msra.mxu0 0
      %552 = vmatprep.subr.bf16.mxu0 0
      %553 = vmatpush1.bf16.msra.mxu0 0
      %554 = vmatprep.subr.bf16.mxu0 0
      %555 = vmatpush1.bf16.msra.mxu0 0
      %556 = vmatprep.subr.bf16.mxu0 0
      %557 = vmatpush1.bf16.msra.mxu0 0
      %558 = vmatprep.subr.bf16.mxu0 0
      %559 = vmatpush1.bf16.msra.mxu0 %v542
      %560 = vmatprep.subr.bf16.mxu0 0
      %561 = vmatpush2.bf16.msra.mxu0 0
      %562 = vmatprep.subr.bf16.mxu0 0
      %563 = vmatpush2.bf16.msra.mxu0 0
      %564 = vmatprep.subr.bf16.mxu0 0
      %565 = vmatpush2.bf16.msra.mxu0 0
      %566 = vmatprep.subr.bf16.mxu0 0
      %567 = vmatpush2.bf16.msra.mxu0 0
      %568 = vmatprep.subr.bf16.mxu0 0
      %569 = vmatpush2.bf16.msra.mxu0 0
      %570 = vmatprep.subr.bf16.mxu0 0
      %571 = vmatpush2.bf16.msra.mxu0 0
      %572 = vmatprep.subr.bf16.mxu0 0
      %573 = vmatpush2.bf16.msra.mxu0 0
      %574 = vmatprep.subr.bf16.mxu0 0
      %575 = vmatpush2.bf16.msra.mxu0 0
      %576 = vmatprep.mubr.bf16.mxu0 0
      %577 = vmatmul.mubr.bf16.gmra.mxu0 %v530
      %v578 = vpop.f32.mrf.mxu0
      %v579 = vadd.f32 0.0, %v578
      %v580 = vpop.f32.mrf.mxu0
      %v581 = vpop.f32.mrf.mxu0
      %v582 = vadd.f32 0.0, %v581
      %v583 = vpop.f32.mrf.mxu0
      %584 = vmatprep.mubr.bf16.mxu0 0
      %585 = vmatmul.mubr.bf16.gmra.mxu0 %v533
      %v586 = vpop.f32.mrf.mxu0
      %v587 = vadd.f32 0.0, %v586
      %v588 = vpop.f32.mrf.mxu0
      %v589 = vpop.f32.mrf.mxu0
      %v590 = vadd.f32 0.0, %v589
      %v591 = vpop.f32.mrf.mxu0
      %592 = vmatprep.mubr.bf16.mxu0 0
      %593 = vmatmul.mubr.bf16.gmra.mxu0 %v536
      %v594 = vpop.f32.mrf.mxu0
      %v595 = vadd.f32 0.0, %v594
      %v596 = vpop.f32.mrf.mxu0
      %v597 = vpop.f32.mrf.mxu0
      %v598 = vadd.f32 0.0, %v597
      %v599 = vpop.f32.mrf.mxu0
      %600 = vmatprep.mubr.bf16.mxu0 0
      %601 = vmatmul.mubr.bf16.gmra.mxu0 %v539
      %v602 = vpop.f32.mrf.mxu0
      %v603 = vadd.f32 0.0, %v602
      %v604 = vpop.f32.mrf.mxu0
      %v605 = vpop.f32.mrf.mxu0
      %v606 = vadd.f32 0.0, %v605
      %v607 = vpop.f32.mrf.mxu0
      %608 = vdwg.mxu0
      %v609 = vld [vmem:[%s6] sm:$0x1]
      %v610 = vadd.f32 %v469, %v472
      %v611 = vadd.f32 %v610, %v477
      %v612 = vadd.f32 %v611, %v480
      %v613 = vadd.f32 %v612, %v485
      %v614 = vadd.f32 %v613, %v488
      %v615 = vadd.f32 %v614, %v493
      %v616 = vadd.f32 %v615, %v496
      %v617 = vrot.slane %v616, 4
      %v618 = vadd.f32 %v616, %v617
      %v619 = vrot.slane %v618, 2
      %v620 = vadd.f32 %v618, %v619
      %v621 = vrot.slane %v620, 1
      %v622 = vadd.f32 %v620, %v621
      %v623 = vadd.f32 %v609, %v622
      %624 = vst [vmem:[%s6] sm:$0x1] %v623
      %v625 = vld [vmem:[%s7] sm:$0x1]
      %v626 = vmul.f32 %v469, %v469
      %v627 = vmul.f32 %v472, %v472
      %v628 = vmul.f32 %v477, %v477
      %v629 = vmul.f32 %v480, %v480
      %v630 = vmul.f32 %v485, %v485
      %v631 = vmul.f32 %v488, %v488
      %v632 = vmul.f32 %v493, %v493
      %v633 = vmul.f32 %v496, %v496
      %v634 = vadd.f32 %v626, %v627
      %v635 = vadd.f32 %v634, %v628
      %v636 = vadd.f32 %v635, %v629
      %v637 = vadd.f32 %v636, %v630
      %v638 = vadd.f32 %v637, %v631
      %v639 = vadd.f32 %v638, %v632
      %v640 = vadd.f32 %v639, %v633
      %v641 = vrot.slane %v640, 4
      %v642 = vadd.f32 %v640, %v641
      %v643 = vrot.slane %v642, 2
      %v644 = vadd.f32 %v642, %v643
      %v645 = vrot.slane %v644, 1
      %v646 = vadd.f32 %v644, %v645
      %v647 = vadd.f32 %v625, %v646
      %648 = vst [vmem:[%s7] sm:$0x1] %v647
      %v649 = vld [vmem:[%s8] sm:$0x1]
      %v650 = vadd.f32 %v579, %v582
      %v651 = vadd.f32 %v650, %v587
      %v652 = vadd.f32 %v651, %v590
      %v653 = vadd.f32 %v652, %v595
      %v654 = vadd.f32 %v653, %v598
      %v655 = vadd.f32 %v654, %v603
      %v656 = vadd.f32 %v655, %v606
      %v657 = vrot.slane %v656, 4
      %v658 = vadd.f32 %v656, %v657
      %v659 = vrot.slane %v658, 2
      %v660 = vadd.f32 %v658, %v659
      %v661 = vrot.slane %v660, 1
      %v662 = vadd.f32 %v660, %v661
      %v663 = vadd.f32 %v649, %v662
      %664 = vst [vmem:[%s8] sm:$0x1] %v663
      %v665 = vld [vmem:[%s9] sm:$0x1]
      %v666 = vmul.f32 %v579, %v579
      %v667 = vmul.f32 %v582, %v582
      %v668 = vmul.f32 %v587, %v587
      %v669 = vmul.f32 %v590, %v590
      %v670 = vmul.f32 %v595, %v595
      %v671 = vmul.f32 %v598, %v598
      %v672 = vmul.f32 %v603, %v603
      %v673 = vmul.f32 %v606, %v606
      %v674 = vadd.f32 %v666, %v667
      %v675 = vadd.f32 %v674, %v668
      %v676 = vadd.f32 %v675, %v669
      %v677 = vadd.f32 %v676, %v670
      %v678 = vadd.f32 %v677, %v671
      %v679 = vadd.f32 %v678, %v672
      %v680 = vadd.f32 %v679, %v673
      %v681 = vrot.slane %v680, 4
      %v682 = vadd.f32 %v680, %v681
      %v683 = vrot.slane %v682, 2
      %v684 = vadd.f32 %v682, %v683
      %v685 = vrot.slane %v684, 1
      %v686 = vadd.f32 %v684, %v685
      %v687 = vadd.f32 %v665, %v686
      %688 = vst [vmem:[%s9] sm:$0x1] %v687
      %v689 = vpack.c.bf16 %v472, %v469
      %v690 = vpack.c.bf16 %v480, %v477
      %v691 = vpack.c.bf16 %v488, %v485
      %v692 = vpack.c.bf16 %v496, %v493
      %v697 = vunpack.c.l.b16 %v689
      %v698 = vunpack.c.h.b16 %v689
      %v699 = vunpack.c.l.b16 %v690
      %v700 = vunpack.c.h.b16 %v690
      %v701 = vunpack.c.l.b16 %v691
      %v702 = vunpack.c.h.b16 %v691
      %v703 = vunpack.c.l.b16 %v692
      %v704 = vunpack.c.h.b16 %v692
      %v705 = vpack.c.b16 %v697, %v697
      %v706 = vpack.c.b16 %v698, %v698
      %v707 = vpack.c.b16 %v699, %v699
      %v708 = vpack.c.b16 %v700, %v700
      %v709 = vpack.c.b16 %v701, %v701
      %v710 = vpack.c.b16 %v702, %v702
      %v711 = vpack.c.b16 %v703, %v703
      %v712 = vpack.c.b16 %v704, %v704
      %721 = vst [vmem:[%s352] sm:$0xf] %v705
      %722 = vst [vmem:[%s352 + $0x4] sm:$0xf] %v706
      %723 = vst [vmem:[%s352 + $0x8] sm:$0xf] %v707
      %724 = vst [vmem:[%s352 + $0xc] sm:$0xf] %v708
      %725 = vst [vmem:[%s352 + $0x10] sm:$0xf] %v709
      %726 = vst [vmem:[%s352 + $0x14] sm:$0xf] %v710
      %727 = vst [vmem:[%s352 + $0x18] sm:$0xf] %v711
      %728 = vst [vmem:[%s352 + $0x1c] sm:$0xf] %v712
      %v729 = vpack.c.bf16 %v582, %v579
      %v730 = vpack.c.bf16 %v590, %v587
      %v731 = vpack.c.bf16 %v598, %v595
      %v732 = vpack.c.bf16 %v606, %v603
      %v737 = vunpack.c.l.b16 %v729
      %v738 = vunpack.c.h.b16 %v729
      %v739 = vunpack.c.l.b16 %v730
      %v740 = vunpack.c.h.b16 %v730
      %v741 = vunpack.c.l.b16 %v731
      %v742 = vunpack.c.h.b16 %v731
      %v743 = vunpack.c.l.b16 %v732
      %v744 = vunpack.c.h.b16 %v732
      %v745 = vpack.c.b16 %v737, %v737
      %v746 = vpack.c.b16 %v738, %v738
      %v747 = vpack.c.b16 %v739, %v739
      %v748 = vpack.c.b16 %v740, %v740
      %v749 = vpack.c.b16 %v741, %v741
      %v750 = vpack.c.b16 %v742, %v742
      %v751 = vpack.c.b16 %v743, %v743
      %v752 = vpack.c.b16 %v744, %v744
      %761 = vst [vmem:[%s358] sm:$0xf] %v745
      %762 = vst [vmem:[%s358 + $0x4] sm:$0xf] %v746
      %763 = vst [vmem:[%s358 + $0x8] sm:$0xf] %v747
      %764 = vst [vmem:[%s358 + $0xc] sm:$0xf] %v748
      %765 = vst [vmem:[%s358 + $0x10] sm:$0xf] %v749
      %766 = vst [vmem:[%s358 + $0x14] sm:$0xf] %v750
      %767 = vst [vmem:[%s358 + $0x18] sm:$0xf] %v751
      %768 = vst [vmem:[%s358 + $0x1c] sm:$0xf] %v752
      %s769 = smul.u32 8, %s21
      %p770 = scmp.lt.s32.totalorder %s769, 15
      %s771 = scalar_select %p770, %s769, 15
      %s772 = smul.addr %s771, 4
      %s773 = scalar_lea.vmem %s4, %s772
      %s774 = smul.u32 8, %s21
      %p775 = scmp.lt.s32.totalorder %s774, 15
      %s776 = scalar_select %p775, %s774, 15
      %s777 = smul.addr %s776, 4
      %s778 = scalar_lea.vmem %s5, %s777
      // Predicated region
      $region41: #{resnet_layer_forward.3} parent=35 // pred_check
        %p779 = pneg %p133
      $region42: #{resnet_layer_forward.3} parent=35 // pred_check_branch
        %781 = sbr.rel (%p779) target = $region44
      $region43: #{resnet_layer_forward.3} parent=35 // pred_region
        %s782 = smul.u32 8, %s21
      $region44: #{resnet_layer_forward.3} parent=35 // pred_fallthru
        _
      // Predicated region
      $region45: #{resnet_layer_forward.3} parent=35 // pred_check
        %p783 = pneg %p159
      $region46: #{resnet_layer_forward.3} parent=35 // pred_check_branch
        %785 = sbr.rel (%p783) target = $region48
      $region47: #{resnet_layer_forward.3} parent=35 // pred_region
        %s786 = smul.u32 8, %s21
      $region48: #{resnet_layer_forward.3} parent=35 // pred_fallthru
        _
      // Predicated region
      $region49: #{resnet_layer_forward.3} parent=35 // pred_check
        %p787 = pneg %p180
      $region50: #{resnet_layer_forward.3} parent=35 // pred_check_branch
        %789 = sbr.rel (%p787) target = $region52
      $region51: #{resnet_layer_forward.3} parent=35 // pred_region
        _
      $region52: #{resnet_layer_forward.3} parent=35 // pred_fallthru
        _
      // Predicated region
      $region53: #{resnet_layer_forward.3} parent=35 // pred_check
        %p790 = pneg %p201
      $region54: #{resnet_layer_forward.3} parent=35 // pred_check_branch
        %792 = sbr.rel (%p790) target = $region56
      $region55: #{resnet_layer_forward.3} parent=35 // pred_region
        _
      $region56: #{resnet_layer_forward.3} parent=35 // pred_fallthru
        _
      // Predicated region
      $region57: #{resnet_layer_forward.3} parent=35 // pred_check
        %p793 = pneg %p222
      $region58: #{resnet_layer_forward.3} parent=35 // pred_check_branch
        %795 = sbr.rel (%p793) target = $region60
      $region59: #{resnet_layer_forward.3} parent=35 // pred_region
        _
      $region60: #{resnet_layer_forward.3} parent=35 // pred_fallthru
        _
      // Predicated region
      $region61: #{resnet_layer_forward.3} parent=35 // pred_check
        %p796 = pneg %p243
      $region62: #{resnet_layer_forward.3} parent=35 // pred_check_branch
        %798 = sbr.rel (%p796) target = $region64
      $region63: #{resnet_layer_forward.3} parent=35 // pred_region
        _
      $region64: #{resnet_layer_forward.3} parent=35 // pred_fallthru
        _
      // Predicated region
      $region65: #{resnet_layer_forward.3} parent=35 // pred_check
        %p799 = pneg %p180
      $region66: #{resnet_layer_forward.3} parent=35 // pred_check_branch
        %801 = sbr.rel (%p799) target = $region68
      $region67: #{resnet_layer_forward.3} parent=35 // pred_region
        _
      $region68: #{resnet_layer_forward.3} parent=35 // pred_fallthru
        _
      // Predicated region
      $region69: #{resnet_layer_forward.3} parent=35 // pred_check
        %p802 = pneg %p201
      $region70: #{resnet_layer_forward.3} parent=35 // pred_check_branch
        %804 = sbr.rel (%p802) target = $region72
      $region71: #{resnet_layer_forward.3} parent=35 // pred_region
        _
      $region72: #{resnet_layer_forward.3} parent=35 // pred_fallthru
        _
      // Predicated region
      $region73: #{resnet_layer_forward.3} parent=35 // pred_check
        %p805 = pneg %p222
      $region74: #{resnet_layer_forward.3} parent=35 // pred_check_branch
        %807 = sbr.rel (%p805) target = $region76
      $region75: #{resnet_layer_forward.3} parent=35 // pred_region
        _
      $region76: #{resnet_layer_forward.3} parent=35 // pred_fallthru
        _
      // Predicated region
      $region77: #{resnet_layer_forward.3} parent=35 // pred_check
        %p808 = pneg %p243
      $region78: #{resnet_layer_forward.3} parent=35 // pred_check_branch
        %810 = sbr.rel (%p808) target = $region80
      $region79: #{resnet_layer_forward.3} parent=35 // pred_region
        _
      $region80: #{resnet_layer_forward.3} parent=35 // pred_fallthru
        _
    $region36: #{resnet_layer_forward.3} parent=5 // pred_fallthru
      _
    %p811 = scmp.le.s32.totalorder 2, %s16
    // Predicated region
    $region81: #{resnet_layer_forward.3} parent=5 // pred_check
      %p812 = pneg %p811
    $region82: #{resnet_layer_forward.3} parent=5 // pred_check_branch
      %814 = sbr.rel (%p812) target = $region84
    $region83: #{resnet_layer_forward.3} parent=5 // pred_region
      %s815 = ssub.s32 %s16, 2
      // Predicated region
      $region85: #{resnet_layer_forward.3} parent=83 // pred_check
        %p816 = pneg %p139
      $region86: #{resnet_layer_forward.3} parent=83 // pred_check_branch
        %818 = sbr.rel (%p816) target = $region88
      $region87: #{resnet_layer_forward.3} parent=83 // pred_region
        %s819 = smul.u32 8, %s22
        %p820 = scmp.lt.s32.totalorder %s819, 15
        %s821 = scalar_select %p820, %s819, 15
        %s822 = smul.addr %s821, 4
        %s823 = scalar_lea.vmem %s4, %s822
      $region88: #{resnet_layer_forward.3} parent=83 // pred_fallthru
        _
      // Predicated region
      $region89: #{resnet_layer_forward.3} parent=83 // pred_check
        %p824 = pneg %p165
      $region90: #{resnet_layer_forward.3} parent=83 // pred_check_branch
        %826 = sbr.rel (%p824) target = $region92
      $region91: #{resnet_layer_forward.3} parent=83 // pred_region
        %s827 = smul.u32 8, %s22
        %p828 = scmp.lt.s32.totalorder %s827, 15
        %s829 = scalar_select %p828, %s827, 15
        %s830 = smul.addr %s829, 4
        %s831 = scalar_lea.vmem %s5, %s830
      $region92: #{resnet_layer_forward.3} parent=83 // pred_fallthru
        _
    $region84: #{resnet_layer_forward.3} parent=5 // pred_fallthru
      _
  $region6: #{resnet_layer_forward.3} parent=0 // loop_footer
    %s20 = sadd.s32 1, %s16
  $region7: #{resnet_layer_forward.3} parent=0 // loop_footer_branch
    %15 = sbr.rel target = $region3
  $region8: #{resnet_layer_forward.3} parent=0 // loop_exit
    _

// kernel: resnet_layer_forward.5
$region0: #{resnet_layer_forward.5}
  #allocation0 [shape = 'u32[]', space=smem, size = 0x4, offset = 0x4, fixed_abs, tag = 'smem constant byte address 0x4 - core index']
  #allocation1 [shape = 'u32[144,128]{1,0:T(1,128)}', space=vmem, size = 0x12000, scoped, tag = 'internal scratch']
  %s0 = inlined_call_operand.vmem [shape: bf16[128,128], index: 0, kind: input, shape index: {}]
  %s1 = inlined_call_operand.vmem [shape: bf16[128,128], index: 1, kind: input, shape index: {}]
  %s2 = inlined_call_operand.vmem [shape: f32[1,128], index: 2, kind: input, shape index: {}]
  %s3 = inlined_call_operand.vmem [shape: f32[1,128], index: 3, kind: input, shape index: {}]
  %s4 = inlined_call_operand.vmem [shape: f32[1,128], index: 4, kind: input, shape index: {}]
  %s5 = inlined_call_operand.vmem [shape: f32[1,128], index: 5, kind: input, shape index: {}]
  %s6 = inlined_call_operand.vmem [shape: f32[128,128], index: 6, kind: output, shape index: {}]
  %s7 = sld [smem:[#allocation0]]
  $region57: #{resnet_layer_forward.5} parent=0
    _
  %s9 = ssub.s32 1, %s7
  %s10 = scalar_select 0, %s9, %s7
  loop: start=0, step=1, limit=4
  $region2: #{resnet_layer_forward.5} parent=0 // loop_pre_header
    _
  $region3: #{resnet_layer_forward.5} parent=0 // loop_header
    %s12 = sphi 0, %s16
    %p13 = scmp.ge.s32.totalorder %s12, 4
    %s22 = sphi 0, %s24
    %s25 = sphi 0, %s22
    %s26 = sphi 0, %s25
    %s42 = sphi 0, %s26
    %s48 = sphi 0, %s50
    %s51 = sphi 0, %s48
    %s52 = sphi 0, %s51
    %s68 = sphi 0, %s52
    %s72 = sphi 0, %s72
    %s74 = sphi 0, %s72
    %s75 = sphi 0, %s74
    %s89 = sphi 0, %s75
    %s93 = sphi 0, %s93
    %s95 = sphi 0, %s93
    %s96 = sphi 0, %s95
    %s110 = sphi 0, %s96
    %s114 = sphi 0, %s114
    %s116 = sphi 0, %s114
    %s117 = sphi 0, %s116
    %s131 = sphi 0, %s117
    %s135 = sphi 0, %s135
    %s137 = sphi 0, %s135
    %s138 = sphi 0, %s137
    %s152 = sphi 0, %s138
    %s158 = sphi 0, %s160
    %s161 = sphi 0, %s158
    %s162 = sphi 0, %s161
    %s178 = sphi 0, %s162
  $region4: #{resnet_layer_forward.5} parent=0 // loop_header_branch
    %15 = sbr.rel (%p13) target = $region8
  $region5: #{resnet_layer_forward.5} parent=0 // loop_body
    %s17 = ssub.s32 %s12, 1
    %s18 = ssub.s32 %s12, 2
    %s19 = sadd.s32 %s12, 1
    %s20 = ssub.s32 %s12, %s19
    %p21 = scmp.eq.s32.totalorder %s20, 0
    %s23 = sadd.s32 %s22, 1
    %s24 = scalar_select %p21, %s22, %s23
    %p27 = pneg %p21
    %p28 = scmp.eq.s32.totalorder %s12, 1
    %p29 = por %p27, %p28
    %p30 = scmp.ne.s32.totalorder %s22, %s25
    %p31 = scmp.eq.s32.totalorder %s12, 0
    %p32 = por %p30, %p31
    %p33 = scmp.ne.s32.totalorder %s22, %s25
    %p34 = scmp.eq.s32.totalorder %s17, 1
    %p35 = por %p33, %p34
    %p36 = scmp.ne.s32.totalorder %s25, %s26
    %p37 = scmp.eq.s32.totalorder %s17, 0
    %p38 = por %p36, %p37
    %p39 = scmp.ne.s32.totalorder %s25, %s26
    %p40 = scmp.eq.s32.totalorder %s18, 1
    %p41 = por %p39, %p40
    %p43 = scmp.ne.s32.totalorder %s26, %s42
    %p44 = scmp.eq.s32.totalorder %s18, 0
    %p45 = por %p43, %p44
    %s46 = ssub.s32 %s12, %s19
    %p47 = scmp.eq.s32.totalorder %s46, 0
    %s49 = sadd.s32 %s48, 1
    %s50 = scalar_select %p47, %s48, %s49
    %p53 = pneg %p47
    %p54 = scmp.eq.s32.totalorder %s12, 1
    %p55 = por %p53, %p54
    %p56 = scmp.ne.s32.totalorder %s48, %s51
    %p57 = scmp.eq.s32.totalorder %s12, 0
    %p58 = por %p56, %p57
    %p59 = scmp.ne.s32.totalorder %s48, %s51
    %p60 = scmp.eq.s32.totalorder %s17, 1
    %p61 = por %p59, %p60
    %p62 = scmp.ne.s32.totalorder %s51, %s52
    %p63 = scmp.eq.s32.totalorder %s17, 0
    %p64 = por %p62, %p63
    %p65 = scmp.ne.s32.totalorder %s51, %s52
    %p66 = scmp.eq.s32.totalorder %s18, 1
    %p67 = por %p65, %p66
    %p69 = scmp.ne.s32.totalorder %s52, %s68
    %p70 = scmp.eq.s32.totalorder %s18, 0
    %p71 = por %p69, %p70
    %s73 = sadd.s32 %s72, 1
    %p76 = scmp.eq.s32.totalorder %s12, 1
    %p77 = scmp.ne.s32.totalorder %s72, %s74
    %p78 = scmp.eq.s32.totalorder %s12, 0
    %p79 = por %p77, %p78
    %p80 = scmp.ne.s32.totalorder %s72, %s74
    %p81 = scmp.eq.s32.totalorder %s17, 1
    %p82 = por %p80, %p81
    %p83 = scmp.ne.s32.totalorder %s74, %s75
    %p84 = scmp.eq.s32.totalorder %s17, 0
    %p85 = por %p83, %p84
    %p86 = scmp.ne.s32.totalorder %s74, %s75
    %p87 = scmp.eq.s32.totalorder %s18, 1
    %p88 = por %p86, %p87
    %p90 = scmp.ne.s32.totalorder %s75, %s89
    %p91 = scmp.eq.s32.totalorder %s18, 0
    %p92 = por %p90, %p91
    %s94 = sadd.s32 %s93, 1
    %p97 = scmp.eq.s32.totalorder %s12, 1
    %p98 = scmp.ne.s32.totalorder %s93, %s95
    %p99 = scmp.eq.s32.totalorder %s12, 0
    %p100 = por %p98, %p99
    %p101 = scmp.ne.s32.totalorder %s93, %s95
    %p102 = scmp.eq.s32.totalorder %s17, 1
    %p103 = por %p101, %p102
    %p104 = scmp.ne.s32.totalorder %s95, %s96
    %p105 = scmp.eq.s32.totalorder %s17, 0
    %p106 = por %p104, %p105
    %p107 = scmp.ne.s32.totalorder %s95, %s96
    %p108 = scmp.eq.s32.totalorder %s18, 1
    %p109 = por %p107, %p108
    %p111 = scmp.ne.s32.totalorder %s96, %s110
    %p112 = scmp.eq.s32.totalorder %s18, 0
    %p113 = por %p111, %p112
    %s115 = sadd.s32 %s114, 1
    %p118 = scmp.eq.s32.totalorder %s12, 1
    %p119 = scmp.ne.s32.totalorder %s114, %s116
    %p120 = scmp.eq.s32.totalorder %s12, 0
    %p121 = por %p119, %p120
    %p122 = scmp.ne.s32.totalorder %s114, %s116
    %p123 = scmp.eq.s32.totalorder %s17, 1
    %p124 = por %p122, %p123
    %p125 = scmp.ne.s32.totalorder %s116, %s117
    %p126 = scmp.eq.s32.totalorder %s17, 0
    %p127 = por %p125, %p126
    %p128 = scmp.ne.s32.totalorder %s116, %s117
    %p129 = scmp.eq.s32.totalorder %s18, 1
    %p130 = por %p128, %p129
    %p132 = scmp.ne.s32.totalorder %s117, %s131
    %p133 = scmp.eq.s32.totalorder %s18, 0
    %p134 = por %p132, %p133
    %s136 = sadd.s32 %s135, 1
    %p139 = scmp.eq.s32.totalorder %s12, 1
    %p140 = scmp.ne.s32.totalorder %s135, %s137
    %p141 = scmp.eq.s32.totalorder %s12, 0
    %p142 = por %p140, %p141
    %p143 = scmp.ne.s32.totalorder %s135, %s137
    %p144 = scmp.eq.s32.totalorder %s17, 1
    %p145 = por %p143, %p144
    %p146 = scmp.ne.s32.totalorder %s137, %s138
    %p147 = scmp.eq.s32.totalorder %s17, 0
    %p148 = por %p146, %p147
    %p149 = scmp.ne.s32.totalorder %s137, %s138
    %p150 = scmp.eq.s32.totalorder %s18, 1
    %p151 = por %p149, %p150
    %p153 = scmp.ne.s32.totalorder %s138, %s152
    %p154 = scmp.eq.s32.totalorder %s18, 0
    %p155 = por %p153, %p154
    %s156 = ssub.s32 %s12, %s19
    %p157 = scmp.eq.s32.totalorder %s156, 0
    %s159 = sadd.s32 %s158, 1
    %s160 = scalar_select %p157, %s158, %s159
    %p163 = pneg %p157
    %p164 = scmp.eq.s32.totalorder %s12, 1
    %p165 = por %p163, %p164
    %p166 = scmp.ne.s32.totalorder %s158, %s161
    %p167 = scmp.eq.s32.totalorder %s12, 0
    %p168 = por %p166, %p167
    %p169 = scmp.ne.s32.totalorder %s158, %s161
    %p170 = scmp.eq.s32.totalorder %s17, 1
    %p171 = por %p169, %p170
    %p172 = scmp.ne.s32.totalorder %s161, %s162
    %p173 = scmp.eq.s32.totalorder %s17, 0
    %p174 = por %p172, %p173
    %p175 = scmp.ne.s32.totalorder %s161, %s162
    %p176 = scmp.eq.s32.totalorder %s18, 1
    %p177 = por %p175, %p176
    %p179 = scmp.ne.s32.totalorder %s162, %s178
    %p180 = scmp.eq.s32.totalorder %s18, 0
    %p181 = por %p179, %p180
    %p182 = scmp.le.s32.totalorder 1, %s12
    %p183 = scmp.lt.s32.totalorder %s12, 3
    %p184 = pnand %p182, %p183
    %p185 = pneg %p184
    // Predicated region
    $region9: #{resnet_layer_forward.5} parent=5 // pred_check
      _
    $region10: #{resnet_layer_forward.5} parent=5 // pred_check_branch
      %187 = sbr.rel (%p184) target = $region12
    $region11: #{resnet_layer_forward.5} parent=5 // pred_region
      %s188 = ssub.s32 %s12, 1
      // Predicated region
      $region13: #{resnet_layer_forward.5} parent=11 // pred_check
        %p189 = pneg %p85
      $region14: #{resnet_layer_forward.5} parent=11 // pred_check_branch
        %191 = sbr.rel (%p189) target = $region16
      $region15: #{resnet_layer_forward.5} parent=11 // pred_region
        _
      $region16: #{resnet_layer_forward.5} parent=11 // pred_fallthru
        _
      // Predicated region
      $region17: #{resnet_layer_forward.5} parent=11 // pred_check
        %p192 = pneg %p106
      $region18: #{resnet_layer_forward.5} parent=11 // pred_check_branch
        %194 = sbr.rel (%p192) target = $region20
      $region19: #{resnet_layer_forward.5} parent=11 // pred_region
        _
      $region20: #{resnet_layer_forward.5} parent=11 // pred_fallthru
        _
      // Predicated region
      $region21: #{resnet_layer_forward.5} parent=11 // pred_check
        %p195 = pneg %p127
      $region22: #{resnet_layer_forward.5} parent=11 // pred_check_branch
        %197 = sbr.rel (%p195) target = $region24
      $region23: #{resnet_layer_forward.5} parent=11 // pred_region
        _
      $region24: #{resnet_layer_forward.5} parent=11 // pred_fallthru
        _
      // Predicated region
      $region25: #{resnet_layer_forward.5} parent=11 // pred_check
        %p198 = pneg %p148
      $region26: #{resnet_layer_forward.5} parent=11 // pred_check_branch
        %200 = sbr.rel (%p198) target = $region28
      $region27: #{resnet_layer_forward.5} parent=11 // pred_region
        _
      $region28: #{resnet_layer_forward.5} parent=11 // pred_fallthru
        _
    $region12: #{resnet_layer_forward.5} parent=5 // pred_fallthru
      _
    %p201 = scmp.lt.s32.totalorder %s12, 2
    // Predicated region
    $region29: #{resnet_layer_forward.5} parent=5 // pred_check
      %p202 = pneg %p201
    $region30: #{resnet_layer_forward.5} parent=5 // pred_check_branch
      %204 = sbr.rel (%p202) target = $region32
    $region31: #{resnet_layer_forward.5} parent=5 // pred_region
      // Predicated region
      $region33: #{resnet_layer_forward.5} parent=31 // pred_check
        %p205 = pneg %p32
      $region34: #{resnet_layer_forward.5} parent=31 // pred_check_branch
        %207 = sbr.rel (%p205) target = $region36
      $region35: #{resnet_layer_forward.5} parent=31 // pred_region
        %s208 = smul.u32 8, %s12
        %p209 = scmp.lt.s32.totalorder %s208, 15
        %s210 = scalar_select %p209, %s208, 15
        %s211 = smul.addr %s210, 4
        %s212 = scalar_lea.vmem %s0, %s211
        %s213 = smul.u32 8, %s12
      $region36: #{resnet_layer_forward.5} parent=31 // pred_fallthru
        _
      // Predicated region
      $region37: #{resnet_layer_forward.5} parent=31 // pred_check
        %p214 = pneg %p58
      $region38: #{resnet_layer_forward.5} parent=31 // pred_check_branch
        %216 = sbr.rel (%p214) target = $region40
      $region39: #{resnet_layer_forward.5} parent=31 // pred_region
        %s217 = smul.u32 8, %s12
        %p218 = scmp.lt.s32.totalorder %s217, 15
        %s219 = scalar_select %p218, %s217, 15
        %s220 = smul.addr %s219, 4
        %s221 = scalar_lea.vmem %s1, %s220
        %s222 = smul.u32 8, %s12
      $region40: #{resnet_layer_forward.5} parent=31 // pred_fallthru
        _
    $region32: #{resnet_layer_forward.5} parent=5 // pred_fallthru
      _
    %p223 = scmp.le.s32.totalorder 1, %s12
    %p224 = scmp.lt.s32.totalorder %s12, 3
    %p225 = pnand %p223, %p224
    %p226 = pneg %p225
    // Predicated region
    $region41: #{resnet_layer_forward.5} parent=5 // pred_check
      _
    $region42: #{resnet_layer_forward.5} parent=5 // pred_check_branch
      %228 = sbr.rel (%p225) target = $region44
    $region43: #{resnet_layer_forward.5} parent=5 // pred_region
      %s229 = ssub.s32 %s12, 1
      %s230 = smul.u32 8, %s17
      %p231 = scmp.lt.s32.totalorder %s230, 15
      %s232 = scalar_select %p231, %s230, 15
      %s233 = smul.addr %s232, 4
      %s234 = scalar_lea.vmem %s0, %s233
      %p235 = pneg %p38
      %p236 = pneg %p35
      %s237 = smul.u32 8, %s17
      %p238 = scmp.lt.s32.totalorder %s237, 15
      %s239 = scalar_select %p238, %s237, 15
      %s240 = smul.addr %s239, 4
      %s241 = scalar_lea.vmem %s1, %s240
      %p242 = pneg %p64
      %p243 = pneg %p61
      %p244 = pneg %p85
      %p245 = pneg %p82
      %p246 = pneg %p106
      %p247 = pneg %p103
      %p248 = pneg %p127
      %p249 = pneg %p124
      %p250 = pneg %p148
      %p251 = pneg %p145
      %p252 = pneg %p174
      %p253 = pneg %p171
      %s254 = smul.u32 8, %s17
      %p255 = scmp.lt.s32.totalorder %s254, 15
      %s256 = scalar_select %p255, %s254, 15
      %s257 = smul.addr %s256, 8
      %s258 = scalar_lea.vmem %s6, %s257
      %s259 = smul.u32 8, %s17
      %p260 = scmp.lt.s32.totalorder %s259, 15
      %s261 = scalar_select %p260, %s259, 15
      %s262 = smul.addr %s261, 4
      %s263 = scalar_lea.vmem %s0, %s262
      %s264 = smul.u32 8, %s17
      %s265 = smul.u32 8, %s17
      %p266 = scmp.lt.s32.totalorder %s265, 15
      %s267 = scalar_select %p266, %s265, 15
      %s268 = smul.addr %s267, 4
      %s269 = scalar_lea.vmem %s1, %s268
      %s270 = smul.u32 8, %s17
      %s271 = smul.u32 8, %s17
      %p272 = scmp.lt.s32.totalorder %s271, 15
      %s273 = scalar_select %p272, %s271, 15
      %s274 = smul.addr %s273, 8
      %s275 = scalar_lea.vmem %s6, %s274
      %s276 = smul.u32 8, %s17
      %v277 = vld [vmem:[%s263] sm:$0xf]
      %v278 = vld [vmem:[%s263 + $0x4] sm:$0xf]
      %v279 = vld [vmem:[%s263 + $0x8] sm:$0xf]
      %v280 = vld [vmem:[%s263 + $0xc] sm:$0xf]
      %v281 = vld [vmem:[%s263 + $0x10] sm:$0xf]
      %v282 = vld [vmem:[%s263 + $0x14] sm:$0xf]
      %v283 = vld [vmem:[%s263 + $0x18] sm:$0xf]
      %v284 = vld [vmem:[%s263 + $0x1c] sm:$0xf]
      %v285 = vunpack.c.l.bf16 %v277
      %v286 = vunpack.c.l.bf16 %v278
      %v287 = vunpack.c.l.bf16 %v279
      %v288 = vunpack.c.l.bf16 %v280
      %v289 = vunpack.c.l.bf16 %v281
      %v290 = vunpack.c.l.bf16 %v282
      %v291 = vunpack.c.l.bf16 %v283
      %v292 = vunpack.c.l.bf16 %v284
      %v293 = vld [vmem:[%s2] sm:$0x1]
      %v295 = vlaneseq
      %v296 = vshrl.u32 %v295, 7
      %v297 = vsub.s32 0, %v296
      %v298 = vrot.slane %v293, %v297
      %v300 = vmul.f32 %v285, %v298
      %v301 = vmul.f32 %v286, %v298
      %v302 = vmul.f32 %v287, %v298
      %v303 = vmul.f32 %v288, %v298
      %v304 = vmul.f32 %v289, %v298
      %v305 = vmul.f32 %v290, %v298
      %v306 = vmul.f32 %v291, %v298
      %v307 = vmul.f32 %v292, %v298
      %v308 = vld [vmem:[%s3] sm:$0x1]
      %v310 = vlaneseq
      %v311 = vshrl.u32 %v310, 7
      %v312 = vsub.s32 0, %v311
      %v313 = vrot.slane %v308, %v312
      %v315 = vadd.f32 %v300, %v313
      %v316 = vadd.f32 %v301, %v313
      %v317 = vadd.f32 %v302, %v313
      %v318 = vadd.f32 %v303, %v313
      %v319 = vadd.f32 %v304, %v313
      %v320 = vadd.f32 %v305, %v313
      %v321 = vadd.f32 %v306, %v313
      %v322 = vadd.f32 %v307, %v313
      %v323 = vld [vmem:[%s269] sm:$0xf]
      %v324 = vld [vmem:[%s269 + $0x4] sm:$0xf]
      %v325 = vld [vmem:[%s269 + $0x8] sm:$0xf]
      %v326 = vld [vmem:[%s269 + $0xc] sm:$0xf]
      %v327 = vld [vmem:[%s269 + $0x10] sm:$0xf]
      %v328 = vld [vmem:[%s269 + $0x14] sm:$0xf]
      %v329 = vld [vmem:[%s269 + $0x18] sm:$0xf]
      %v330 = vld [vmem:[%s269 + $0x1c] sm:$0xf]
      %v331 = vunpack.c.l.bf16 %v323
      %v332 = vunpack.c.l.bf16 %v324
      %v333 = vunpack.c.l.bf16 %v325
      %v334 = vunpack.c.l.bf16 %v326
      %v335 = vunpack.c.l.bf16 %v327
      %v336 = vunpack.c.l.bf16 %v328
      %v337 = vunpack.c.l.bf16 %v329
      %v338 = vunpack.c.l.bf16 %v330
      %v339 = vld [vmem:[%s4] sm:$0x1]
      %v341 = vlaneseq
      %v342 = vshrl.u32 %v341, 7
      %v343 = vsub.s32 0, %v342
      %v344 = vrot.slane %v339, %v343
      %v346 = vmul.f32 %v331, %v344
      %v347 = vmul.f32 %v332, %v344
      %v348 = vmul.f32 %v333, %v344
      %v349 = vmul.f32 %v334, %v344
      %v350 = vmul.f32 %v335, %v344
      %v351 = vmul.f32 %v336, %v344
      %v352 = vmul.f32 %v337, %v344
      %v353 = vmul.f32 %v338, %v344
      %v354 = vadd.f32 %v315, %v346
      %v355 = vadd.f32 %v316, %v347
      %v356 = vadd.f32 %v317, %v348
      %v357 = vadd.f32 %v318, %v349
      %v358 = vadd.f32 %v319, %v350
      %v359 = vadd.f32 %v320, %v351
      %v360 = vadd.f32 %v321, %v352
      %v361 = vadd.f32 %v322, %v353
      %v362 = vld [vmem:[%s5] sm:$0x1]
      %v364 = vlaneseq
      %v365 = vshrl.u32 %v364, 7
      %v366 = vsub.s32 0, %v365
      %v367 = vrot.slane %v362, %v366
      %v369 = vadd.f32 %v354, %v367
      %v370 = vadd.f32 %v355, %v367
      %v371 = vadd.f32 %v356, %v367
      %v372 = vadd.f32 %v357, %v367
      %v373 = vadd.f32 %v358, %v367
      %v374 = vadd.f32 %v359, %v367
      %v375 = vadd.f32 %v360, %v367
      %v376 = vadd.f32 %v361, %v367
      %v377 = vmax.f32 %v369, 0.0
      %v378 = vmax.f32 %v370, 0.0
      %v379 = vmax.f32 %v371, 0.0
      %v380 = vmax.f32 %v372, 0.0
      %v381 = vmax.f32 %v373, 0.0
      %v382 = vmax.f32 %v374, 0.0
      %v383 = vmax.f32 %v375, 0.0
      %v384 = vmax.f32 %v376, 0.0
      %385 = vst [vmem:[%s275] sm:$0xff] %v377
      %386 = vst [vmem:[%s275 + $0x8] sm:$0xff] %v378
      %387 = vst [vmem:[%s275 + $0x10] sm:$0xff] %v379
      %388 = vst [vmem:[%s275 + $0x18] sm:$0xff] %v380
      %389 = vst [vmem:[%s275 + $0x20] sm:$0xff] %v381
      %390 = vst [vmem:[%s275 + $0x28] sm:$0xff] %v382
      %391 = vst [vmem:[%s275 + $0x30] sm:$0xff] %v383
      %392 = vst [vmem:[%s275 + $0x38] sm:$0xff] %v384
      %s393 = smul.u32 8, %s17
      %p394 = scmp.lt.s32.totalorder %s393, 15
      %s395 = scalar_select %p394, %s393, 15
      %s396 = smul.addr %s395, 8
      %s397 = scalar_lea.vmem %s6, %s396
      // Predicated region
      $region45: #{resnet_layer_forward.5} parent=43 // pred_check
        %p398 = pneg %p171
      $region46: #{resnet_layer_forward.5} parent=43 // pred_check_branch
        %400 = sbr.rel (%p398) target = $region48
      $region47: #{resnet_layer_forward.5} parent=43 // pred_region
        %s401 = smul.u32 8, %s17
      $region48: #{resnet_layer_forward.5} parent=43 // pred_fallthru
        _
    $region44: #{resnet_layer_forward.5} parent=5 // pred_fallthru
      _
    %p402 = scmp.le.s32.totalorder 2, %s12
    // Predicated region
    $region49: #{resnet_layer_forward.5} parent=5 // pred_check
      %p403 = pneg %p402
    $region50: #{resnet_layer_forward.5} parent=5 // pred_check_branch
      %405 = sbr.rel (%p403) target = $region52
    $region51: #{resnet_layer_forward.5} parent=5 // pred_region
      %s406 = ssub.s32 %s12, 2
      // Predicated region
      $region53: #{resnet_layer_forward.5} parent=51 // pred_check
        %p407 = pneg %p177
      $region54: #{resnet_layer_forward.5} parent=51 // pred_check_branch
        %409 = sbr.rel (%p407) target = $region56
      $region55: #{resnet_layer_forward.5} parent=51 // pred_region
        %s410 = smul.u32 8, %s18
        %p411 = scmp.lt.s32.totalorder %s410, 15
        %s412 = scalar_select %p411, %s410, 15
        %s413 = smul.addr %s412, 8
        %s414 = scalar_lea.vmem %s6, %s413
      $region56: #{resnet_layer_forward.5} parent=51 // pred_fallthru
        _
    $region52: #{resnet_layer_forward.5} parent=5 // pred_fallthru
      _
  $region6: #{resnet_layer_forward.5} parent=0 // loop_footer
    %s16 = sadd.s32 1, %s12
  $region7: #{resnet_layer_forward.5} parent=0 // loop_footer_branch
    %11 = sbr.rel target = $region3
  $region8: #{resnet_layer_forward.5} parent=0 // loop_exit
    _

// kernel: resnet_layer_forward.4
$region0: #{resnet_layer_forward.4}
  #allocation0 [shape = 'u32[]', space=smem, size = 0x4, offset = 0x4, fixed_abs, tag = 'smem constant byte address 0x4 - core index']
  #allocation1 [shape = 'u32[144,128]{1,0:T(1,128)}', space=vmem, size = 0x12000, scoped, tag = 'internal scratch']
  #allocation2 [shape = 'bf16[110,128]{1,0:T(8,128)(2,1)}', space=vmem, size = 0x7000, scoped, tag = 'scratch operand']
  #allocation3 [shape = 'f32[80,128]{1,0:T(8,128)}', space=vmem, size = 0xa000, scoped, tag = 'scratch operand']
  %s0 = inlined_call_operand.vmem [shape: bf16[2,110,128], index: 0, kind: input, shape index: {}]
  %s1 = inlined_call_operand.vmem [shape: f32[1,128], index: 1, kind: input, shape index: {}]
  %s2 = inlined_call_operand.vmem [shape: f32[1,128], index: 2, kind: input, shape index: {}]
  %s3 = inlined_call_operand.vmem [shape: bf16[9,128,128], index: 3, kind: input, shape index: {}]
  %s4 = inlined_call_operand.vmem [shape: bf16[2,80,128], index: 4, kind: output, shape index: {0}]
  %s5 = inlined_call_operand.vmem [shape: f32[1,128], index: 5, kind: output, shape index: {1}]
  %s6 = inlined_call_operand.vmem [shape: f32[1,128], index: 6, kind: output, shape index: {2}]
  %7 = xla_tuple %s4, %s5, %s6
  %s8 = sld [smem:[#allocation0]]
  $region69: #{resnet_layer_forward.4} parent=0
    _
  %s10 = ssub.s32 1, %s8
  %s11 = scalar_select 0, %s10, %s8
  loop: start=0, step=1, limit=4
  $region2: #{resnet_layer_forward.4} parent=0 // loop_pre_header
    _
  $region3: #{resnet_layer_forward.4} parent=0 // loop_header
    %s13 = sphi 0, %s17
    %p14 = scmp.ge.s32.totalorder %s13, 4
    %s23 = sphi 0, %s25
    %s26 = sphi 0, %s23
    %s27 = sphi 0, %s26
    %s43 = sphi 0, %s27
    %s47 = sphi 0, %s47
    %s49 = sphi 0, %s47
    %s50 = sphi 0, %s49
    %s64 = sphi 0, %s50
    %s68 = sphi 0, %s68
    %s70 = sphi 0, %s68
    %s71 = sphi 0, %s70
    %s85 = sphi 0, %s71
    %s89 = sphi 0, %s89
    %s91 = sphi 0, %s89
    %s92 = sphi 0, %s91
    %s106 = sphi 0, %s92
    %s112 = sphi 0, %s114
    %s115 = sphi 0, %s112
    %s116 = sphi 0, %s115
    %s132 = sphi 0, %s116
    %s136 = sphi 0, %s136
    %s138 = sphi 0, %s136
    %s139 = sphi 0, %s138
    %s153 = sphi 0, %s139
    %s157 = sphi 0, %s157
    %s159 = sphi 0, %s157
    %s160 = sphi 0, %s159
    %s174 = sphi 0, %s160
  $region4: #{resnet_layer_forward.4} parent=0 // loop_header_branch
    %16 = sbr.rel (%p14) target = $region8
  $region5: #{resnet_layer_forward.4} parent=0 // loop_body
    %s18 = ssub.s32 %s13, 1
    %s19 = ssub.s32 %s13, 2
    %s20 = sadd.s32 %s13, 1
    %s21 = ssub.s32 %s13, %s20
    %p22 = scmp.eq.s32.totalorder %s21, 0
    %s24 = sadd.s32 %s23, 1
    %s25 = scalar_select %p22, %s23, %s24
    %p28 = pneg %p22
    %p29 = scmp.eq.s32.totalorder %s13, 1
    %p30 = por %p28, %p29
    %p31 = scmp.ne.s32.totalorder %s23, %s26
    %p32 = scmp.eq.s32.totalorder %s13, 0
    %p33 = por %p31, %p32
    %p34 = scmp.ne.s32.totalorder %s23, %s26
    %p35 = scmp.eq.s32.totalorder %s18, 1
    %p36 = por %p34, %p35
    %p37 = scmp.ne.s32.totalorder %s26, %s27
    %p38 = scmp.eq.s32.totalorder %s18, 0
    %p39 = por %p37, %p38
    %p40 = scmp.ne.s32.totalorder %s26, %s27
    %p41 = scmp.eq.s32.totalorder %s19, 1
    %p42 = por %p40, %p41
    %p44 = scmp.ne.s32.totalorder %s27, %s43
    %p45 = scmp.eq.s32.totalorder %s19, 0
    %p46 = por %p44, %p45
    %s48 = sadd.s32 %s47, 1
    %p51 = scmp.eq.s32.totalorder %s13, 1
    %p52 = scmp.ne.s32.totalorder %s47, %s49
    %p53 = scmp.eq.s32.totalorder %s13, 0
    %p54 = por %p52, %p53
    %p55 = scmp.ne.s32.totalorder %s47, %s49
    %p56 = scmp.eq.s32.totalorder %s18, 1
    %p57 = por %p55, %p56
    %p58 = scmp.ne.s32.totalorder %s49, %s50
    %p59 = scmp.eq.s32.totalorder %s18, 0
    %p60 = por %p58, %p59
    %p61 = scmp.ne.s32.totalorder %s49, %s50
    %p62 = scmp.eq.s32.totalorder %s19, 1
    %p63 = por %p61, %p62
    %p65 = scmp.ne.s32.totalorder %s50, %s64
    %p66 = scmp.eq.s32.totalorder %s19, 0
    %p67 = por %p65, %p66
    %s69 = sadd.s32 %s68, 1
    %p72 = scmp.eq.s32.totalorder %s13, 1
    %p73 = scmp.ne.s32.totalorder %s68, %s70
    %p74 = scmp.eq.s32.totalorder %s13, 0
    %p75 = por %p73, %p74
    %p76 = scmp.ne.s32.totalorder %s68, %s70
    %p77 = scmp.eq.s32.totalorder %s18, 1
    %p78 = por %p76, %p77
    %p79 = scmp.ne.s32.totalorder %s70, %s71
    %p80 = scmp.eq.s32.totalorder %s18, 0
    %p81 = por %p79, %p80
    %p82 = scmp.ne.s32.totalorder %s70, %s71
    %p83 = scmp.eq.s32.totalorder %s19, 1
    %p84 = por %p82, %p83
    %p86 = scmp.ne.s32.totalorder %s71, %s85
    %p87 = scmp.eq.s32.totalorder %s19, 0
    %p88 = por %p86, %p87
    %s90 = sadd.s32 %s89, 1
    %p93 = scmp.eq.s32.totalorder %s13, 1
    %p94 = scmp.ne.s32.totalorder %s89, %s91
    %p95 = scmp.eq.s32.totalorder %s13, 0
    %p96 = por %p94, %p95
    %p97 = scmp.ne.s32.totalorder %s89, %s91
    %p98 = scmp.eq.s32.totalorder %s18, 1
    %p99 = por %p97, %p98
    %p100 = scmp.ne.s32.totalorder %s91, %s92
    %p101 = scmp.eq.s32.totalorder %s18, 0
    %p102 = por %p100, %p101
    %p103 = scmp.ne.s32.totalorder %s91, %s92
    %p104 = scmp.eq.s32.totalorder %s19, 1
    %p105 = por %p103, %p104
    %p107 = scmp.ne.s32.totalorder %s92, %s106
    %p108 = scmp.eq.s32.totalorder %s19, 0
    %p109 = por %p107, %p108
    %s110 = ssub.s32 %s13, %s20
    %p111 = scmp.eq.s32.totalorder %s110, 0
    %s113 = sadd.s32 %s112, 1
    %s114 = scalar_select %p111, %s112, %s113
    %p117 = pneg %p111
    %p118 = scmp.eq.s32.totalorder %s13, 1
    %p119 = por %p117, %p118
    %p120 = scmp.ne.s32.totalorder %s112, %s115
    %p121 = scmp.eq.s32.totalorder %s13, 0
    %p122 = por %p120, %p121
    %p123 = scmp.ne.s32.totalorder %s112, %s115
    %p124 = scmp.eq.s32.totalorder %s18, 1
    %p125 = por %p123, %p124
    %p126 = scmp.ne.s32.totalorder %s115, %s116
    %p127 = scmp.eq.s32.totalorder %s18, 0
    %p128 = por %p126, %p127
    %p129 = scmp.ne.s32.totalorder %s115, %s116
    %p130 = scmp.eq.s32.totalorder %s19, 1
    %p131 = por %p129, %p130
    %p133 = scmp.ne.s32.totalorder %s116, %s132
    %p134 = scmp.eq.s32.totalorder %s19, 0
    %p135 = por %p133, %p134
    %s137 = sadd.s32 %s136, 1
    %p140 = scmp.eq.s32.totalorder %s13, 1
    %p141 = scmp.ne.s32.totalorder %s136, %s138
    %p142 = scmp.eq.s32.totalorder %s13, 0
    %p143 = por %p141, %p142
    %p144 = scmp.ne.s32.totalorder %s136, %s138
    %p145 = scmp.eq.s32.totalorder %s18, 1
    %p146 = por %p144, %p145
    %p147 = scmp.ne.s32.totalorder %s138, %s139
    %p148 = scmp.eq.s32.totalorder %s18, 0
    %p149 = por %p147, %p148
    %p150 = scmp.ne.s32.totalorder %s138, %s139
    %p151 = scmp.eq.s32.totalorder %s19, 1
    %p152 = por %p150, %p151
    %p154 = scmp.ne.s32.totalorder %s139, %s153
    %p155 = scmp.eq.s32.totalorder %s19, 0
    %p156 = por %p154, %p155
    %s158 = sadd.s32 %s157, 1
    %p161 = scmp.eq.s32.totalorder %s13, 1
    %p162 = scmp.ne.s32.totalorder %s157, %s159
    %p163 = scmp.eq.s32.totalorder %s13, 0
    %p164 = por %p162, %p163
    %p165 = scmp.ne.s32.totalorder %s157, %s159
    %p166 = scmp.eq.s32.totalorder %s18, 1
    %p167 = por %p165, %p166
    %p168 = scmp.ne.s32.totalorder %s159, %s160
    %p169 = scmp.eq.s32.totalorder %s18, 0
    %p170 = por %p168, %p169
    %p171 = scmp.ne.s32.totalorder %s159, %s160
    %p172 = scmp.eq.s32.totalorder %s19, 1
    %p173 = por %p171, %p172
    %p175 = scmp.ne.s32.totalorder %s160, %s174
    %p176 = scmp.eq.s32.totalorder %s19, 0
    %p177 = por %p175, %p176
    %p178 = scmp.le.s32.totalorder 1, %s13
    %p179 = scmp.lt.s32.totalorder %s13, 3
    %p180 = pnand %p178, %p179
    %p181 = pneg %p180
    // Predicated region
    $region9: #{resnet_layer_forward.4} parent=5 // pred_check
      _
    $region10: #{resnet_layer_forward.4} parent=5 // pred_check_branch
      %183 = sbr.rel (%p180) target = $region12
    $region11: #{resnet_layer_forward.4} parent=5 // pred_region
      %s184 = ssub.s32 %s13, 1
      // Predicated region
      $region13: #{resnet_layer_forward.4} parent=11 // pred_check
        %p185 = pneg %p60
      $region14: #{resnet_layer_forward.4} parent=11 // pred_check_branch
        %187 = sbr.rel (%p185) target = $region16
      $region15: #{resnet_layer_forward.4} parent=11 // pred_region
        _
      $region16: #{resnet_layer_forward.4} parent=11 // pred_fallthru
        _
      // Predicated region
      $region17: #{resnet_layer_forward.4} parent=11 // pred_check
        %p188 = pneg %p81
      $region18: #{resnet_layer_forward.4} parent=11 // pred_check_branch
        %190 = sbr.rel (%p188) target = $region20
      $region19: #{resnet_layer_forward.4} parent=11 // pred_region
        _
      $region20: #{resnet_layer_forward.4} parent=11 // pred_fallthru
        _
      // Predicated region
      $region21: #{resnet_layer_forward.4} parent=11 // pred_check
        %p191 = pneg %p102
      $region22: #{resnet_layer_forward.4} parent=11 // pred_check_branch
        %193 = sbr.rel (%p191) target = $region24
      $region23: #{resnet_layer_forward.4} parent=11 // pred_region
        _
      $region24: #{resnet_layer_forward.4} parent=11 // pred_fallthru
        _
    $region12: #{resnet_layer_forward.4} parent=5 // pred_fallthru
      _
    %p194 = scmp.lt.s32.totalorder %s13, 2
    // Predicated region
    $region25: #{resnet_layer_forward.4} parent=5 // pred_check
      %p195 = pneg %p194
    $region26: #{resnet_layer_forward.4} parent=5 // pred_check_branch
      %197 = sbr.rel (%p195) target = $region28
    $region27: #{resnet_layer_forward.4} parent=5 // pred_region
      // Predicated region
      $region29: #{resnet_layer_forward.4} parent=27 // pred_check
        %p198 = pneg %p33
      $region30: #{resnet_layer_forward.4} parent=27 // pred_check_branch
        %200 = sbr.rel (%p198) target = $region32
      $region31: #{resnet_layer_forward.4} parent=27 // pred_region
        %p201 = scmp.lt.s32.totalorder %s13, 1
        %s202 = scalar_select %p201, %s13, 1
        %s203 = smul.addr %s202, 14
        %s204 = smul.addr %s203, 4
        %s205 = scalar_lea.vmem %s0, %s204
      $region32: #{resnet_layer_forward.4} parent=27 // pred_fallthru
        _
    $region28: #{resnet_layer_forward.4} parent=5 // pred_fallthru
      _
    %p206 = scmp.le.s32.totalorder 1, %s13
    %p207 = scmp.lt.s32.totalorder %s13, 3
    %p208 = pnand %p206, %p207
    %p209 = pneg %p208
    // Predicated region
    $region33: #{resnet_layer_forward.4} parent=5 // pred_check
      _
    $region34: #{resnet_layer_forward.4} parent=5 // pred_check_branch
      %211 = sbr.rel (%p208) target = $region36
    $region35: #{resnet_layer_forward.4} parent=5 // pred_region
      %s212 = ssub.s32 %s13, 1
      %p213 = scmp.lt.s32.totalorder %s18, 1
      %s214 = scalar_select %p213, %s18, 1
      %s215 = smul.addr %s214, 14
      %s216 = smul.addr %s215, 4
      %s217 = scalar_lea.vmem %s0, %s216
      %p218 = pneg %p39
      %p219 = pneg %p36
      %p220 = pneg %p60
      %p221 = pneg %p57
      %p222 = pneg %p81
      %p223 = pneg %p78
      %p224 = pneg %p102
      %p225 = pneg %p99
      %p226 = pneg %p128
      %p227 = pneg %p125
      %p228 = scmp.lt.s32.totalorder %s18, 1
      %s229 = scalar_select %p228, %s18, 1
      %s230 = smul.addr %s229, 10
      %s231 = smul.addr %s230, 4
      %s232 = scalar_lea.vmem %s4, %s231
      %p233 = pneg %p149
      %p234 = pneg %p146
      %p235 = pneg %p170
      %p236 = pneg %p167
      %p237 = scmp.lt.s32.totalorder %s18, 1
      %s238 = scalar_select %p237, %s18, 1
      %s239 = smul.addr %s238, 14
      %s240 = smul.addr %s239, 4
      %s241 = scalar_lea.vmem %s0, %s240
      %p242 = scmp.lt.s32.totalorder %s18, 1
      %s243 = scalar_select %p242, %s18, 1
      %s244 = smul.addr %s243, 10
      %s245 = smul.addr %s244, 4
      %s246 = scalar_lea.vmem %s4, %s245
      %p248 = scmp.eq.s32.totalorder %s18, 0
      // Predicated region
      $region37: #{resnet_layer_forward.4} parent=35 // pred_check
        %p249 = pneg %p248
      $region38: #{resnet_layer_forward.4} parent=35 // pred_check_branch
        %251 = sbr.rel (%p249) target = $region40
      $region39: #{resnet_layer_forward.4} parent=35 // pred_region
        %252 = vst [vmem:[%s5] sm:$0x1] 0.0
        %253 = vst [vmem:[%s6] sm:$0x1] 0.0
      $region40: #{resnet_layer_forward.4} parent=35 // pred_fallthru
        _
      %v254 = vlaneseq
      %v255 = vshrl.u32 %v254, 7
      %v256 = vadd.s32 %v255, 8
      %v257 = vadd.s32 %v255, 16
      %v258 = vadd.s32 %v255, 24
      %v259 = vadd.s32 %v255, 32
      %v260 = vadd.s32 %v255, 40
      %v261 = vadd.s32 %v255, 48
      %v262 = vadd.s32 %v255, 56
      %v263 = vadd.s32 %v255, 64
      %v264 = vadd.s32 %v255, 72
      %v265 = vadd.s32 %v255, 80
      %v266 = vadd.s32 %v255, 88
      %v267 = vadd.s32 %v255, 96
      %v268 = vadd.s32 %v255, 104
      %vm269 = vcmp.lt.s32.totalorder %v255, 0
      %v270 = vsub.s32 0, %v255
      %v271 = vsel %vm269, %v270, %v255
      %v272 = vmul.u32.u64.compose %v271, 3435973837
      %v273 = vextract.low.u32 %v272
      %v274 = vextract.high.u32 %v272
      %v275 = vshrl.u32 %v274, 3
      %v276 = vmul.u32 %v275, 10
      %v277 = vsub.s32 %v271, %v276
      %v278 = vsub.s32 0, %v277
      %v279 = vsel %vm269, %v278, %v277
      %vm280 = vcmp.lt.s32.totalorder %v256, 0
      %v281 = vsub.s32 0, %v256
      %v282 = vsel %vm280, %v281, %v256
      %v283 = vmul.u32.u64.compose %v282, 3435973837
      %v284 = vextract.low.u32 %v283
      %v285 = vextract.high.u32 %v283
      %v286 = vshrl.u32 %v285, 3
      %v287 = vmul.u32 %v286, 10
      %v288 = vsub.s32 %v282, %v287
      %v289 = vsub.s32 0, %v288
      %v290 = vsel %vm280, %v289, %v288
      %vm291 = vcmp.lt.s32.totalorder %v257, 0
      %v292 = vsub.s32 0, %v257
      %v293 = vsel %vm291, %v292, %v257
      %v294 = vmul.u32.u64.compose %v293, 3435973837
      %v295 = vextract.low.u32 %v294
      %v296 = vextract.high.u32 %v294
      %v297 = vshrl.u32 %v296, 3
      %v298 = vmul.u32 %v297, 10
      %v299 = vsub.s32 %v293, %v298
      %v300 = vsub.s32 0, %v299
      %v301 = vsel %vm291, %v300, %v299
      %vm302 = vcmp.lt.s32.totalorder %v258, 0
      %v303 = vsub.s32 0, %v258
      %v304 = vsel %vm302, %v303, %v258
      %v305 = vmul.u32.u64.compose %v304, 3435973837
      %v306 = vextract.low.u32 %v305
      %v307 = vextract.high.u32 %v305
      %v308 = vshrl.u32 %v307, 3
      %v309 = vmul.u32 %v308, 10
      %v310 = vsub.s32 %v304, %v309
      %v311 = vsub.s32 0, %v310
      %v312 = vsel %vm302, %v311, %v310
      %vm313 = vcmp.lt.s32.totalorder %v259, 0
      %v314 = vsub.s32 0, %v259
      %v315 = vsel %vm313, %v314, %v259
      %v316 = vmul.u32.u64.compose %v315, 3435973837
      %v317 = vextract.low.u32 %v316
      %v318 = vextract.high.u32 %v316
      %v319 = vshrl.u32 %v318, 3
      %v320 = vmul.u32 %v319, 10
      %v321 = vsub.s32 %v315, %v320
      %v322 = vsub.s32 0, %v321
      %v323 = vsel %vm313, %v322, %v321
      %vm324 = vcmp.lt.s32.totalorder %v260, 0
      %v325 = vsub.s32 0, %v260
      %v326 = vsel %vm324, %v325, %v260
      %v327 = vmul.u32.u64.compose %v326, 3435973837
      %v328 = vextract.low.u32 %v327
      %v329 = vextract.high.u32 %v327
      %v330 = vshrl.u32 %v329, 3
      %v331 = vmul.u32 %v330, 10
      %v332 = vsub.s32 %v326, %v331
      %v333 = vsub.s32 0, %v332
      %v334 = vsel %vm324, %v333, %v332
      %vm335 = vcmp.lt.s32.totalorder %v261, 0
      %v336 = vsub.s32 0, %v261
      %v337 = vsel %vm335, %v336, %v261
      %v338 = vmul.u32.u64.compose %v337, 3435973837
      %v339 = vextract.low.u32 %v338
      %v340 = vextract.high.u32 %v338
      %v341 = vshrl.u32 %v340, 3
      %v342 = vmul.u32 %v341, 10
      %v343 = vsub.s32 %v337, %v342
      %v344 = vsub.s32 0, %v343
      %v345 = vsel %vm335, %v344, %v343
      %vm346 = vcmp.lt.s32.totalorder %v262, 0
      %v347 = vsub.s32 0, %v262
      %v348 = vsel %vm346, %v347, %v262
      %v349 = vmul.u32.u64.compose %v348, 3435973837
      %v350 = vextract.low.u32 %v349
      %v351 = vextract.high.u32 %v349
      %v352 = vshrl.u32 %v351, 3
      %v353 = vmul.u32 %v352, 10
      %v354 = vsub.s32 %v348, %v353
      %v355 = vsub.s32 0, %v354
      %v356 = vsel %vm346, %v355, %v354
      %vm357 = vcmp.lt.s32.totalorder %v263, 0
      %v358 = vsub.s32 0, %v263
      %v359 = vsel %vm357, %v358, %v263
      %v360 = vmul.u32.u64.compose %v359, 3435973837
      %v361 = vextract.low.u32 %v360
      %v362 = vextract.high.u32 %v360
      %v363 = vshrl.u32 %v362, 3
      %v364 = vmul.u32 %v363, 10
      %v365 = vsub.s32 %v359, %v364
      %v366 = vsub.s32 0, %v365
      %v367 = vsel %vm357, %v366, %v365
      %vm368 = vcmp.lt.s32.totalorder %v264, 0
      %v369 = vsub.s32 0, %v264
      %v370 = vsel %vm368, %v369, %v264
      %v371 = vmul.u32.u64.compose %v370, 3435973837
      %v372 = vextract.low.u32 %v371
      %v373 = vextract.high.u32 %v371
      %v374 = vshrl.u32 %v373, 3
      %v375 = vmul.u32 %v374, 10
      %v376 = vsub.s32 %v370, %v375
      %v377 = vsub.s32 0, %v376
      %v378 = vsel %vm368, %v377, %v376
      %vm379 = vcmp.lt.s32.totalorder %v265, 0
      %v380 = vsub.s32 0, %v265
      %v381 = vsel %vm379, %v380, %v265
      %v382 = vmul.u32.u64.compose %v381, 3435973837
      %v383 = vextract.low.u32 %v382
      %v384 = vextract.high.u32 %v382
      %v385 = vshrl.u32 %v384, 3
      %v386 = vmul.u32 %v385, 10
      %v387 = vsub.s32 %v381, %v386
      %v388 = vsub.s32 0, %v387
      %v389 = vsel %vm379, %v388, %v387
      %vm390 = vcmp.lt.s32.totalorder %v266, 0
      %v391 = vsub.s32 0, %v266
      %v392 = vsel %vm390, %v391, %v266
      %v393 = vmul.u32.u64.compose %v392, 3435973837
      %v394 = vextract.low.u32 %v393
      %v395 = vextract.high.u32 %v393
      %v396 = vshrl.u32 %v395, 3
      %v397 = vmul.u32 %v396, 10
      %v398 = vsub.s32 %v392, %v397
      %v399 = vsub.s32 0, %v398
      %v400 = vsel %vm390, %v399, %v398
      %vm401 = vcmp.lt.s32.totalorder %v267, 0
      %v402 = vsub.s32 0, %v267
      %v403 = vsel %vm401, %v402, %v267
      %v404 = vmul.u32.u64.compose %v403, 3435973837
      %v405 = vextract.low.u32 %v404
      %v406 = vextract.high.u32 %v404
      %v407 = vshrl.u32 %v406, 3
      %v408 = vmul.u32 %v407, 10
      %v409 = vsub.s32 %v403, %v408
      %v410 = vsub.s32 0, %v409
      %v411 = vsel %vm401, %v410, %v409
      %vm412 = vcmp.lt.s32.totalorder %v268, 0
      %v413 = vsub.s32 0, %v268
      %v414 = vsel %vm412, %v413, %v268
      %v415 = vmul.u32.u64.compose %v414, 3435973837
      %v416 = vextract.low.u32 %v415
      %v417 = vextract.high.u32 %v415
      %v418 = vshrl.u32 %v417, 3
      %v419 = vmul.u32 %v418, 10
      %v420 = vsub.s32 %v414, %v419
      %v421 = vsub.s32 0, %v420
      %v422 = vsel %vm412, %v421, %v420
      %vm423 = vcmp.ne.s32.totalorder %v279, 0
      %vm424 = vcmp.ne.s32.totalorder %v290, 0
      %vm425 = vcmp.ne.s32.totalorder %v301, 0
      %vm426 = vcmp.ne.s32.totalorder %v312, 0
      %vm427 = vcmp.ne.s32.totalorder %v323, 0
      %vm428 = vcmp.ne.s32.totalorder %v334, 0
      %vm429 = vcmp.ne.s32.totalorder %v345, 0
      %vm430 = vcmp.ne.s32.totalorder %v356, 0
      %vm431 = vcmp.ne.s32.totalorder %v367, 0
      %vm432 = vcmp.ne.s32.totalorder %v378, 0
      %vm433 = vcmp.ne.s32.totalorder %v389, 0
      %vm434 = vcmp.ne.s32.totalorder %v400, 0
      %vm435 = vcmp.ne.s32.totalorder %v411, 0
      %vm436 = vcmp.ne.s32.totalorder %v422, 0
      %vm437 = vcmp.lt.s32.totalorder %v279, 0
      %vm438 = vcmp.lt.s32.totalorder %v290, 0
      %vm439 = vcmp.lt.s32.totalorder %v301, 0
      %vm440 = vcmp.lt.s32.totalorder %v312, 0
      %vm441 = vcmp.lt.s32.totalorder %v323, 0
      %vm442 = vcmp.lt.s32.totalorder %v334, 0
      %vm443 = vcmp.lt.s32.totalorder %v345, 0
      %vm444 = vcmp.lt.s32.totalorder %v356, 0
      %vm445 = vcmp.lt.s32.totalorder %v367, 0
      %vm446 = vcmp.lt.s32.totalorder %v378, 0
      %vm447 = vcmp.lt.s32.totalorder %v389, 0
      %vm448 = vcmp.lt.s32.totalorder %v400, 0
      %vm449 = vcmp.lt.s32.totalorder %v411, 0
      %vm450 = vcmp.lt.s32.totalorder %v422, 0
      %vm451 = vmand %vm437, %vm423
      %vm452 = vmand %vm438, %vm424
      %vm453 = vmand %vm439, %vm425
      %vm454 = vmand %vm440, %vm426
      %vm455 = vmand %vm441, %vm427
      %vm456 = vmand %vm442, %vm428
      %vm457 = vmand %vm443, %vm429
      %vm458 = vmand %vm444, %vm430
      %vm459 = vmand %vm445, %vm431
      %vm460 = vmand %vm446, %vm432
      %vm461 = vmand %vm447, %vm433
      %vm462 = vmand %vm448, %vm434
      %vm463 = vmand %vm449, %vm435
      %vm464 = vmand %vm450, %vm436
      %v465 = vadd.s32 %v279, 10
      %v466 = vadd.s32 %v290, 10
      %v467 = vadd.s32 %v301, 10
      %v468 = vadd.s32 %v312, 10
      %v469 = vadd.s32 %v323, 10
      %v470 = vadd.s32 %v334, 10
      %v471 = vadd.s32 %v345, 10
      %v472 = vadd.s32 %v356, 10
      %v473 = vadd.s32 %v367, 10
      %v474 = vadd.s32 %v378, 10
      %v475 = vadd.s32 %v389, 10
      %v476 = vadd.s32 %v400, 10
      %v477 = vadd.s32 %v411, 10
      %v478 = vadd.s32 %v422, 10
      %v479 = vsel %vm451, %v465, %v279
      %v480 = vsel %vm452, %v466, %v290
      %v481 = vsel %vm453, %v467, %v301
      %v482 = vsel %vm454, %v468, %v312
      %v483 = vsel %vm455, %v469, %v323
      %v484 = vsel %vm456, %v470, %v334
      %v485 = vsel %vm457, %v471, %v345
      %v486 = vsel %vm458, %v472, %v356
      %v487 = vsel %vm459, %v473, %v367
      %v488 = vsel %vm460, %v474, %v378
      %v489 = vsel %vm461, %v475, %v389
      %v490 = vsel %vm462, %v476, %v400
      %v491 = vsel %vm463, %v477, %v411
      %v492 = vsel %vm464, %v478, %v422
      %vm493 = vcmp.ge.s32.totalorder %v255, 10
      %vm494 = vcmp.ge.s32.totalorder %v256, 10
      %vm495 = vcmp.ge.s32.totalorder %v257, 10
      %vm496 = vcmp.ge.s32.totalorder %v258, 10
      %vm497 = vcmp.ge.s32.totalorder %v259, 10
      %vm498 = vcmp.ge.s32.totalorder %v260, 10
      %vm499 = vcmp.ge.s32.totalorder %v261, 10
      %vm500 = vcmp.ge.s32.totalorder %v262, 10
      %vm501 = vcmp.ge.s32.totalorder %v263, 10
      %vm502 = vcmp.ge.s32.totalorder %v264, 10
      %vm503 = vcmp.ge.s32.totalorder %v265, 10
      %vm504 = vcmp.ge.s32.totalorder %v266, 10
      %vm505 = vcmp.ge.s32.totalorder %v267, 10
      %vm506 = vcmp.ge.s32.totalorder %v268, 10
      %vm507 = vcmp.lt.s32.totalorder %v255, 90
      %vm508 = vcmp.lt.s32.totalorder %v256, 90
      %vm509 = vcmp.lt.s32.totalorder %v257, 90
      %vm510 = vcmp.lt.s32.totalorder %v258, 90
      %vm511 = vcmp.lt.s32.totalorder %v259, 90
      %vm512 = vcmp.lt.s32.totalorder %v260, 90
      %vm513 = vcmp.lt.s32.totalorder %v261, 90
      %vm514 = vcmp.lt.s32.totalorder %v262, 90
      %vm515 = vcmp.lt.s32.totalorder %v263, 90
      %vm516 = vcmp.lt.s32.totalorder %v264, 90
      %vm517 = vcmp.lt.s32.totalorder %v265, 90
      %vm518 = vcmp.lt.s32.totalorder %v266, 90
      %vm519 = vcmp.lt.s32.totalorder %v267, 90
      %vm520 = vcmp.lt.s32.totalorder %v268, 90
      %vm521 = vmand %vm493, %vm507
      %vm522 = vmand %vm494, %vm508
      %vm523 = vmand %vm495, %vm509
      %vm524 = vmand %vm496, %vm510
      %vm525 = vmand %vm497, %vm511
      %vm526 = vmand %vm498, %vm512
      %vm527 = vmand %vm499, %vm513
      %vm528 = vmand %vm500, %vm514
      %vm529 = vmand %vm501, %vm515
      %vm530 = vmand %vm502, %vm516
      %vm531 = vmand %vm503, %vm517
      %vm532 = vmand %vm504, %vm518
      %vm533 = vmand %vm505, %vm519
      %vm534 = vmand %vm506, %vm520
      %vm535 = vcmp.ge.s32.totalorder %v479, 1
      %vm536 = vcmp.ge.s32.totalorder %v480, 1
      %vm537 = vcmp.ge.s32.totalorder %v481, 1
      %vm538 = vcmp.ge.s32.totalorder %v482, 1
      %vm539 = vcmp.ge.s32.totalorder %v483, 1
      %vm540 = vcmp.ge.s32.totalorder %v484, 1
      %vm541 = vcmp.ge.s32.totalorder %v485, 1
      %vm542 = vcmp.ge.s32.totalorder %v486, 1
      %vm543 = vcmp.ge.s32.totalorder %v487, 1
      %vm544 = vcmp.ge.s32.totalorder %v488, 1
      %vm545 = vcmp.ge.s32.totalorder %v489, 1
      %vm546 = vcmp.ge.s32.totalorder %v490, 1
      %vm547 = vcmp.ge.s32.totalorder %v491, 1
      %vm548 = vcmp.ge.s32.totalorder %v492, 1
      %vm549 = vmand %vm521, %vm535
      %vm550 = vmand %vm522, %vm536
      %vm551 = vmand %vm523, %vm537
      %vm552 = vmand %vm524, %vm538
      %vm553 = vmand %vm525, %vm539
      %vm554 = vmand %vm526, %vm540
      %vm555 = vmand %vm527, %vm541
      %vm556 = vmand %vm528, %vm542
      %vm557 = vmand %vm529, %vm543
      %vm558 = vmand %vm530, %vm544
      %vm559 = vmand %vm531, %vm545
      %vm560 = vmand %vm532, %vm546
      %vm561 = vmand %vm533, %vm547
      %vm562 = vmand %vm534, %vm548
      %vm563 = vcmp.le.s32.totalorder %v479, 8
      %vm564 = vcmp.le.s32.totalorder %v480, 8
      %vm565 = vcmp.le.s32.totalorder %v481, 8
      %vm566 = vcmp.le.s32.totalorder %v482, 8
      %vm567 = vcmp.le.s32.totalorder %v483, 8
      %vm568 = vcmp.le.s32.totalorder %v484, 8
      %vm569 = vcmp.le.s32.totalorder %v485, 8
      %vm570 = vcmp.le.s32.totalorder %v486, 8
      %vm571 = vcmp.le.s32.totalorder %v487, 8
      %vm572 = vcmp.le.s32.totalorder %v488, 8
      %vm573 = vcmp.le.s32.totalorder %v489, 8
      %vm574 = vcmp.le.s32.totalorder %v490, 8
      %vm575 = vcmp.le.s32.totalorder %v491, 8
      %vm576 = vcmp.le.s32.totalorder %v492, 8
      %vm577 = vmand %vm549, %vm563
      %vm578 = vmand %vm550, %vm564
      %vm579 = vmand %vm551, %vm565
      %vm580 = vmand %vm552, %vm566
      %vm581 = vmand %vm553, %vm567
      %vm582 = vmand %vm554, %vm568
      %vm583 = vmand %vm555, %vm569
      %vm584 = vmand %vm556, %vm570
      %vm585 = vmand %vm557, %vm571
      %vm586 = vmand %vm558, %vm572
      %vm587 = vmand %vm559, %vm573
      %vm588 = vmand %vm560, %vm574
      %vm589 = vmand %vm561, %vm575
      %vm590 = vmand %vm562, %vm576
      %v591 = vld [vmem:[%s241] sm:$0xf]
      %v592 = vld [vmem:[%s241 + $0x4] sm:$0xf]
      %v593 = vld [vmem:[%s241 + $0x8] sm:$0xf]
      %v594 = vld [vmem:[%s241 + $0xc] sm:$0xf]
      %v595 = vld [vmem:[%s241 + $0x10] sm:$0xf]
      %v596 = vld [vmem:[%s241 + $0x14] sm:$0xf]
      %v597 = vld [vmem:[%s241 + $0x18] sm:$0xf]
      %v598 = vld [vmem:[%s241 + $0x1c] sm:$0xf]
      %v599 = vld [vmem:[%s241 + $0x20] sm:$0xf]
      %v600 = vld [vmem:[%s241 + $0x24] sm:$0xf]
      %v601 = vld [vmem:[%s241 + $0x28] sm:$0xf]
      %v602 = vld [vmem:[%s241 + $0x2c] sm:$0xf]
      %v603 = vld [vmem:[%s241 + $0x30] sm:$0xf]
      %v604 = vld [vmem:[%s241 + $0x34] sm:$0x7]
      %v605 = vunpack.c.l.bf16 %v591
      %v606 = vunpack.c.l.bf16 %v592
      %v607 = vunpack.c.l.bf16 %v593
      %v608 = vunpack.c.l.bf16 %v594
      %v609 = vunpack.c.l.bf16 %v595
      %v610 = vunpack.c.l.bf16 %v596
      %v611 = vunpack.c.l.bf16 %v597
      %v612 = vunpack.c.l.bf16 %v598
      %v613 = vunpack.c.l.bf16 %v599
      %v614 = vunpack.c.l.bf16 %v600
      %v615 = vunpack.c.l.bf16 %v601
      %v616 = vunpack.c.l.bf16 %v602
      %v617 = vunpack.c.l.bf16 %v603
      %v618 = vunpack.c.l.bf16 %v604
      %v619 = vld [vmem:[%s1] sm:$0x1]
      %v621 = vlaneseq
      %v622 = vshrl.u32 %v621, 7
      %v623 = vsub.s32 0, %v622
      %v624 = vrot.slane %v619, %v623
      %v626 = vmul.f32 %v605, %v624
      %v627 = vmul.f32 %v606, %v624
      %v628 = vmul.f32 %v607, %v624
      %v629 = vmul.f32 %v608, %v624
      %v630 = vmul.f32 %v609, %v624
      %v631 = vmul.f32 %v610, %v624
      %v632 = vmul.f32 %v611, %v624
      %v633 = vmul.f32 %v612, %v624
      %v634 = vmul.f32 %v613, %v624
      %v635 = vmul.f32 %v614, %v624
      %v636 = vmul.f32 %v615, %v624
      %v637 = vmul.f32 %v616, %v624
      %v638 = vmul.f32 %v617, %v624
      %v639 = vmul.f32 %v618, %v624
      %v640 = vld [vmem:[%s2] sm:$0x1]
      %v642 = vlaneseq
      %v643 = vshrl.u32 %v642, 7
      %v644 = vsub.s32 0, %v643
      %v645 = vrot.slane %v640, %v644
      %v647 = vadd.f32 %v626, %v645
      %v648 = vadd.f32 %v627, %v645
      %v649 = vadd.f32 %v628, %v645
      %v650 = vadd.f32 %v629, %v645
      %v651 = vadd.f32 %v630, %v645
      %v652 = vadd.f32 %v631, %v645
      %v653 = vadd.f32 %v632, %v645
      %v654 = vadd.f32 %v633, %v645
      %v655 = vadd.f32 %v634, %v645
      %v656 = vadd.f32 %v635, %v645
      %v657 = vadd.f32 %v636, %v645
      %v658 = vadd.f32 %v637, %v645
      %v659 = vadd.f32 %v638, %v645
      %v660 = vadd.f32 %v639, %v645
      %v661 = vmax.f32 %v647, 0.0
      %v662 = vmax.f32 %v648, 0.0
      %v663 = vmax.f32 %v649, 0.0
      %v664 = vmax.f32 %v650, 0.0
      %v665 = vmax.f32 %v651, 0.0
      %v666 = vmax.f32 %v652, 0.0
      %v667 = vmax.f32 %v653, 0.0
      %v668 = vmax.f32 %v654, 0.0
      %v669 = vmax.f32 %v655, 0.0
      %v670 = vmax.f32 %v656, 0.0
      %v671 = vmax.f32 %v657, 0.0
      %v672 = vmax.f32 %v658, 0.0
      %v673 = vmax.f32 %v659, 0.0
      %v674 = vmax.f32 %v660, 0.0
      %v675 = vsel %vm577, %v661, 0.0
      %v676 = vsel %vm578, %v662, 0.0
      %v677 = vsel %vm579, %v663, 0.0
      %v678 = vsel %vm580, %v664, 0.0
      %v679 = vsel %vm581, %v665, 0.0
      %v680 = vsel %vm582, %v666, 0.0
      %v681 = vsel %vm583, %v667, 0.0
      %v682 = vsel %vm584, %v668, 0.0
      %v683 = vsel %vm585, %v669, 0.0
      %v684 = vsel %vm586, %v670, 0.0
      %v685 = vsel %vm587, %v671, 0.0
      %v686 = vsel %vm588, %v672, 0.0
      %v687 = vsel %vm589, %v673, 0.0
      %v688 = vsel %vm590, %v674, 0.0
      %v689 = vpack.c.bf16 %v676, %v675
      %v690 = vpack.c.bf16 %v678, %v677
      %v691 = vpack.c.bf16 %v680, %v679
      %v692 = vpack.c.bf16 %v682, %v681
      %v693 = vpack.c.bf16 %v684, %v683
      %v694 = vpack.c.bf16 %v686, %v685
      %v695 = vpack.c.bf16 %v688, %v687
      %v703 = vunpack.c.l.b16 %v689
      %v704 = vunpack.c.h.b16 %v689
      %v705 = vunpack.c.l.b16 %v690
      %v706 = vunpack.c.h.b16 %v690
      %v707 = vunpack.c.l.b16 %v691
      %v708 = vunpack.c.h.b16 %v691
      %v709 = vunpack.c.l.b16 %v692
      %v710 = vunpack.c.h.b16 %v692
      %v711 = vunpack.c.l.b16 %v693
      %v712 = vunpack.c.h.b16 %v693
      %v713 = vunpack.c.l.b16 %v694
      %v714 = vunpack.c.h.b16 %v694
      %v715 = vunpack.c.l.b16 %v695
      %v716 = vunpack.c.h.b16 %v695
      %v717 = vpack.c.b16 %v703, %v703
      %v718 = vpack.c.b16 %v704, %v704
      %v719 = vpack.c.b16 %v705, %v705
      %v720 = vpack.c.b16 %v706, %v706
      %v721 = vpack.c.b16 %v707, %v707
      %v722 = vpack.c.b16 %v708, %v708
      %v723 = vpack.c.b16 %v709, %v709
      %v724 = vpack.c.b16 %v710, %v710
      %v725 = vpack.c.b16 %v711, %v711
      %v726 = vpack.c.b16 %v712, %v712
      %v727 = vpack.c.b16 %v713, %v713
      %v728 = vpack.c.b16 %v714, %v714
      %v729 = vpack.c.b16 %v715, %v715
      %v730 = vpack.c.b16 %v716, %v716
      %745 = vst [vmem:[#allocation2] sm:$0xf] %v717
      %746 = vst [vmem:[#allocation2 + $0x4] sm:$0xf] %v718
      %747 = vst [vmem:[#allocation2 + $0x8] sm:$0xf] %v719
      %748 = vst [vmem:[#allocation2 + $0xc] sm:$0xf] %v720
      %749 = vst [vmem:[#allocation2 + $0x10] sm:$0xf] %v721
      %750 = vst [vmem:[#allocation2 + $0x14] sm:$0xf] %v722
      %751 = vst [vmem:[#allocation2 + $0x18] sm:$0xf] %v723
      %752 = vst [vmem:[#allocation2 + $0x1c] sm:$0xf] %v724
      %753 = vst [vmem:[#allocation2 + $0x20] sm:$0xf] %v725
      %754 = vst [vmem:[#allocation2 + $0x24] sm:$0xf] %v726
      %755 = vst [vmem:[#allocation2 + $0x28] sm:$0xf] %v727
      %756 = vst [vmem:[#allocation2 + $0x2c] sm:$0xf] %v728
      %757 = vst [vmem:[#allocation2 + $0x30] sm:$0xf] %v729
      %758 = vst [vmem:[#allocation2 + $0x34] sm:$0x7] %v730
      %759 = vst [vmem:[#allocation3] sm:$0xff] 0.0
      %760 = vst [vmem:[#allocation3 + $0x8] sm:$0xff] 0.0
      %761 = vst [vmem:[#allocation3 + $0x10] sm:$0xff] 0.0
      %762 = vst [vmem:[#allocation3 + $0x18] sm:$0xff] 0.0
      %763 = vst [vmem:[#allocation3 + $0x20] sm:$0xff] 0.0
      %764 = vst [vmem:[#allocation3 + $0x28] sm:$0xff] 0.0
      %765 = vst [vmem:[#allocation3 + $0x30] sm:$0xff] 0.0
      %766 = vst [vmem:[#allocation3 + $0x38] sm:$0xff] 0.0
      %767 = vst [vmem:[#allocation3 + $0x40] sm:$0xff] 0.0
      %768 = vst [vmem:[#allocation3 + $0x48] sm:$0xff] 0.0
      %v769 = vld [vmem:[#allocation3] sm:$0xff]
      %v770 = vld [vmem:[#allocation3 + $0x8] sm:$0xff]
      %v771 = vld [vmem:[#allocation3 + $0x10] sm:$0xff]
      %v772 = vld [vmem:[#allocation3 + $0x18] sm:$0xff]
      %v773 = vld [vmem:[#allocation3 + $0x20] sm:$0xff]
      %v774 = vld [vmem:[#allocation3 + $0x28] sm:$0xff]
      %v775 = vld [vmem:[#allocation3 + $0x30] sm:$0xff]
      %v776 = vld [vmem:[#allocation3 + $0x38] sm:$0xff]
      %v777 = vld [vmem:[#allocation3 + $0x40] sm:$0xff]
      %v778 = vld [vmem:[#allocation3 + $0x48] sm:$0xff]
      %v779 = vld [vmem:[#allocation2] sm:$0xf]
      %v780 = vld [vmem:[#allocation2 + $0x4] sm:$0xf]
      %v781 = vld [vmem:[#allocation2 + $0x8] sm:$0xf]
      %v782 = vld [vmem:[#allocation2 + $0xc] sm:$0xf]
      %v783 = vld [vmem:[#allocation2 + $0x10] sm:$0xf]
      %v784 = vld [vmem:[#allocation2 + $0x14] sm:$0xf]
      %v785 = vld [vmem:[#allocation2 + $0x18] sm:$0xf]
      %v786 = vld [vmem:[#allocation2 + $0x1c] sm:$0xf]
      %v787 = vld [vmem:[#allocation2 + $0x20] sm:$0xf]
      %v788 = vld [vmem:[#allocation2 + $0x24] sm:$0xf]
      %v789 = vld [vmem:[%s3] sm:$0xf]
      %v790 = vld [vmem:[%s3 + $0x4] sm:$0xf]
      %v791 = vld [vmem:[%s3 + $0x8] sm:$0xf]
      %v792 = vld [vmem:[%s3 + $0xc] sm:$0xf]
      %v793 = vld [vmem:[%s3 + $0x10] sm:$0xf]
      %v794 = vld [vmem:[%s3 + $0x14] sm:$0xf]
      %v795 = vld [vmem:[%s3 + $0x18] sm:$0xf]
      %v796 = vld [vmem:[%s3 + $0x1c] sm:$0xf]
      %v797 = vld [vmem:[%s3 + $0x20] sm:$0xf]
      %v798 = vld [vmem:[%s3 + $0x24] sm:$0xf]
      %v799 = vld [vmem:[%s3 + $0x28] sm:$0xf]
      %v800 = vld [vmem:[%s3 + $0x2c] sm:$0xf]
      %v801 = vld [vmem:[%s3 + $0x30] sm:$0xf]
      %v802 = vld [vmem:[%s3 + $0x34] sm:$0xf]
      %v803 = vld [vmem:[%s3 + $0x38] sm:$0xf]
      %v804 = vld [vmem:[%s3 + $0x3c] sm:$0xf]
      %v815 = vunpack.c.l.b16 %v779
      %v816 = vunpack.c.l.b16 %v780
      %v817 = vunpack.c.l.b16 %v781
      %v818 = vunpack.c.l.b16 %v782
      %v819 = vunpack.c.l.b16 %v783
      %v820 = vunpack.c.l.b16 %v784
      %v821 = vunpack.c.l.b16 %v785
      %v822 = vunpack.c.l.b16 %v786
      %v823 = vunpack.c.l.b16 %v787
      %v824 = vunpack.c.l.b16 %v788
      %v825 = vpack.c.b16 %v816, %v815
      %v826 = vpack.c.b16 %v818, %v817
      %v827 = vpack.c.b16 %v820, %v819
      %v828 = vpack.c.b16 %v822, %v821
      %v829 = vpack.c.b16 %v824, %v823
      %v851 = vunpack.c.l.b16 %v789
      %v852 = vunpack.c.l.b16 %v790
      %v853 = vunpack.c.l.b16 %v791
      %v854 = vunpack.c.l.b16 %v792
      %v855 = vunpack.c.l.b16 %v793
      %v856 = vunpack.c.l.b16 %v794
      %v857 = vunpack.c.l.b16 %v795
      %v858 = vunpack.c.l.b16 %v796
      %v859 = vunpack.c.l.b16 %v797
      %v860 = vunpack.c.l.b16 %v798
      %v861 = vunpack.c.l.b16 %v799
      %v862 = vunpack.c.l.b16 %v800
      %v863 = vunpack.c.l.b16 %v801
      %v864 = vunpack.c.l.b16 %v802
      %v865 = vunpack.c.l.b16 %v803
      %v866 = vunpack.c.l.b16 %v804
      %v867 = vpack.c.b16 %v852, %v851
      %v868 = vpack.c.b16 %v854, %v853
      %v869 = vpack.c.b16 %v856, %v855
      %v870 = vpack.c.b16 %v858, %v857
      %v871 = vpack.c.b16 %v860, %v859
      %v872 = vpack.c.b16 %v862, %v861
      %v873 = vpack.c.b16 %v864, %v863
      %v874 = vpack.c.b16 %v866, %v865
      %883 = vmatprep.subr.bf16.mxu0 0
      %884 = vmatpush1.bf16.msra.mxu0 %v874
      %885 = vmatprep.subr.bf16.mxu0 0
      %886 = vmatpush1.bf16.msra.mxu0 %v873
      %887 = vmatprep.subr.bf16.mxu0 0
      %888 = vmatpush1.bf16.msra.mxu0 %v872
      %889 = vmatprep.subr.bf16.mxu0 0
      %890 = vmatpush1.bf16.msra.mxu0 %v871
      %891 = vmatprep.subr.bf16.mxu0 0
      %892 = vmatpush1.bf16.msra.mxu0 %v870
      %893 = vmatprep.subr.bf16.mxu0 0
      %894 = vmatpush1.bf16.msra.mxu0 %v869
      %895 = vmatprep.subr.bf16.mxu0 0
      %896 = vmatpush1.bf16.msra.mxu0 %v868
      %897 = vmatprep.subr.bf16.mxu0 0
      %898 = vmatpush1.bf16.msra.mxu0 %v867
      %899 = vmatprep.subr.bf16.mxu0 0
      %900 = vmatpush2.bf16.msra.mxu0 0
      %901 = vmatprep.subr.bf16.mxu0 0
      %902 = vmatpush2.bf16.msra.mxu0 0
      %903 = vmatprep.subr.bf16.mxu0 0
      %904 = vmatpush2.bf16.msra.mxu0 0
      %905 = vmatprep.subr.bf16.mxu0 0
      %906 = vmatpush2.bf16.msra.mxu0 0
      %907 = vmatprep.subr.bf16.mxu0 0
      %908 = vmatpush2.bf16.msra.mxu0 0
      %909 = vmatprep.subr.bf16.mxu0 0
      %910 = vmatpush2.bf16.msra.mxu0 0
      %911 = vmatprep.subr.bf16.mxu0 0
      %912 = vmatpush2.bf16.msra.mxu0 0
      %913 = vmatprep.subr.bf16.mxu0 0
      %914 = vmatpush2.bf16.msra.mxu0 0
      %915 = vmatprep.mubr.bf16.mxu0 0
      %916 = vmatmul.mubr.bf16.gmra.mxu0 %v825
      %v917 = vpop.f32.mrf.mxu0
      %v918 = vadd.f32 0.0, %v917
      %v919 = vpop.f32.mrf.mxu0
      %v920 = vpop.f32.mrf.mxu0
      %v921 = vadd.f32 0.0, %v920
      %v922 = vpop.f32.mrf.mxu0
      %923 = vmatprep.mubr.bf16.mxu0 0
      %924 = vmatmul.mubr.bf16.gmra.mxu0 %v826
      %v925 = vpop.f32.mrf.mxu0
      %v926 = vadd.f32 0.0, %v925
      %v927 = vpop.f32.mrf.mxu0
      %v928 = vpop.f32.mrf.mxu0
      %v929 = vadd.f32 0.0, %v928
      %v930 = vpop.f32.mrf.mxu0
      %931 = vmatprep.mubr.bf16.mxu0 0
      %932 = vmatmul.mubr.bf16.gmra.mxu0 %v827
      %v933 = vpop.f32.mrf.mxu0
      %v934 = vadd.f32 0.0, %v933
      %v935 = vpop.f32.mrf.mxu0
      %v936 = vpop.f32.mrf.mxu0
      %v937 = vadd.f32 0.0, %v936
      %v938 = vpop.f32.mrf.mxu0
      %939 = vmatprep.mubr.bf16.mxu0 0
      %940 = vmatmul.mubr.bf16.gmra.mxu0 %v828
      %v941 = vpop.f32.mrf.mxu0
      %v942 = vadd.f32 0.0, %v941
      %v943 = vpop.f32.mrf.mxu0
      %v944 = vpop.f32.mrf.mxu0
      %v945 = vadd.f32 0.0, %v944
      %v946 = vpop.f32.mrf.mxu0
      %947 = vmatprep.mubr.bf16.mxu0 0
      %948 = vmatmul.mubr.bf16.gmra.mxu0 %v829
      %v949 = vpop.f32.mrf.mxu0
      %v950 = vadd.f32 0.0, %v949
      %v951 = vpop.f32.mrf.mxu0
      %v952 = vpop.f32.mrf.mxu0
      %v953 = vadd.f32 0.0, %v952
      %v954 = vpop.f32.mrf.mxu0
      %955 = vdwg.mxu0
      %v956 = vadd.f32 %v769, %v918
      %v957 = vadd.f32 %v770, %v921
      %v958 = vadd.f32 %v771, %v926
      %v959 = vadd.f32 %v772, %v929
      %v960 = vadd.f32 %v773, %v934
      %v961 = vadd.f32 %v774, %v937
      %v962 = vadd.f32 %v775, %v942
      %v963 = vadd.f32 %v776, %v945
      %v964 = vadd.f32 %v777, %v950
      %v965 = vadd.f32 %v778, %v953
      %966 = vst [vmem:[#allocation3] sm:$0xff] %v956
      %967 = vst [vmem:[#allocation3 + $0x8] sm:$0xff] %v957
      %968 = vst [vmem:[#allocation3 + $0x10] sm:$0xff] %v958
      %969 = vst [vmem:[#allocation3 + $0x18] sm:$0xff] %v959
      %970 = vst [vmem:[#allocation3 + $0x20] sm:$0xff] %v960
      %971 = vst [vmem:[#allocation3 + $0x28] sm:$0xff] %v961
      %972 = vst [vmem:[#allocation3 + $0x30] sm:$0xff] %v962
      %973 = vst [vmem:[#allocation3 + $0x38] sm:$0xff] %v963
      %974 = vst [vmem:[#allocation3 + $0x40] sm:$0xff] %v964
      %975 = vst [vmem:[#allocation3 + $0x48] sm:$0xff] %v965
      %v976 = vld [vmem:[#allocation3] sm:$0xff]
      %v977 = vld [vmem:[#allocation3 + $0x8] sm:$0xff]
      %v978 = vld [vmem:[#allocation3 + $0x10] sm:$0xff]
      %v979 = vld [vmem:[#allocation3 + $0x18] sm:$0xff]
      %v980 = vld [vmem:[#allocation3 + $0x20] sm:$0xff]
      %v981 = vld [vmem:[#allocation3 + $0x28] sm:$0xff]
      %v982 = vld [vmem:[#allocation3 + $0x30] sm:$0xff]
      %v983 = vld [vmem:[#allocation3 + $0x38] sm:$0xff]
      %v984 = vld [vmem:[#allocation3 + $0x40] sm:$0xff]
      %v985 = vld [vmem:[#allocation3 + $0x48] sm:$0xff]
      %v986 = vld [vmem:[#allocation2] sm:$0xf]
      %v987 = vld [vmem:[#allocation2 + $0x4] sm:$0xf]
      %v988 = vld [vmem:[#allocation2 + $0x8] sm:$0xf]
      %v989 = vld [vmem:[#allocation2 + $0xc] sm:$0xf]
      %v990 = vld [vmem:[#allocation2 + $0x10] sm:$0xf]
      %v991 = vld [vmem:[#allocation2 + $0x14] sm:$0xf]
      %v992 = vld [vmem:[#allocation2 + $0x18] sm:$0xf]
      %v993 = vld [vmem:[#allocation2 + $0x1c] sm:$0xf]
      %v994 = vld [vmem:[#allocation2 + $0x20] sm:$0xf]
      %v995 = vld [vmem:[#allocation2 + $0x24] sm:$0xf]
      %v996 = vld [vmem:[#allocation2 + $0x28] sm:$0x1]
      %s997 = scalar_lea.vmem %s3, 64
      %v998 = vld [vmem:[%s997] sm:$0xf]
      %v999 = vld [vmem:[%s997 + $0x4] sm:$0xf]
      %v1000 = vld [vmem:[%s997 + $0x8] sm:$0xf]
      %v1001 = vld [vmem:[%s997 + $0xc] sm:$0xf]
      %v1002 = vld [vmem:[%s997 + $0x10] sm:$0xf]
      %v1003 = vld [vmem:[%s997 + $0x14] sm:$0xf]
      %v1004 = vld [vmem:[%s997 + $0x18] sm:$0xf]
      %v1005 = vld [vmem:[%s997 + $0x1c] sm:$0xf]
      %v1006 = vld [vmem:[%s997 + $0x20] sm:$0xf]
      %v1007 = vld [vmem:[%s997 + $0x24] sm:$0xf]
      %v1008 = vld [vmem:[%s997 + $0x28] sm:$0xf]
      %v1009 = vld [vmem:[%s997 + $0x2c] sm:$0xf]
      %v1010 = vld [vmem:[%s997 + $0x30] sm:$0xf]
      %v1011 = vld [vmem:[%s997 + $0x34] sm:$0xf]
      %v1012 = vld [vmem:[%s997 + $0x38] sm:$0xf]
      %v1013 = vld [vmem:[%s997 + $0x3c] sm:$0xf]
      %v1025 = vunpack.c.l.b16 %v986
      %v1026 = vunpack.c.l.b16 %v987
      %v1027 = vunpack.c.l.b16 %v988
      %v1028 = vunpack.c.l.b16 %v989
      %v1029 = vunpack.c.l.b16 %v990
      %v1030 = vunpack.c.l.b16 %v991
      %v1031 = vunpack.c.l.b16 %v992
      %v1032 = vunpack.c.l.b16 %v993
      %v1033 = vunpack.c.l.b16 %v994
      %v1034 = vunpack.c.l.b16 %v995
      %v1035 = vunpack.c.l.b16 %v996
      %v1036 = vpack.c.b16 %v1026, %v1025
      %v1037 = vpack.c.b16 %v1028, %v1027
      %v1038 = vpack.c.b16 %v1030, %v1029
      %v1039 = vpack.c.b16 %v1032, %v1031
      %v1040 = vpack.c.b16 %v1034, %v1033
      %v1041 = vpack.c.b16 %v1035, %v1035
      %vm1042 = vsmask.f32 7424
      %v1044 = vshrl.u32 %v1036, 16
      %v1046 = vshll.u32 %v1036, 16
      %v1048 = vrot.slane %v1046, 1
      %v1049 = vor.u32 %v1044, %v1048
      %v1051 = vshll.u32 %v1037, 16
      %v1053 = vrot.slane %v1051, 1
      %v1054 = vsel %vm1042, %v1049, %v1053
      %v1055 = vshrl.u32 %v1037, 16
      %v1057 = vor.u32 %v1055, %v1053
      %v1059 = vshll.u32 %v1038, 16
      %v1061 = vrot.slane %v1059, 1
      %v1062 = vsel %vm1042, %v1057, %v1061
      %v1063 = vshrl.u32 %v1038, 16
      %v1065 = vor.u32 %v1063, %v1061
      %v1067 = vshll.u32 %v1039, 16
      %v1069 = vrot.slane %v1067, 1
      %v1070 = vsel %vm1042, %v1065, %v1069
      %v1071 = vshrl.u32 %v1039, 16
      %v1073 = vor.u32 %v1071, %v1069
      %v1075 = vshll.u32 %v1040, 16
      %v1077 = vrot.slane %v1075, 1
      %v1078 = vsel %vm1042, %v1073, %v1077
      %v1079 = vshrl.u32 %v1040, 16
      %v1081 = vor.u32 %v1079, %v1077
      %v1083 = vshll.u32 %v1041, 16
      %v1085 = vrot.slane %v1083, 1
      %v1086 = vsel %vm1042, %v1081, %v1085
      %v1108 = vunpack.c.l.b16 %v998
      %v1109 = vunpack.c.l.b16 %v999
      %v1110 = vunpack.c.l.b16 %v1000
      %v1111 = vunpack.c.l.b16 %v1001
      %v1112 = vunpack.c.l.b16 %v1002
      %v1113 = vunpack.c.l.b16 %v1003
      %v1114 = vunpack.c.l.b16 %v1004
      %v1115 = vunpack.c.l.b16 %v1005
      %v1116 = vunpack.c.l.b16 %v1006
      %v1117 = vunpack.c.l.b16 %v1007
      %v1118 = vunpack.c.l.b16 %v1008
      %v1119 = vunpack.c.l.b16 %v1009
      %v1120 = vunpack.c.l.b16 %v1010
      %v1121 = vunpack.c.l.b16 %v1011
      %v1122 = vunpack.c.l.b16 %v1012
      %v1123 = vunpack.c.l.b16 %v1013
      %v1124 = vpack.c.b16 %v1109, %v1108
      %v1125 = vpack.c.b16 %v1111, %v1110
      %v1126 = vpack.c.b16 %v1113, %v1112
      %v1127 = vpack.c.b16 %v1115, %v1114
      %v1128 = vpack.c.b16 %v1117, %v1116
      %v1129 = vpack.c.b16 %v1119, %v1118
      %v1130 = vpack.c.b16 %v1121, %v1120
      %v1131 = vpack.c.b16 %v1123, %v1122
      %1140 = vmatprep.subr.bf16.mxu0 0
      %1141 = vmatpush1.bf16.msra.mxu0 %v1131
      %1142 = vmatprep.subr.bf16.mxu0 0
      %1143 = vmatpush1.bf16.msra.mxu0 %v1130
      %1144 = vmatprep.subr.bf16.mxu0 0
      %1145 = vmatpush1.bf16.msra.mxu0 %v1129
      %1146 = vmatprep.subr.bf16.mxu0 0
      %1147 = vmatpush1.bf16.msra.mxu0 %v1128
      %1148 = vmatprep.subr.bf16.mxu0 0
      %1149 = vmatpush1.bf16.msra.mxu0 %v1127
      %1150 = vmatprep.subr.bf16.mxu0 0
      %1151 = vmatpush1.bf16.msra.mxu0 %v1126
      %1152 = vmatprep.subr.bf16.mxu0 0
      %1153 = vmatpush1.bf16.msra.mxu0 %v1125
      %1154 = vmatprep.subr.bf16.mxu0 0
      %1155 = vmatpush1.bf16.msra.mxu0 %v1124
      %1156 = vmatprep.subr.bf16.mxu0 0
      %1157 = vmatpush2.bf16.msra.mxu0 0
      %1158 = vmatprep.subr.bf16.mxu0 0
      %1159 = vmatpush2.bf16.msra.mxu0 0
      %1160 = vmatprep.subr.bf16.mxu0 0
      %1161 = vmatpush2.bf16.msra.mxu0 0
      %1162 = vmatprep.subr.bf16.mxu0 0
      %1163 = vmatpush2.bf16.msra.mxu0 0
      %1164 = vmatprep.subr.bf16.mxu0 0
      %1165 = vmatpush2.bf16.msra.mxu0 0
      %1166 = vmatprep.subr.bf16.mxu0 0
      %1167 = vmatpush2.bf16.msra.mxu0 0
      %1168 = vmatprep.subr.bf16.mxu0 0
      %1169 = vmatpush2.bf16.msra.mxu0 0
      %1170 = vmatprep.subr.bf16.mxu0 0
      %1171 = vmatpush2.bf16.msra.mxu0 0
      %1172 = vmatprep.mubr.bf16.mxu0 0
      %1173 = vmatmul.mubr.bf16.gmra.mxu0 %v1054
      %v1174 = vpop.f32.mrf.mxu0
      %v1175 = vadd.f32 0.0, %v1174
      %v1176 = vpop.f32.mrf.mxu0
      %v1177 = vpop.f32.mrf.mxu0
      %v1178 = vadd.f32 0.0, %v1177
      %v1179 = vpop.f32.mrf.mxu0
      %1180 = vmatprep.mubr.bf16.mxu0 0
      %1181 = vmatmul.mubr.bf16.gmra.mxu0 %v1062
      %v1182 = vpop.f32.mrf.mxu0
      %v1183 = vadd.f32 0.0, %v1182
      %v1184 = vpop.f32.mrf.mxu0
      %v1185 = vpop.f32.mrf.mxu0
      %v1186 = vadd.f32 0.0, %v1185
      %v1187 = vpop.f32.mrf.mxu0
      %1188 = vmatprep.mubr.bf16.mxu0 0
      %1189 = vmatmul.mubr.bf16.gmra.mxu0 %v1070
      %v1190 = vpop.f32.mrf.mxu0
      %v1191 = vadd.f32 0.0, %v1190
      %v1192 = vpop.f32.mrf.mxu0
      %v1193 = vpop.f32.mrf.mxu0
      %v1194 = vadd.f32 0.0, %v1193
      %v1195 = vpop.f32.mrf.mxu0
      %1196 = vmatprep.mubr.bf16.mxu0 0
      %1197 = vmatmul.mubr.bf16.gmra.mxu0 %v1078
      %v1198 = vpop.f32.mrf.mxu0
      %v1199 = vadd.f32 0.0, %v1198
      %v1200 = vpop.f32.mrf.mxu0
      %v1201 = vpop.f32.mrf.mxu0
      %v1202 = vadd.f32 0.0, %v1201
      %v1203 = vpop.f32.mrf.mxu0
      %1204 = vmatprep.mubr.bf16.mxu0 0
      %1205 = vmatmul.mubr.bf16.gmra.mxu0 %v1086
      %v1206 = vpop.f32.mrf.mxu0
      %v1207 = vadd.f32 0.0, %v1206
      %v1208 = vpop.f32.mrf.mxu0
      %v1209 = vpop.f32.mrf.mxu0
      %v1210 = vadd.f32 0.0, %v1209
      %v1211 = vpop.f32.mrf.mxu0
      %1212 = vdwg.mxu0
      %v1213 = vadd.f32 %v976, %v1175
      %v1214 = vadd.f32 %v977, %v1178
      %v1215 = vadd.f32 %v978, %v1183
      %v1216 = vadd.f32 %v979, %v1186
      %v1217 = vadd.f32 %v980, %v1191
      %v1218 = vadd.f32 %v981, %v1194
      %v1219 = vadd.f32 %v982, %v1199
      %v1220 = vadd.f32 %v983, %v1202
      %v1221 = vadd.f32 %v984, %v1207
      %v1222 = vadd.f32 %v985, %v1210
      %1223 = vst [vmem:[#allocation3] sm:$0xff] %v1213
      %1224 = vst [vmem:[#allocation3 + $0x8] sm:$0xff] %v1214
      %1225 = vst [vmem:[#allocation3 + $0x10] sm:$0xff] %v1215
      %1226 = vst [vmem:[#allocation3 + $0x18] sm:$0xff] %v1216
      %1227 = vst [vmem:[#allocation3 + $0x20] sm:$0xff] %v1217
      %1228 = vst [vmem:[#allocation3 + $0x28] sm:$0xff] %v1218
      %1229 = vst [vmem:[#allocation3 + $0x30] sm:$0xff] %v1219
      %1230 = vst [vmem:[#allocation3 + $0x38] sm:$0xff] %v1220
      %1231 = vst [vmem:[#allocation3 + $0x40] sm:$0xff] %v1221
      %1232 = vst [vmem:[#allocation3 + $0x48] sm:$0xff] %v1222
      %v1233 = vld [vmem:[#allocation3] sm:$0xff]
      %v1234 = vld [vmem:[#allocation3 + $0x8] sm:$0xff]
      %v1235 = vld [vmem:[#allocation3 + $0x10] sm:$0xff]
      %v1236 = vld [vmem:[#allocation3 + $0x18] sm:$0xff]
      %v1237 = vld [vmem:[#allocation3 + $0x20] sm:$0xff]
      %v1238 = vld [vmem:[#allocation3 + $0x28] sm:$0xff]
      %v1239 = vld [vmem:[#allocation3 + $0x30] sm:$0xff]
      %v1240 = vld [vmem:[#allocation3 + $0x38] sm:$0xff]
      %v1241 = vld [vmem:[#allocation3 + $0x40] sm:$0xff]
      %v1242 = vld [vmem:[#allocation3 + $0x48] sm:$0xff]
      %v1243 = vld [vmem:[#allocation2] sm:$0xe]
      %v1244 = vld [vmem:[#allocation2 + $0x4] sm:$0xf]
      %v1245 = vld [vmem:[#allocation2 + $0x8] sm:$0xf]
      %v1246 = vld [vmem:[#allocation2 + $0xc] sm:$0xf]
      %v1247 = vld [vmem:[#allocation2 + $0x10] sm:$0xf]
      %v1248 = vld [vmem:[#allocation2 + $0x14] sm:$0xf]
      %v1249 = vld [vmem:[#allocation2 + $0x18] sm:$0xf]
      %v1250 = vld [vmem:[#allocation2 + $0x1c] sm:$0xf]
      %v1251 = vld [vmem:[#allocation2 + $0x20] sm:$0xf]
      %v1252 = vld [vmem:[#allocation2 + $0x24] sm:$0xf]
      %v1253 = vld [vmem:[#allocation2 + $0x28] sm:$0x1]
      %s1254 = scalar_lea.vmem %s3, 128
      %v1255 = vld [vmem:[%s1254] sm:$0xf]
      %v1256 = vld [vmem:[%s1254 + $0x4] sm:$0xf]
      %v1257 = vld [vmem:[%s1254 + $0x8] sm:$0xf]
      %v1258 = vld [vmem:[%s1254 + $0xc] sm:$0xf]
      %v1259 = vld [vmem:[%s1254 + $0x10] sm:$0xf]
      %v1260 = vld [vmem:[%s1254 + $0x14] sm:$0xf]
      %v1261 = vld [vmem:[%s1254 + $0x18] sm:$0xf]
      %v1262 = vld [vmem:[%s1254 + $0x1c] sm:$0xf]
      %v1263 = vld [vmem:[%s1254 + $0x20] sm:$0xf]
      %v1264 = vld [vmem:[%s1254 + $0x24] sm:$0xf]
      %v1265 = vld [vmem:[%s1254 + $0x28] sm:$0xf]
      %v1266 = vld [vmem:[%s1254 + $0x2c] sm:$0xf]
      %v1267 = vld [vmem:[%s1254 + $0x30] sm:$0xf]
      %v1268 = vld [vmem:[%s1254 + $0x34] sm:$0xf]
      %v1269 = vld [vmem:[%s1254 + $0x38] sm:$0xf]
      %v1270 = vld [vmem:[%s1254 + $0x3c] sm:$0xf]
      %v1282 = vunpack.c.l.b16 %v1243
      %v1283 = vunpack.c.l.b16 %v1244
      %v1284 = vunpack.c.l.b16 %v1245
      %v1285 = vunpack.c.l.b16 %v1246
      %v1286 = vunpack.c.l.b16 %v1247
      %v1287 = vunpack.c.l.b16 %v1248
      %v1288 = vunpack.c.l.b16 %v1249
      %v1289 = vunpack.c.l.b16 %v1250
      %v1290 = vunpack.c.l.b16 %v1251
      %v1291 = vunpack.c.l.b16 %v1252
      %v1292 = vunpack.c.l.b16 %v1253
      %v1293 = vpack.c.b16 %v1283, %v1282
      %v1294 = vpack.c.b16 %v1285, %v1284
      %v1295 = vpack.c.b16 %v1287, %v1286
      %v1296 = vpack.c.b16 %v1289, %v1288
      %v1297 = vpack.c.b16 %v1291, %v1290
      %v1298 = vpack.c.b16 %v1292, %v1292
      %vm1299 = vcmask 1046528
      %v1300 = vrot.slane %v1293, 1
      %v1301 = vrot.slane %v1294, 1
      %v1302 = vsel %vm1299, %v1300, %v1301
      %v1303 = vrot.slane %v1295, 1
      %v1304 = vsel %vm1299, %v1301, %v1303
      %v1305 = vrot.slane %v1296, 1
      %v1306 = vsel %vm1299, %v1303, %v1305
      %v1307 = vrot.slane %v1297, 1
      %v1308 = vsel %vm1299, %v1305, %v1307
      %v1309 = vrot.slane %v1298, 1
      %v1310 = vsel %vm1299, %v1307, %v1309
      %v1332 = vunpack.c.l.b16 %v1255
      %v1333 = vunpack.c.l.b16 %v1256
      %v1334 = vunpack.c.l.b16 %v1257
      %v1335 = vunpack.c.l.b16 %v1258
      %v1336 = vunpack.c.l.b16 %v1259
      %v1337 = vunpack.c.l.b16 %v1260
      %v1338 = vunpack.c.l.b16 %v1261
      %v1339 = vunpack.c.l.b16 %v1262
      %v1340 = vunpack.c.l.b16 %v1263
      %v1341 = vunpack.c.l.b16 %v1264
      %v1342 = vunpack.c.l.b16 %v1265
      %v1343 = vunpack.c.l.b16 %v1266
      %v1344 = vunpack.c.l.b16 %v1267
      %v1345 = vunpack.c.l.b16 %v1268
      %v1346 = vunpack.c.l.b16 %v1269
      %v1347 = vunpack.c.l.b16 %v1270
      %v1348 = vpack.c.b16 %v1333, %v1332
      %v1349 = vpack.c.b16 %v1335, %v1334
      %v1350 = vpack.c.b16 %v1337, %v1336
      %v1351 = vpack.c.b16 %v1339, %v1338
      %v1352 = vpack.c.b16 %v1341, %v1340
      %v1353 = vpack.c.b16 %v1343, %v1342
      %v1354 = vpack.c.b16 %v1345, %v1344
      %v1355 = vpack.c.b16 %v1347, %v1346
      %1364 = vmatprep.subr.bf16.mxu0 0
      %1365 = vmatpush1.bf16.msra.mxu0 %v1355
      %1366 = vmatprep.subr.bf16.mxu0 0
      %1367 = vmatpush1.bf16.msra.mxu0 %v1354
      %1368 = vmatprep.subr.bf16.mxu0 0
      %1369 = vmatpush1.bf16.msra.mxu0 %v1353
      %1370 = vmatprep.subr.bf16.mxu0 0
      %1371 = vmatpush1.bf16.msra.mxu0 %v1352
      %1372 = vmatprep.subr.bf16.mxu0 0
      %1373 = vmatpush1.bf16.msra.mxu0 %v1351
      %1374 = vmatprep.subr.bf16.mxu0 0
      %1375 = vmatpush1.bf16.msra.mxu0 %v1350
      %1376 = vmatprep.subr.bf16.mxu0 0
      %1377 = vmatpush1.bf16.msra.mxu0 %v1349
      %1378 = vmatprep.subr.bf16.mxu0 0
      %1379 = vmatpush1.bf16.msra.mxu0 %v1348
      %1380 = vmatprep.subr.bf16.mxu0 0
      %1381 = vmatpush2.bf16.msra.mxu0 0
      %1382 = vmatprep.subr.bf16.mxu0 0
      %1383 = vmatpush2.bf16.msra.mxu0 0
      %1384 = vmatprep.subr.bf16.mxu0 0
      %1385 = vmatpush2.bf16.msra.mxu0 0
      %1386 = vmatprep.subr.bf16.mxu0 0
      %1387 = vmatpush2.bf16.msra.mxu0 0
      %1388 = vmatprep.subr.bf16.mxu0 0
      %1389 = vmatpush2.bf16.msra.mxu0 0
      %1390 = vmatprep.subr.bf16.mxu0 0
      %1391 = vmatpush2.bf16.msra.mxu0 0
      %1392 = vmatprep.subr.bf16.mxu0 0
      %1393 = vmatpush2.bf16.msra.mxu0 0
      %1394 = vmatprep.subr.bf16.mxu0 0
      %1395 = vmatpush2.bf16.msra.mxu0 0
      %1396 = vmatprep.mubr.bf16.mxu0 0
      %1397 = vmatmul.mubr.bf16.gmra.mxu0 %v1302
      %v1398 = vpop.f32.mrf.mxu0
      %v1399 = vadd.f32 0.0, %v1398
      %v1400 = vpop.f32.mrf.mxu0
      %v1401 = vpop.f32.mrf.mxu0
      %v1402 = vadd.f32 0.0, %v1401
      %v1403 = vpop.f32.mrf.mxu0
      %1404 = vmatprep.mubr.bf16.mxu0 0
      %1405 = vmatmul.mubr.bf16.gmra.mxu0 %v1304
      %v1406 = vpop.f32.mrf.mxu0
      %v1407 = vadd.f32 0.0, %v1406
      %v1408 = vpop.f32.mrf.mxu0
      %v1409 = vpop.f32.mrf.mxu0
      %v1410 = vadd.f32 0.0, %v1409
      %v1411 = vpop.f32.mrf.mxu0
      %1412 = vmatprep.mubr.bf16.mxu0 0
      %1413 = vmatmul.mubr.bf16.gmra.mxu0 %v1306
      %v1414 = vpop.f32.mrf.mxu0
      %v1415 = vadd.f32 0.0, %v1414
      %v1416 = vpop.f32.mrf.mxu0
      %v1417 = vpop.f32.mrf.mxu0
      %v1418 = vadd.f32 0.0, %v1417
      %v1419 = vpop.f32.mrf.mxu0
      %1420 = vmatprep.mubr.bf16.mxu0 0
      %1421 = vmatmul.mubr.bf16.gmra.mxu0 %v1308
      %v1422 = vpop.f32.mrf.mxu0
      %v1423 = vadd.f32 0.0, %v1422
      %v1424 = vpop.f32.mrf.mxu0
      %v1425 = vpop.f32.mrf.mxu0
      %v1426 = vadd.f32 0.0, %v1425
      %v1427 = vpop.f32.mrf.mxu0
      %1428 = vmatprep.mubr.bf16.mxu0 0
      %1429 = vmatmul.mubr.bf16.gmra.mxu0 %v1310
      %v1430 = vpop.f32.mrf.mxu0
      %v1431 = vadd.f32 0.0, %v1430
      %v1432 = vpop.f32.mrf.mxu0
      %v1433 = vpop.f32.mrf.mxu0
      %v1434 = vadd.f32 0.0, %v1433
      %v1435 = vpop.f32.mrf.mxu0
      %1436 = vdwg.mxu0
      %v1437 = vadd.f32 %v1233, %v1399
      %v1438 = vadd.f32 %v1234, %v1402
      %v1439 = vadd.f32 %v1235, %v1407
      %v1440 = vadd.f32 %v1236, %v1410
      %v1441 = vadd.f32 %v1237, %v1415
      %v1442 = vadd.f32 %v1238, %v1418
      %v1443 = vadd.f32 %v1239, %v1423
      %v1444 = vadd.f32 %v1240, %v1426
      %v1445 = vadd.f32 %v1241, %v1431
      %v1446 = vadd.f32 %v1242, %v1434
      %1447 = vst [vmem:[#allocation3] sm:$0xff] %v1437
      %1448 = vst [vmem:[#allocation3 + $0x8] sm:$0xff] %v1438
      %1449 = vst [vmem:[#allocation3 + $0x10] sm:$0xff] %v1439
      %1450 = vst [vmem:[#allocation3 + $0x18] sm:$0xff] %v1440
      %1451 = vst [vmem:[#allocation3 + $0x20] sm:$0xff] %v1441
      %1452 = vst [vmem:[#allocation3 + $0x28] sm:$0xff] %v1442
      %1453 = vst [vmem:[#allocation3 + $0x30] sm:$0xff] %v1443
      %1454 = vst [vmem:[#allocation3 + $0x38] sm:$0xff] %v1444
      %1455 = vst [vmem:[#allocation3 + $0x40] sm:$0xff] %v1445
      %1456 = vst [vmem:[#allocation3 + $0x48] sm:$0xff] %v1446
      %v1457 = vld [vmem:[#allocation3] sm:$0xff]
      %v1458 = vld [vmem:[#allocation3 + $0x8] sm:$0xff]
      %v1459 = vld [vmem:[#allocation3 + $0x10] sm:$0xff]
      %v1460 = vld [vmem:[#allocation3 + $0x18] sm:$0xff]
      %v1461 = vld [vmem:[#allocation3 + $0x20] sm:$0xff]
      %v1462 = vld [vmem:[#allocation3 + $0x28] sm:$0xff]
      %v1463 = vld [vmem:[#allocation3 + $0x30] sm:$0xff]
      %v1464 = vld [vmem:[#allocation3 + $0x38] sm:$0xff]
      %v1465 = vld [vmem:[#allocation3 + $0x40] sm:$0xff]
      %v1466 = vld [vmem:[#allocation3 + $0x48] sm:$0xff]
      %v1467 = vld [vmem:[#allocation2 + $0x4] sm:$0xe]
      %v1468 = vld [vmem:[#allocation2 + $0x8] sm:$0xf]
      %v1469 = vld [vmem:[#allocation2 + $0xc] sm:$0xf]
      %v1470 = vld [vmem:[#allocation2 + $0x10] sm:$0xf]
      %v1471 = vld [vmem:[#allocation2 + $0x14] sm:$0xf]
      %v1472 = vld [vmem:[#allocation2 + $0x18] sm:$0xf]
      %v1473 = vld [vmem:[#allocation2 + $0x1c] sm:$0xf]
      %v1474 = vld [vmem:[#allocation2 + $0x20] sm:$0xf]
      %v1475 = vld [vmem:[#allocation2 + $0x24] sm:$0xf]
      %v1476 = vld [vmem:[#allocation2 + $0x28] sm:$0xf]
      %v1477 = vld [vmem:[#allocation2 + $0x2c] sm:$0x1]
      %s1478 = scalar_lea.vmem %s3, 192
      %v1479 = vld [vmem:[%s1478] sm:$0xf]
      %v1480 = vld [vmem:[%s1478 + $0x4] sm:$0xf]
      %v1481 = vld [vmem:[%s1478 + $0x8] sm:$0xf]
      %v1482 = vld [vmem:[%s1478 + $0xc] sm:$0xf]
      %v1483 = vld [vmem:[%s1478 + $0x10] sm:$0xf]
      %v1484 = vld [vmem:[%s1478 + $0x14] sm:$0xf]
      %v1485 = vld [vmem:[%s1478 + $0x18] sm:$0xf]
      %v1486 = vld [vmem:[%s1478 + $0x1c] sm:$0xf]
      %v1487 = vld [vmem:[%s1478 + $0x20] sm:$0xf]
      %v1488 = vld [vmem:[%s1478 + $0x24] sm:$0xf]
      %v1489 = vld [vmem:[%s1478 + $0x28] sm:$0xf]
      %v1490 = vld [vmem:[%s1478 + $0x2c] sm:$0xf]
      %v1491 = vld [vmem:[%s1478 + $0x30] sm:$0xf]
      %v1492 = vld [vmem:[%s1478 + $0x34] sm:$0xf]
      %v1493 = vld [vmem:[%s1478 + $0x38] sm:$0xf]
      %v1494 = vld [vmem:[%s1478 + $0x3c] sm:$0xf]
      %v1506 = vunpack.c.l.b16 %v1467
      %v1507 = vunpack.c.l.b16 %v1468
      %v1508 = vunpack.c.l.b16 %v1469
      %v1509 = vunpack.c.l.b16 %v1470
      %v1510 = vunpack.c.l.b16 %v1471
      %v1511 = vunpack.c.l.b16 %v1472
      %v1512 = vunpack.c.l.b16 %v1473
      %v1513 = vunpack.c.l.b16 %v1474
      %v1514 = vunpack.c.l.b16 %v1475
      %v1515 = vunpack.c.l.b16 %v1476
      %v1516 = vunpack.c.l.b16 %v1477
      %v1517 = vpack.c.b16 %v1507, %v1506
      %v1518 = vpack.c.b16 %v1509, %v1508
      %v1519 = vpack.c.b16 %v1511, %v1510
      %v1520 = vpack.c.b16 %v1513, %v1512
      %v1521 = vpack.c.b16 %v1515, %v1514
      %v1522 = vpack.c.b16 %v1516, %v1516
      %v1523 = vrot.slane %v1517, 1
      %v1524 = vrot.slane %v1518, 1
      %v1525 = vsel %vm1299, %v1523, %v1524
      %v1526 = vrot.slane %v1519, 1
      %v1527 = vsel %vm1299, %v1524, %v1526
      %v1528 = vrot.slane %v1520, 1
      %v1529 = vsel %vm1299, %v1526, %v1528
      %v1530 = vrot.slane %v1521, 1
      %v1531 = vsel %vm1299, %v1528, %v1530
      %v1532 = vrot.slane %v1522, 1
      %v1533 = vsel %vm1299, %v1530, %v1532
      %v1555 = vunpack.c.l.b16 %v1479
      %v1556 = vunpack.c.l.b16 %v1480
      %v1557 = vunpack.c.l.b16 %v1481
      %v1558 = vunpack.c.l.b16 %v1482
      %v1559 = vunpack.c.l.b16 %v1483
      %v1560 = vunpack.c.l.b16 %v1484
      %v1561 = vunpack.c.l.b16 %v1485
      %v1562 = vunpack.c.l.b16 %v1486
      %v1563 = vunpack.c.l.b16 %v1487
      %v1564 = vunpack.c.l.b16 %v1488
      %v1565 = vunpack.c.l.b16 %v1489
      %v1566 = vunpack.c.l.b16 %v1490
      %v1567 = vunpack.c.l.b16 %v1491
      %v1568 = vunpack.c.l.b16 %v1492
      %v1569 = vunpack.c.l.b16 %v1493
      %v1570 = vunpack.c.l.b16 %v1494
      %v1571 = vpack.c.b16 %v1556, %v1555
      %v1572 = vpack.c.b16 %v1558, %v1557
      %v1573 = vpack.c.b16 %v1560, %v1559
      %v1574 = vpack.c.b16 %v1562, %v1561
      %v1575 = vpack.c.b16 %v1564, %v1563
      %v1576 = vpack.c.b16 %v1566, %v1565
      %v1577 = vpack.c.b16 %v1568, %v1567
      %v1578 = vpack.c.b16 %v1570, %v1569
      %1587 = vmatprep.subr.bf16.mxu0 0
      %1588 = vmatpush1.bf16.msra.mxu0 %v1578
      %1589 = vmatprep.subr.bf16.mxu0 0
      %1590 = vmatpush1.bf16.msra.mxu0 %v1577
      %1591 = vmatprep.subr.bf16.mxu0 0
      %1592 = vmatpush1.bf16.msra.mxu0 %v1576
      %1593 = vmatprep.subr.bf16.mxu0 0
      %1594 = vmatpush1.bf16.msra.mxu0 %v1575
      %1595 = vmatprep.subr.bf16.mxu0 0
      %1596 = vmatpush1.bf16.msra.mxu0 %v1574
      %1597 = vmatprep.subr.bf16.mxu0 0
      %1598 = vmatpush1.bf16.msra.mxu0 %v1573
      %1599 = vmatprep.subr.bf16.mxu0 0
      %1600 = vmatpush1.bf16.msra.mxu0 %v1572
      %1601 = vmatprep.subr.bf16.mxu0 0
      %1602 = vmatpush1.bf16.msra.mxu0 %v1571
      %1603 = vmatprep.subr.bf16.mxu0 0
      %1604 = vmatpush2.bf16.msra.mxu0 0
      %1605 = vmatprep.subr.bf16.mxu0 0
      %1606 = vmatpush2.bf16.msra.mxu0 0
      %1607 = vmatprep.subr.bf16.mxu0 0
      %1608 = vmatpush2.bf16.msra.mxu0 0
      %1609 = vmatprep.subr.bf16.mxu0 0
      %1610 = vmatpush2.bf16.msra.mxu0 0
      %1611 = vmatprep.subr.bf16.mxu0 0
      %1612 = vmatpush2.bf16.msra.mxu0 0
      %1613 = vmatprep.subr.bf16.mxu0 0
      %1614 = vmatpush2.bf16.msra.mxu0 0
      %1615 = vmatprep.subr.bf16.mxu0 0
      %1616 = vmatpush2.bf16.msra.mxu0 0
      %1617 = vmatprep.subr.bf16.mxu0 0
      %1618 = vmatpush2.bf16.msra.mxu0 0
      %1619 = vmatprep.mubr.bf16.mxu0 0
      %1620 = vmatmul.mubr.bf16.gmra.mxu0 %v1525
      %v1621 = vpop.f32.mrf.mxu0
      %v1622 = vadd.f32 0.0, %v1621
      %v1623 = vpop.f32.mrf.mxu0
      %v1624 = vpop.f32.mrf.mxu0
      %v1625 = vadd.f32 0.0, %v1624
      %v1626 = vpop.f32.mrf.mxu0
      %1627 = vmatprep.mubr.bf16.mxu0 0
      %1628 = vmatmul.mubr.bf16.gmra.mxu0 %v1527
      %v1629 = vpop.f32.mrf.mxu0
      %v1630 = vadd.f32 0.0, %v1629
      %v1631 = vpop.f32.mrf.mxu0
      %v1632 = vpop.f32.mrf.mxu0
      %v1633 = vadd.f32 0.0, %v1632
      %v1634 = vpop.f32.mrf.mxu0
      %1635 = vmatprep.mubr.bf16.mxu0 0
      %1636 = vmatmul.mubr.bf16.gmra.mxu0 %v1529
      %v1637 = vpop.f32.mrf.mxu0
      %v1638 = vadd.f32 0.0, %v1637
      %v1639 = vpop.f32.mrf.mxu0
      %v1640 = vpop.f32.mrf.mxu0
      %v1641 = vadd.f32 0.0, %v1640
      %v1642 = vpop.f32.mrf.mxu0
      %1643 = vmatprep.mubr.bf16.mxu0 0
      %1644 = vmatmul.mubr.bf16.gmra.mxu0 %v1531
      %v1645 = vpop.f32.mrf.mxu0
      %v1646 = vadd.f32 0.0, %v1645
      %v1647 = vpop.f32.mrf.mxu0
      %v1648 = vpop.f32.mrf.mxu0
      %v1649 = vadd.f32 0.0, %v1648
      %v1650 = vpop.f32.mrf.mxu0
      %1651 = vmatprep.mubr.bf16.mxu0 0
      %1652 = vmatmul.mubr.bf16.gmra.mxu0 %v1533
      %v1653 = vpop.f32.mrf.mxu0
      %v1654 = vadd.f32 0.0, %v1653
      %v1655 = vpop.f32.mrf.mxu0
      %v1656 = vpop.f32.mrf.mxu0
      %v1657 = vadd.f32 0.0, %v1656
      %v1658 = vpop.f32.mrf.mxu0
      %1659 = vdwg.mxu0
      %v1660 = vadd.f32 %v1457, %v1622
      %v1661 = vadd.f32 %v1458, %v1625
      %v1662 = vadd.f32 %v1459, %v1630
      %v1663 = vadd.f32 %v1460, %v1633
      %v1664 = vadd.f32 %v1461, %v1638
      %v1665 = vadd.f32 %v1462, %v1641
      %v1666 = vadd.f32 %v1463, %v1646
      %v1667 = vadd.f32 %v1464, %v1649
      %v1668 = vadd.f32 %v1465, %v1654
      %v1669 = vadd.f32 %v1466, %v1657
      %1670 = vst [vmem:[#allocation3] sm:$0xff] %v1660
      %1671 = vst [vmem:[#allocation3 + $0x8] sm:$0xff] %v1661
      %1672 = vst [vmem:[#allocation3 + $0x10] sm:$0xff] %v1662
      %1673 = vst [vmem:[#allocation3 + $0x18] sm:$0xff] %v1663
      %1674 = vst [vmem:[#allocation3 + $0x20] sm:$0xff] %v1664
      %1675 = vst [vmem:[#allocation3 + $0x28] sm:$0xff] %v1665
      %1676 = vst [vmem:[#allocation3 + $0x30] sm:$0xff] %v1666
      %1677 = vst [vmem:[#allocation3 + $0x38] sm:$0xff] %v1667
      %1678 = vst [vmem:[#allocation3 + $0x40] sm:$0xff] %v1668
      %1679 = vst [vmem:[#allocation3 + $0x48] sm:$0xff] %v1669
      %v1680 = vld [vmem:[#allocation3] sm:$0xff]
      %v1681 = vld [vmem:[#allocation3 + $0x8] sm:$0xff]
      %v1682 = vld [vmem:[#allocation3 + $0x10] sm:$0xff]
      %v1683 = vld [vmem:[#allocation3 + $0x18] sm:$0xff]
      %v1684 = vld [vmem:[#allocation3 + $0x20] sm:$0xff]
      %v1685 = vld [vmem:[#allocation3 + $0x28] sm:$0xff]
      %v1686 = vld [vmem:[#allocation3 + $0x30] sm:$0xff]
      %v1687 = vld [vmem:[#allocation3 + $0x38] sm:$0xff]
      %v1688 = vld [vmem:[#allocation3 + $0x40] sm:$0xff]
      %v1689 = vld [vmem:[#allocation3 + $0x48] sm:$0xff]
      %v1690 = vld [vmem:[#allocation2 + $0x4] sm:$0xe]
      %v1691 = vld [vmem:[#allocation2 + $0x8] sm:$0xf]
      %v1692 = vld [vmem:[#allocation2 + $0xc] sm:$0xf]
      %v1693 = vld [vmem:[#allocation2 + $0x10] sm:$0xf]
      %v1694 = vld [vmem:[#allocation2 + $0x14] sm:$0xf]
      %v1695 = vld [vmem:[#allocation2 + $0x18] sm:$0xf]
      %v1696 = vld [vmem:[#allocation2 + $0x1c] sm:$0xf]
      %v1697 = vld [vmem:[#allocation2 + $0x20] sm:$0xf]
      %v1698 = vld [vmem:[#allocation2 + $0x24] sm:$0xf]
      %v1699 = vld [vmem:[#allocation2 + $0x28] sm:$0xf]
      %v1700 = vld [vmem:[#allocation2 + $0x2c] sm:$0x3]
      %s1701 = scalar_lea.vmem %s3, 256
      %v1702 = vld [vmem:[%s1701] sm:$0xf]
      %v1703 = vld [vmem:[%s1701 + $0x4] sm:$0xf]
      %v1704 = vld [vmem:[%s1701 + $0x8] sm:$0xf]
      %v1705 = vld [vmem:[%s1701 + $0xc] sm:$0xf]
      %v1706 = vld [vmem:[%s1701 + $0x10] sm:$0xf]
      %v1707 = vld [vmem:[%s1701 + $0x14] sm:$0xf]
      %v1708 = vld [vmem:[%s1701 + $0x18] sm:$0xf]
      %v1709 = vld [vmem:[%s1701 + $0x1c] sm:$0xf]
      %v1710 = vld [vmem:[%s1701 + $0x20] sm:$0xf]
      %v1711 = vld [vmem:[%s1701 + $0x24] sm:$0xf]
      %v1712 = vld [vmem:[%s1701 + $0x28] sm:$0xf]
      %v1713 = vld [vmem:[%s1701 + $0x2c] sm:$0xf]
      %v1714 = vld [vmem:[%s1701 + $0x30] sm:$0xf]
      %v1715 = vld [vmem:[%s1701 + $0x34] sm:$0xf]
      %v1716 = vld [vmem:[%s1701 + $0x38] sm:$0xf]
      %v1717 = vld [vmem:[%s1701 + $0x3c] sm:$0xf]
      %v1729 = vunpack.c.l.b16 %v1690
      %v1730 = vunpack.c.l.b16 %v1691
      %v1731 = vunpack.c.l.b16 %v1692
      %v1732 = vunpack.c.l.b16 %v1693
      %v1733 = vunpack.c.l.b16 %v1694
      %v1734 = vunpack.c.l.b16 %v1695
      %v1735 = vunpack.c.l.b16 %v1696
      %v1736 = vunpack.c.l.b16 %v1697
      %v1737 = vunpack.c.l.b16 %v1698
      %v1738 = vunpack.c.l.b16 %v1699
      %v1739 = vunpack.c.l.b16 %v1700
      %v1740 = vpack.c.b16 %v1730, %v1729
      %v1741 = vpack.c.b16 %v1732, %v1731
      %v1742 = vpack.c.b16 %v1734, %v1733
      %v1743 = vpack.c.b16 %v1736, %v1735
      %v1744 = vpack.c.b16 %v1738, %v1737
      %v1745 = vpack.c.b16 %v1739, %v1739
      %vm1746 = vsmask.f32 6400
      %v1748 = vshrl.u32 %v1740, 16
      %v1750 = vrot.slane %v1748, 1
      %v1751 = vshll.u32 %v1740, 16
      %v1753 = vrot.slane %v1751, 2
      %v1754 = vor.u32 %v1750, %v1753
      %v1756 = vshrl.u32 %v1741, 16
      %v1758 = vrot.slane %v1756, 1
      %v1759 = vshll.u32 %v1741, 16
      %v1761 = vrot.slane %v1759, 2
      %v1762 = vor.u32 %v1758, %v1761
      %v1763 = vsel %vm1746, %v1754, %v1762
      %v1765 = vshrl.u32 %v1742, 16
      %v1767 = vrot.slane %v1765, 1
      %v1768 = vshll.u32 %v1742, 16
      %v1770 = vrot.slane %v1768, 2
      %v1771 = vor.u32 %v1767, %v1770
      %v1772 = vsel %vm1746, %v1762, %v1771
      %v1774 = vshrl.u32 %v1743, 16
      %v1776 = vrot.slane %v1774, 1
      %v1777 = vshll.u32 %v1743, 16
      %v1779 = vrot.slane %v1777, 2
      %v1780 = vor.u32 %v1776, %v1779
      %v1781 = vsel %vm1746, %v1771, %v1780
      %v1783 = vshrl.u32 %v1744, 16
      %v1785 = vrot.slane %v1783, 1
      %v1786 = vshll.u32 %v1744, 16
      %v1788 = vrot.slane %v1786, 2
      %v1789 = vor.u32 %v1785, %v1788
      %v1790 = vsel %vm1746, %v1780, %v1789
      %v1792 = vshrl.u32 %v1745, 16
      %v1794 = vrot.slane %v1792, 1
      %v1795 = vshll.u32 %v1745, 16
      %v1797 = vrot.slane %v1795, 2
      %v1798 = vor.u32 %v1794, %v1797
      %v1799 = vsel %vm1746, %v1789, %v1798
      %v1821 = vunpack.c.l.b16 %v1702
      %v1822 = vunpack.c.l.b16 %v1703
      %v1823 = vunpack.c.l.b16 %v1704
      %v1824 = vunpack.c.l.b16 %v1705
      %v1825 = vunpack.c.l.b16 %v1706
      %v1826 = vunpack.c.l.b16 %v1707
      %v1827 = vunpack.c.l.b16 %v1708
      %v1828 = vunpack.c.l.b16 %v1709
      %v1829 = vunpack.c.l.b16 %v1710
      %v1830 = vunpack.c.l.b16 %v1711
      %v1831 = vunpack.c.l.b16 %v1712
      %v1832 = vunpack.c.l.b16 %v1713
      %v1833 = vunpack.c.l.b16 %v1714
      %v1834 = vunpack.c.l.b16 %v1715
      %v1835 = vunpack.c.l.b16 %v1716
      %v1836 = vunpack.c.l.b16 %v1717
      %v1837 = vpack.c.b16 %v1822, %v1821
      %v1838 = vpack.c.b16 %v1824, %v1823
      %v1839 = vpack.c.b16 %v1826, %v1825
      %v1840 = vpack.c.b16 %v1828, %v1827
      %v1841 = vpack.c.b16 %v1830, %v1829
      %v1842 = vpack.c.b16 %v1832, %v1831
      %v1843 = vpack.c.b16 %v1834, %v1833
      %v1844 = vpack.c.b16 %v1836, %v1835
      %1853 = vmatprep.subr.bf16.mxu0 0
      %1854 = vmatpush1.bf16.msra.mxu0 %v1844
      %1855 = vmatprep.subr.bf16.mxu0 0
      %1856 = vmatpush1.bf16.msra.mxu0 %v1843
      %1857 = vmatprep.subr.bf16.mxu0 0
      %1858 = vmatpush1.bf16.msra.mxu0 %v1842
      %1859 = vmatprep.subr.bf16.mxu0 0
      %1860 = vmatpush1.bf16.msra.mxu0 %v1841
      %1861 = vmatprep.subr.bf16.mxu0 0
      %1862 = vmatpush1.bf16.msra.mxu0 %v1840
      %1863 = vmatprep.subr.bf16.mxu0 0
      %1864 = vmatpush1.bf16.msra.mxu0 %v1839
      %1865 = vmatprep.subr.bf16.mxu0 0
      %1866 = vmatpush1.bf16.msra.mxu0 %v1838
      %1867 = vmatprep.subr.bf16.mxu0 0
      %1868 = vmatpush1.bf16.msra.mxu0 %v1837
      %1869 = vmatprep.subr.bf16.mxu0 0
      %1870 = vmatpush2.bf16.msra.mxu0 0
      %1871 = vmatprep.subr.bf16.mxu0 0
      %1872 = vmatpush2.bf16.msra.mxu0 0
      %1873 = vmatprep.subr.bf16.mxu0 0
      %1874 = vmatpush2.bf16.msra.mxu0 0
      %1875 = vmatprep.subr.bf16.mxu0 0
      %1876 = vmatpush2.bf16.msra.mxu0 0
      %1877 = vmatprep.subr.bf16.mxu0 0
      %1878 = vmatpush2.bf16.msra.mxu0 0
      %1879 = vmatprep.subr.bf16.mxu0 0
      %1880 = vmatpush2.bf16.msra.mxu0 0
      %1881 = vmatprep.subr.bf16.mxu0 0
      %1882 = vmatpush2.bf16.msra.mxu0 0
      %1883 = vmatprep.subr.bf16.mxu0 0
      %1884 = vmatpush2.bf16.msra.mxu0 0
      %1885 = vmatprep.mubr.bf16.mxu0 0
      %1886 = vmatmul.mubr.bf16.gmra.mxu0 %v1763
      %v1887 = vpop.f32.mrf.mxu0
      %v1888 = vadd.f32 0.0, %v1887
      %v1889 = vpop.f32.mrf.mxu0
      %v1890 = vpop.f32.mrf.mxu0
      %v1891 = vadd.f32 0.0, %v1890
      %v1892 = vpop.f32.mrf.mxu0
      %1893 = vmatprep.mubr.bf16.mxu0 0
      %1894 = vmatmul.mubr.bf16.gmra.mxu0 %v1772
      %v1895 = vpop.f32.mrf.mxu0
      %v1896 = vadd.f32 0.0, %v1895
      %v1897 = vpop.f32.mrf.mxu0
      %v1898 = vpop.f32.mrf.mxu0
      %v1899 = vadd.f32 0.0, %v1898
      %v1900 = vpop.f32.mrf.mxu0
      %1901 = vmatprep.mubr.bf16.mxu0 0
      %1902 = vmatmul.mubr.bf16.gmra.mxu0 %v1781
      %v1903 = vpop.f32.mrf.mxu0
      %v1904 = vadd.f32 0.0, %v1903
      %v1905 = vpop.f32.mrf.mxu0
      %v1906 = vpop.f32.mrf.mxu0
      %v1907 = vadd.f32 0.0, %v1906
      %v1908 = vpop.f32.mrf.mxu0
      %1909 = vmatprep.mubr.bf16.mxu0 0
      %1910 = vmatmul.mubr.bf16.gmra.mxu0 %v1790
      %v1911 = vpop.f32.mrf.mxu0
      %v1912 = vadd.f32 0.0, %v1911
      %v1913 = vpop.f32.mrf.mxu0
      %v1914 = vpop.f32.mrf.mxu0
      %v1915 = vadd.f32 0.0, %v1914
      %v1916 = vpop.f32.mrf.mxu0
      %1917 = vmatprep.mubr.bf16.mxu0 0
      %1918 = vmatmul.mubr.bf16.gmra.mxu0 %v1799
      %v1919 = vpop.f32.mrf.mxu0
      %v1920 = vadd.f32 0.0, %v1919
      %v1921 = vpop.f32.mrf.mxu0
      %v1922 = vpop.f32.mrf.mxu0
      %v1923 = vadd.f32 0.0, %v1922
      %v1924 = vpop.f32.mrf.mxu0
      %1925 = vdwg.mxu0
      %v1926 = vadd.f32 %v1680, %v1888
      %v1927 = vadd.f32 %v1681, %v1891
      %v1928 = vadd.f32 %v1682, %v1896
      %v1929 = vadd.f32 %v1683, %v1899
      %v1930 = vadd.f32 %v1684, %v1904
      %v1931 = vadd.f32 %v1685, %v1907
      %v1932 = vadd.f32 %v1686, %v1912
      %v1933 = vadd.f32 %v1687, %v1915
      %v1934 = vadd.f32 %v1688, %v1920
      %v1935 = vadd.f32 %v1689, %v1923
      %1936 = vst [vmem:[#allocation3] sm:$0xff] %v1926
      %1937 = vst [vmem:[#allocation3 + $0x8] sm:$0xff] %v1927
      %1938 = vst [vmem:[#allocation3 + $0x10] sm:$0xff] %v1928
      %1939 = vst [vmem:[#allocation3 + $0x18] sm:$0xff] %v1929
      %1940 = vst [vmem:[#allocation3 + $0x20] sm:$0xff] %v1930
      %1941 = vst [vmem:[#allocation3 + $0x28] sm:$0xff] %v1931
      %1942 = vst [vmem:[#allocation3 + $0x30] sm:$0xff] %v1932
      %1943 = vst [vmem:[#allocation3 + $0x38] sm:$0xff] %v1933
      %1944 = vst [vmem:[#allocation3 + $0x40] sm:$0xff] %v1934
      %1945 = vst [vmem:[#allocation3 + $0x48] sm:$0xff] %v1935
      %v1946 = vld [vmem:[#allocation3] sm:$0xff]
      %v1947 = vld [vmem:[#allocation3 + $0x8] sm:$0xff]
      %v1948 = vld [vmem:[#allocation3 + $0x10] sm:$0xff]
      %v1949 = vld [vmem:[#allocation3 + $0x18] sm:$0xff]
      %v1950 = vld [vmem:[#allocation3 + $0x20] sm:$0xff]
      %v1951 = vld [vmem:[#allocation3 + $0x28] sm:$0xff]
      %v1952 = vld [vmem:[#allocation3 + $0x30] sm:$0xff]
      %v1953 = vld [vmem:[#allocation3 + $0x38] sm:$0xff]
      %v1954 = vld [vmem:[#allocation3 + $0x40] sm:$0xff]
      %v1955 = vld [vmem:[#allocation3 + $0x48] sm:$0xff]
      %v1956 = vld [vmem:[#allocation2 + $0x4] sm:$0xc]
      %v1957 = vld [vmem:[#allocation2 + $0x8] sm:$0xf]
      %v1958 = vld [vmem:[#allocation2 + $0xc] sm:$0xf]
      %v1959 = vld [vmem:[#allocation2 + $0x10] sm:$0xf]
      %v1960 = vld [vmem:[#allocation2 + $0x14] sm:$0xf]
      %v1961 = vld [vmem:[#allocation2 + $0x18] sm:$0xf]
      %v1962 = vld [vmem:[#allocation2 + $0x1c] sm:$0xf]
      %v1963 = vld [vmem:[#allocation2 + $0x20] sm:$0xf]
      %v1964 = vld [vmem:[#allocation2 + $0x24] sm:$0xf]
      %v1965 = vld [vmem:[#allocation2 + $0x28] sm:$0xf]
      %v1966 = vld [vmem:[#allocation2 + $0x2c] sm:$0x3]
      %s1967 = scalar_lea.vmem %s3, 320
      %v1968 = vld [vmem:[%s1967] sm:$0xf]
      %v1969 = vld [vmem:[%s1967 + $0x4] sm:$0xf]
      %v1970 = vld [vmem:[%s1967 + $0x8] sm:$0xf]
      %v1971 = vld [vmem:[%s1967 + $0xc] sm:$0xf]
      %v1972 = vld [vmem:[%s1967 + $0x10] sm:$0xf]
      %v1973 = vld [vmem:[%s1967 + $0x14] sm:$0xf]
      %v1974 = vld [vmem:[%s1967 + $0x18] sm:$0xf]
      %v1975 = vld [vmem:[%s1967 + $0x1c] sm:$0xf]
      %v1976 = vld [vmem:[%s1967 + $0x20] sm:$0xf]
      %v1977 = vld [vmem:[%s1967 + $0x24] sm:$0xf]
      %v1978 = vld [vmem:[%s1967 + $0x28] sm:$0xf]
      %v1979 = vld [vmem:[%s1967 + $0x2c] sm:$0xf]
      %v1980 = vld [vmem:[%s1967 + $0x30] sm:$0xf]
      %v1981 = vld [vmem:[%s1967 + $0x34] sm:$0xf]
      %v1982 = vld [vmem:[%s1967 + $0x38] sm:$0xf]
      %v1983 = vld [vmem:[%s1967 + $0x3c] sm:$0xf]
      %v1995 = vunpack.c.l.b16 %v1956
      %v1996 = vunpack.c.l.b16 %v1957
      %v1997 = vunpack.c.l.b16 %v1958
      %v1998 = vunpack.c.l.b16 %v1959
      %v1999 = vunpack.c.l.b16 %v1960
      %v2000 = vunpack.c.l.b16 %v1961
      %v2001 = vunpack.c.l.b16 %v1962
      %v2002 = vunpack.c.l.b16 %v1963
      %v2003 = vunpack.c.l.b16 %v1964
      %v2004 = vunpack.c.l.b16 %v1965
      %v2005 = vunpack.c.l.b16 %v1966
      %v2006 = vpack.c.b16 %v1996, %v1995
      %v2007 = vpack.c.b16 %v1998, %v1997
      %v2008 = vpack.c.b16 %v2000, %v1999
      %v2009 = vpack.c.b16 %v2002, %v2001
      %v2010 = vpack.c.b16 %v2004, %v2003
      %v2011 = vpack.c.b16 %v2005, %v2005
      %vm2012 = vcmask 1045504
      %v2013 = vrot.slane %v2006, 2
      %v2014 = vrot.slane %v2007, 2
      %v2015 = vsel %vm2012, %v2013, %v2014
      %v2016 = vrot.slane %v2008, 2
      %v2017 = vsel %vm2012, %v2014, %v2016
      %v2018 = vrot.slane %v2009, 2
      %v2019 = vsel %vm2012, %v2016, %v2018
      %v2020 = vrot.slane %v2010, 2
      %v2021 = vsel %vm2012, %v2018, %v2020
      %v2022 = vrot.slane %v2011, 2
      %v2023 = vsel %vm2012, %v2020, %v2022
      %v2045 = vunpack.c.l.b16 %v1968
      %v2046 = vunpack.c.l.b16 %v1969
      %v2047 = vunpack.c.l.b16 %v1970
      %v2048 = vunpack.c.l.b16 %v1971
      %v2049 = vunpack.c.l.b16 %v1972
      %v2050 = vunpack.c.l.b16 %v1973
      %v2051 = vunpack.c.l.b16 %v1974
      %v2052 = vunpack.c.l.b16 %v1975
      %v2053 = vunpack.c.l.b16 %v1976
      %v2054 = vunpack.c.l.b16 %v1977
      %v2055 = vunpack.c.l.b16 %v1978
      %v2056 = vunpack.c.l.b16 %v1979
      %v2057 = vunpack.c.l.b16 %v1980
      %v2058 = vunpack.c.l.b16 %v1981
      %v2059 = vunpack.c.l.b16 %v1982
      %v2060 = vunpack.c.l.b16 %v1983
      %v2061 = vpack.c.b16 %v2046, %v2045
      %v2062 = vpack.c.b16 %v2048, %v2047
      %v2063 = vpack.c.b16 %v2050, %v2049
      %v2064 = vpack.c.b16 %v2052, %v2051
      %v2065 = vpack.c.b16 %v2054, %v2053
      %v2066 = vpack.c.b16 %v2056, %v2055
      %v2067 = vpack.c.b16 %v2058, %v2057
      %v2068 = vpack.c.b16 %v2060, %v2059
      %2077 = vmatprep.subr.bf16.mxu0 0
      %2078 = vmatpush1.bf16.msra.mxu0 %v2068
      %2079 = vmatprep.subr.bf16.mxu0 0
      %2080 = vmatpush1.bf16.msra.mxu0 %v2067
      %2081 = vmatprep.subr.bf16.mxu0 0
      %2082 = vmatpush1.bf16.msra.mxu0 %v2066
      %2083 = vmatprep.subr.bf16.mxu0 0
      %2084 = vmatpush1.bf16.msra.mxu0 %v2065
      %2085 = vmatprep.subr.bf16.mxu0 0
      %2086 = vmatpush1.bf16.msra.mxu0 %v2064
      %2087 = vmatprep.subr.bf16.mxu0 0
      %2088 = vmatpush1.bf16.msra.mxu0 %v2063
      %2089 = vmatprep.subr.bf16.mxu0 0
      %2090 = vmatpush1.bf16.msra.mxu0 %v2062
      %2091 = vmatprep.subr.bf16.mxu0 0
      %2092 = vmatpush1.bf16.msra.mxu0 %v2061
      %2093 = vmatprep.subr.bf16.mxu0 0
      %2094 = vmatpush2.bf16.msra.mxu0 0
      %2095 = vmatprep.subr.bf16.mxu0 0
      %2096 = vmatpush2.bf16.msra.mxu0 0
      %2097 = vmatprep.subr.bf16.mxu0 0
      %2098 = vmatpush2.bf16.msra.mxu0 0
      %2099 = vmatprep.subr.bf16.mxu0 0
      %2100 = vmatpush2.bf16.msra.mxu0 0
      %2101 = vmatprep.subr.bf16.mxu0 0
      %2102 = vmatpush2.bf16.msra.mxu0 0
      %2103 = vmatprep.subr.bf16.mxu0 0
      %2104 = vmatpush2.bf16.msra.mxu0 0
      %2105 = vmatprep.subr.bf16.mxu0 0
      %2106 = vmatpush2.bf16.msra.mxu0 0
      %2107 = vmatprep.subr.bf16.mxu0 0
      %2108 = vmatpush2.bf16.msra.mxu0 0
      %2109 = vmatprep.mubr.bf16.mxu0 0
      %2110 = vmatmul.mubr.bf16.gmra.mxu0 %v2015
      %v2111 = vpop.f32.mrf.mxu0
      %v2112 = vadd.f32 0.0, %v2111
      %v2113 = vpop.f32.mrf.mxu0
      %v2114 = vpop.f32.mrf.mxu0
      %v2115 = vadd.f32 0.0, %v2114
      %v2116 = vpop.f32.mrf.mxu0
      %2117 = vmatprep.mubr.bf16.mxu0 0
      %2118 = vmatmul.mubr.bf16.gmra.mxu0 %v2017
      %v2119 = vpop.f32.mrf.mxu0
      %v2120 = vadd.f32 0.0, %v2119
      %v2121 = vpop.f32.mrf.mxu0
      %v2122 = vpop.f32.mrf.mxu0
      %v2123 = vadd.f32 0.0, %v2122
      %v2124 = vpop.f32.mrf.mxu0
      %2125 = vmatprep.mubr.bf16.mxu0 0
      %2126 = vmatmul.mubr.bf16.gmra.mxu0 %v2019
      %v2127 = vpop.f32.mrf.mxu0
      %v2128 = vadd.f32 0.0, %v2127
      %v2129 = vpop.f32.mrf.mxu0
      %v2130 = vpop.f32.mrf.mxu0
      %v2131 = vadd.f32 0.0, %v2130
      %v2132 = vpop.f32.mrf.mxu0
      %2133 = vmatprep.mubr.bf16.mxu0 0
      %2134 = vmatmul.mubr.bf16.gmra.mxu0 %v2021
      %v2135 = vpop.f32.mrf.mxu0
      %v2136 = vadd.f32 0.0, %v2135
      %v2137 = vpop.f32.mrf.mxu0
      %v2138 = vpop.f32.mrf.mxu0
      %v2139 = vadd.f32 0.0, %v2138
      %v2140 = vpop.f32.mrf.mxu0
      %2141 = vmatprep.mubr.bf16.mxu0 0
      %2142 = vmatmul.mubr.bf16.gmra.mxu0 %v2023
      %v2143 = vpop.f32.mrf.mxu0
      %v2144 = vadd.f32 0.0, %v2143
      %v2145 = vpop.f32.mrf.mxu0
      %v2146 = vpop.f32.mrf.mxu0
      %v2147 = vadd.f32 0.0, %v2146
      %v2148 = vpop.f32.mrf.mxu0
      %2149 = vdwg.mxu0
      %v2150 = vadd.f32 %v1946, %v2112
      %v2151 = vadd.f32 %v1947, %v2115
      %v2152 = vadd.f32 %v1948, %v2120
      %v2153 = vadd.f32 %v1949, %v2123
      %v2154 = vadd.f32 %v1950, %v2128
      %v2155 = vadd.f32 %v1951, %v2131
      %v2156 = vadd.f32 %v1952, %v2136
      %v2157 = vadd.f32 %v1953, %v2139
      %v2158 = vadd.f32 %v1954, %v2144
      %v2159 = vadd.f32 %v1955, %v2147
      %2160 = vst [vmem:[#allocation3] sm:$0xff] %v2150
      %2161 = vst [vmem:[#allocation3 + $0x8] sm:$0xff] %v2151
      %2162 = vst [vmem:[#allocation3 + $0x10] sm:$0xff] %v2152
      %2163 = vst [vmem:[#allocation3 + $0x18] sm:$0xff] %v2153
      %2164 = vst [vmem:[#allocation3 + $0x20] sm:$0xff] %v2154
      %2165 = vst [vmem:[#allocation3 + $0x28] sm:$0xff] %v2155
      %2166 = vst [vmem:[#allocation3 + $0x30] sm:$0xff] %v2156
      %2167 = vst [vmem:[#allocation3 + $0x38] sm:$0xff] %v2157
      %2168 = vst [vmem:[#allocation3 + $0x40] sm:$0xff] %v2158
      %2169 = vst [vmem:[#allocation3 + $0x48] sm:$0xff] %v2159
      %v2170 = vld [vmem:[#allocation3] sm:$0xff]
      %v2171 = vld [vmem:[#allocation3 + $0x8] sm:$0xff]
      %v2172 = vld [vmem:[#allocation3 + $0x10] sm:$0xff]
      %v2173 = vld [vmem:[#allocation3 + $0x18] sm:$0xff]
      %v2174 = vld [vmem:[#allocation3 + $0x20] sm:$0xff]
      %v2175 = vld [vmem:[#allocation3 + $0x28] sm:$0xff]
      %v2176 = vld [vmem:[#allocation3 + $0x30] sm:$0xff]
      %v2177 = vld [vmem:[#allocation3 + $0x38] sm:$0xff]
      %v2178 = vld [vmem:[#allocation3 + $0x40] sm:$0xff]
      %v2179 = vld [vmem:[#allocation3 + $0x48] sm:$0xff]
      %v2180 = vld [vmem:[#allocation2 + $0x8] sm:$0xc]
      %v2181 = vld [vmem:[#allocation2 + $0xc] sm:$0xf]
      %v2182 = vld [vmem:[#allocation2 + $0x10] sm:$0xf]
      %v2183 = vld [vmem:[#allocation2 + $0x14] sm:$0xf]
      %v2184 = vld [vmem:[#allocation2 + $0x18] sm:$0xf]
      %v2185 = vld [vmem:[#allocation2 + $0x1c] sm:$0xf]
      %v2186 = vld [vmem:[#allocation2 + $0x20] sm:$0xf]
      %v2187 = vld [vmem:[#allocation2 + $0x24] sm:$0xf]
      %v2188 = vld [vmem:[#allocation2 + $0x28] sm:$0xf]
      %v2189 = vld [vmem:[#allocation2 + $0x2c] sm:$0xf]
      %v2190 = vld [vmem:[#allocation2 + $0x30] sm:$0x3]
      %s2191 = scalar_lea.vmem %s3, 384
      %v2192 = vld [vmem:[%s2191] sm:$0xf]
      %v2193 = vld [vmem:[%s2191 + $0x4] sm:$0xf]
      %v2194 = vld [vmem:[%s2191 + $0x8] sm:$0xf]
      %v2195 = vld [vmem:[%s2191 + $0xc] sm:$0xf]
      %v2196 = vld [vmem:[%s2191 + $0x10] sm:$0xf]
      %v2197 = vld [vmem:[%s2191 + $0x14] sm:$0xf]
      %v2198 = vld [vmem:[%s2191 + $0x18] sm:$0xf]
      %v2199 = vld [vmem:[%s2191 + $0x1c] sm:$0xf]
      %v2200 = vld [vmem:[%s2191 + $0x20] sm:$0xf]
      %v2201 = vld [vmem:[%s2191 + $0x24] sm:$0xf]
      %v2202 = vld [vmem:[%s2191 + $0x28] sm:$0xf]
      %v2203 = vld [vmem:[%s2191 + $0x2c] sm:$0xf]
      %v2204 = vld [vmem:[%s2191 + $0x30] sm:$0xf]
      %v2205 = vld [vmem:[%s2191 + $0x34] sm:$0xf]
      %v2206 = vld [vmem:[%s2191 + $0x38] sm:$0xf]
      %v2207 = vld [vmem:[%s2191 + $0x3c] sm:$0xf]
      %v2219 = vunpack.c.l.b16 %v2180
      %v2220 = vunpack.c.l.b16 %v2181
      %v2221 = vunpack.c.l.b16 %v2182
      %v2222 = vunpack.c.l.b16 %v2183
      %v2223 = vunpack.c.l.b16 %v2184
      %v2224 = vunpack.c.l.b16 %v2185
      %v2225 = vunpack.c.l.b16 %v2186
      %v2226 = vunpack.c.l.b16 %v2187
      %v2227 = vunpack.c.l.b16 %v2188
      %v2228 = vunpack.c.l.b16 %v2189
      %v2229 = vunpack.c.l.b16 %v2190
      %v2230 = vpack.c.b16 %v2220, %v2219
      %v2231 = vpack.c.b16 %v2222, %v2221
      %v2232 = vpack.c.b16 %v2224, %v2223
      %v2233 = vpack.c.b16 %v2226, %v2225
      %v2234 = vpack.c.b16 %v2228, %v2227
      %v2235 = vpack.c.b16 %v2229, %v2229
      %v2236 = vrot.slane %v2230, 2
      %v2237 = vrot.slane %v2231, 2
      %v2238 = vsel %vm2012, %v2236, %v2237
      %v2239 = vrot.slane %v2232, 2
      %v2240 = vsel %vm2012, %v2237, %v2239
      %v2241 = vrot.slane %v2233, 2
      %v2242 = vsel %vm2012, %v2239, %v2241
      %v2243 = vrot.slane %v2234, 2
      %v2244 = vsel %vm2012, %v2241, %v2243
      %v2245 = vrot.slane %v2235, 2
      %v2246 = vsel %vm2012, %v2243, %v2245
      %v2268 = vunpack.c.l.b16 %v2192
      %v2269 = vunpack.c.l.b16 %v2193
      %v2270 = vunpack.c.l.b16 %v2194
      %v2271 = vunpack.c.l.b16 %v2195
      %v2272 = vunpack.c.l.b16 %v2196
      %v2273 = vunpack.c.l.b16 %v2197
      %v2274 = vunpack.c.l.b16 %v2198
      %v2275 = vunpack.c.l.b16 %v2199
      %v2276 = vunpack.c.l.b16 %v2200
      %v2277 = vunpack.c.l.b16 %v2201
      %v2278 = vunpack.c.l.b16 %v2202
      %v2279 = vunpack.c.l.b16 %v2203
      %v2280 = vunpack.c.l.b16 %v2204
      %v2281 = vunpack.c.l.b16 %v2205
      %v2282 = vunpack.c.l.b16 %v2206
      %v2283 = vunpack.c.l.b16 %v2207
      %v2284 = vpack.c.b16 %v2269, %v2268
      %v2285 = vpack.c.b16 %v2271, %v2270
      %v2286 = vpack.c.b16 %v2273, %v2272
      %v2287 = vpack.c.b16 %v2275, %v2274
      %v2288 = vpack.c.b16 %v2277, %v2276
      %v2289 = vpack.c.b16 %v2279, %v2278
      %v2290 = vpack.c.b16 %v2281, %v2280
      %v2291 = vpack.c.b16 %v2283, %v2282
      %2300 = vmatprep.subr.bf16.mxu0 0
      %2301 = vmatpush1.bf16.msra.mxu0 %v2291
      %2302 = vmatprep.subr.bf16.mxu0 0
      %2303 = vmatpush1.bf16.msra.mxu0 %v2290
      %2304 = vmatprep.subr.bf16.mxu0 0
      %2305 = vmatpush1.bf16.msra.mxu0 %v2289
      %2306 = vmatprep.subr.bf16.mxu0 0
      %2307 = vmatpush1.bf16.msra.mxu0 %v2288
      %2308 = vmatprep.subr.bf16.mxu0 0
      %2309 = vmatpush1.bf16.msra.mxu0 %v2287
      %2310 = vmatprep.subr.bf16.mxu0 0
      %2311 = vmatpush1.bf16.msra.mxu0 %v2286
      %2312 = vmatprep.subr.bf16.mxu0 0
      %2313 = vmatpush1.bf16.msra.mxu0 %v2285
      %2314 = vmatprep.subr.bf16.mxu0 0
      %2315 = vmatpush1.bf16.msra.mxu0 %v2284
      %2316 = vmatprep.subr.bf16.mxu0 0
      %2317 = vmatpush2.bf16.msra.mxu0 0
      %2318 = vmatprep.subr.bf16.mxu0 0
      %2319 = vmatpush2.bf16.msra.mxu0 0
      %2320 = vmatprep.subr.bf16.mxu0 0
      %2321 = vmatpush2.bf16.msra.mxu0 0
      %2322 = vmatprep.subr.bf16.mxu0 0
      %2323 = vmatpush2.bf16.msra.mxu0 0
      %2324 = vmatprep.subr.bf16.mxu0 0
      %2325 = vmatpush2.bf16.msra.mxu0 0
      %2326 = vmatprep.subr.bf16.mxu0 0
      %2327 = vmatpush2.bf16.msra.mxu0 0
      %2328 = vmatprep.subr.bf16.mxu0 0
      %2329 = vmatpush2.bf16.msra.mxu0 0
      %2330 = vmatprep.subr.bf16.mxu0 0
      %2331 = vmatpush2.bf16.msra.mxu0 0
      %2332 = vmatprep.mubr.bf16.mxu0 0
      %2333 = vmatmul.mubr.bf16.gmra.mxu0 %v2238
      %v2334 = vpop.f32.mrf.mxu0
      %v2335 = vadd.f32 0.0, %v2334
      %v2336 = vpop.f32.mrf.mxu0
      %v2337 = vpop.f32.mrf.mxu0
      %v2338 = vadd.f32 0.0, %v2337
      %v2339 = vpop.f32.mrf.mxu0
      %2340 = vmatprep.mubr.bf16.mxu0 0
      %2341 = vmatmul.mubr.bf16.gmra.mxu0 %v2240
      %v2342 = vpop.f32.mrf.mxu0
      %v2343 = vadd.f32 0.0, %v2342
      %v2344 = vpop.f32.mrf.mxu0
      %v2345 = vpop.f32.mrf.mxu0
      %v2346 = vadd.f32 0.0, %v2345
      %v2347 = vpop.f32.mrf.mxu0
      %2348 = vmatprep.mubr.bf16.mxu0 0
      %2349 = vmatmul.mubr.bf16.gmra.mxu0 %v2242
      %v2350 = vpop.f32.mrf.mxu0
      %v2351 = vadd.f32 0.0, %v2350
      %v2352 = vpop.f32.mrf.mxu0
      %v2353 = vpop.f32.mrf.mxu0
      %v2354 = vadd.f32 0.0, %v2353
      %v2355 = vpop.f32.mrf.mxu0
      %2356 = vmatprep.mubr.bf16.mxu0 0
      %2357 = vmatmul.mubr.bf16.gmra.mxu0 %v2244
      %v2358 = vpop.f32.mrf.mxu0
      %v2359 = vadd.f32 0.0, %v2358
      %v2360 = vpop.f32.mrf.mxu0
      %v2361 = vpop.f32.mrf.mxu0
      %v2362 = vadd.f32 0.0, %v2361
      %v2363 = vpop.f32.mrf.mxu0
      %2364 = vmatprep.mubr.bf16.mxu0 0
      %2365 = vmatmul.mubr.bf16.gmra.mxu0 %v2246
      %v2366 = vpop.f32.mrf.mxu0
      %v2367 = vadd.f32 0.0, %v2366
      %v2368 = vpop.f32.mrf.mxu0
      %v2369 = vpop.f32.mrf.mxu0
      %v2370 = vadd.f32 0.0, %v2369
      %v2371 = vpop.f32.mrf.mxu0
      %2372 = vdwg.mxu0
      %v2373 = vadd.f32 %v2170, %v2335
      %v2374 = vadd.f32 %v2171, %v2338
      %v2375 = vadd.f32 %v2172, %v2343
      %v2376 = vadd.f32 %v2173, %v2346
      %v2377 = vadd.f32 %v2174, %v2351
      %v2378 = vadd.f32 %v2175, %v2354
      %v2379 = vadd.f32 %v2176, %v2359
      %v2380 = vadd.f32 %v2177, %v2362
      %v2381 = vadd.f32 %v2178, %v2367
      %v2382 = vadd.f32 %v2179, %v2370
      %2383 = vst [vmem:[#allocation3] sm:$0xff] %v2373
      %2384 = vst [vmem:[#allocation3 + $0x8] sm:$0xff] %v2374
      %2385 = vst [vmem:[#allocation3 + $0x10] sm:$0xff] %v2375
      %2386 = vst [vmem:[#allocation3 + $0x18] sm:$0xff] %v2376
      %2387 = vst [vmem:[#allocation3 + $0x20] sm:$0xff] %v2377
      %2388 = vst [vmem:[#allocation3 + $0x28] sm:$0xff] %v2378
      %2389 = vst [vmem:[#allocation3 + $0x30] sm:$0xff] %v2379
      %2390 = vst [vmem:[#allocation3 + $0x38] sm:$0xff] %v2380
      %2391 = vst [vmem:[#allocation3 + $0x40] sm:$0xff] %v2381
      %2392 = vst [vmem:[#allocation3 + $0x48] sm:$0xff] %v2382
      %v2393 = vld [vmem:[#allocation3] sm:$0xff]
      %v2394 = vld [vmem:[#allocation3 + $0x8] sm:$0xff]
      %v2395 = vld [vmem:[#allocation3 + $0x10] sm:$0xff]
      %v2396 = vld [vmem:[#allocation3 + $0x18] sm:$0xff]
      %v2397 = vld [vmem:[#allocation3 + $0x20] sm:$0xff]
      %v2398 = vld [vmem:[#allocation3 + $0x28] sm:$0xff]
      %v2399 = vld [vmem:[#allocation3 + $0x30] sm:$0xff]
      %v2400 = vld [vmem:[#allocation3 + $0x38] sm:$0xff]
      %v2401 = vld [vmem:[#allocation3 + $0x40] sm:$0xff]
      %v2402 = vld [vmem:[#allocation3 + $0x48] sm:$0xff]
      %v2403 = vld [vmem:[#allocation2 + $0x8] sm:$0xc]
      %v2404 = vld [vmem:[#allocation2 + $0xc] sm:$0xf]
      %v2405 = vld [vmem:[#allocation2 + $0x10] sm:$0xf]
      %v2406 = vld [vmem:[#allocation2 + $0x14] sm:$0xf]
      %v2407 = vld [vmem:[#allocation2 + $0x18] sm:$0xf]
      %v2408 = vld [vmem:[#allocation2 + $0x1c] sm:$0xf]
      %v2409 = vld [vmem:[#allocation2 + $0x20] sm:$0xf]
      %v2410 = vld [vmem:[#allocation2 + $0x24] sm:$0xf]
      %v2411 = vld [vmem:[#allocation2 + $0x28] sm:$0xf]
      %v2412 = vld [vmem:[#allocation2 + $0x2c] sm:$0xf]
      %v2413 = vld [vmem:[#allocation2 + $0x30] sm:$0x7]
      %s2414 = scalar_lea.vmem %s3, 448
      %v2415 = vld [vmem:[%s2414] sm:$0xf]
      %v2416 = vld [vmem:[%s2414 + $0x4] sm:$0xf]
      %v2417 = vld [vmem:[%s2414 + $0x8] sm:$0xf]
      %v2418 = vld [vmem:[%s2414 + $0xc] sm:$0xf]
      %v2419 = vld [vmem:[%s2414 + $0x10] sm:$0xf]
      %v2420 = vld [vmem:[%s2414 + $0x14] sm:$0xf]
      %v2421 = vld [vmem:[%s2414 + $0x18] sm:$0xf]
      %v2422 = vld [vmem:[%s2414 + $0x1c] sm:$0xf]
      %v2423 = vld [vmem:[%s2414 + $0x20] sm:$0xf]
      %v2424 = vld [vmem:[%s2414 + $0x24] sm:$0xf]
      %v2425 = vld [vmem:[%s2414 + $0x28] sm:$0xf]
      %v2426 = vld [vmem:[%s2414 + $0x2c] sm:$0xf]
      %v2427 = vld [vmem:[%s2414 + $0x30] sm:$0xf]
      %v2428 = vld [vmem:[%s2414 + $0x34] sm:$0xf]
      %v2429 = vld [vmem:[%s2414 + $0x38] sm:$0xf]
      %v2430 = vld [vmem:[%s2414 + $0x3c] sm:$0xf]
      %v2442 = vunpack.c.l.b16 %v2403
      %v2443 = vunpack.c.l.b16 %v2404
      %v2444 = vunpack.c.l.b16 %v2405
      %v2445 = vunpack.c.l.b16 %v2406
      %v2446 = vunpack.c.l.b16 %v2407
      %v2447 = vunpack.c.l.b16 %v2408
      %v2448 = vunpack.c.l.b16 %v2409
      %v2449 = vunpack.c.l.b16 %v2410
      %v2450 = vunpack.c.l.b16 %v2411
      %v2451 = vunpack.c.l.b16 %v2412
      %v2452 = vunpack.c.l.b16 %v2413
      %v2453 = vpack.c.b16 %v2443, %v2442
      %v2454 = vpack.c.b16 %v2445, %v2444
      %v2455 = vpack.c.b16 %v2447, %v2446
      %v2456 = vpack.c.b16 %v2449, %v2448
      %v2457 = vpack.c.b16 %v2451, %v2450
      %v2458 = vpack.c.b16 %v2452, %v2452
      %vm2459 = vsmask.f32 5376
      %v2461 = vshrl.u32 %v2453, 16
      %v2463 = vrot.slane %v2461, 2
      %v2464 = vshll.u32 %v2453, 16
      %v2466 = vrot.slane %v2464, 3
      %v2467 = vor.u32 %v2463, %v2466
      %v2469 = vshrl.u32 %v2454, 16
      %v2471 = vrot.slane %v2469, 2
      %v2472 = vshll.u32 %v2454, 16
      %v2474 = vrot.slane %v2472, 3
      %v2475 = vor.u32 %v2471, %v2474
      %v2476 = vsel %vm2459, %v2467, %v2475
      %v2478 = vshrl.u32 %v2455, 16
      %v2480 = vrot.slane %v2478, 2
      %v2481 = vshll.u32 %v2455, 16
      %v2483 = vrot.slane %v2481, 3
      %v2484 = vor.u32 %v2480, %v2483
      %v2485 = vsel %vm2459, %v2475, %v2484
      %v2487 = vshrl.u32 %v2456, 16
      %v2489 = vrot.slane %v2487, 2
      %v2490 = vshll.u32 %v2456, 16
      %v2492 = vrot.slane %v2490, 3
      %v2493 = vor.u32 %v2489, %v2492
      %v2494 = vsel %vm2459, %v2484, %v2493
      %v2496 = vshrl.u32 %v2457, 16
      %v2498 = vrot.slane %v2496, 2
      %v2499 = vshll.u32 %v2457, 16
      %v2501 = vrot.slane %v2499, 3
      %v2502 = vor.u32 %v2498, %v2501
      %v2503 = vsel %vm2459, %v2493, %v2502
      %v2505 = vshrl.u32 %v2458, 16
      %v2507 = vrot.slane %v2505, 2
      %v2508 = vshll.u32 %v2458, 16
      %v2510 = vrot.slane %v2508, 3
      %v2511 = vor.u32 %v2507, %v2510
      %v2512 = vsel %vm2459, %v2502, %v2511
      %v2534 = vunpack.c.l.b16 %v2415
      %v2535 = vunpack.c.l.b16 %v2416
      %v2536 = vunpack.c.l.b16 %v2417
      %v2537 = vunpack.c.l.b16 %v2418
      %v2538 = vunpack.c.l.b16 %v2419
      %v2539 = vunpack.c.l.b16 %v2420
      %v2540 = vunpack.c.l.b16 %v2421
      %v2541 = vunpack.c.l.b16 %v2422
      %v2542 = vunpack.c.l.b16 %v2423
      %v2543 = vunpack.c.l.b16 %v2424
      %v2544 = vunpack.c.l.b16 %v2425
      %v2545 = vunpack.c.l.b16 %v2426
      %v2546 = vunpack.c.l.b16 %v2427
      %v2547 = vunpack.c.l.b16 %v2428
      %v2548 = vunpack.c.l.b16 %v2429
      %v2549 = vunpack.c.l.b16 %v2430
      %v2550 = vpack.c.b16 %v2535, %v2534
      %v2551 = vpack.c.b16 %v2537, %v2536
      %v2552 = vpack.c.b16 %v2539, %v2538
      %v2553 = vpack.c.b16 %v2541, %v2540
      %v2554 = vpack.c.b16 %v2543, %v2542
      %v2555 = vpack.c.b16 %v2545, %v2544
      %v2556 = vpack.c.b16 %v2547, %v2546
      %v2557 = vpack.c.b16 %v2549, %v2548
      %2566 = vmatprep.subr.bf16.mxu0 0
      %2567 = vmatpush1.bf16.msra.mxu0 %v2557
      %2568 = vmatprep.subr.bf16.mxu0 0
      %2569 = vmatpush1.bf16.msra.mxu0 %v2556
      %2570 = vmatprep.subr.bf16.mxu0 0
      %2571 = vmatpush1.bf16.msra.mxu0 %v2555
      %2572 = vmatprep.subr.bf16.mxu0 0
      %2573 = vmatpush1.bf16.msra.mxu0 %v2554
      %2574 = vmatprep.subr.bf16.mxu0 0
      %2575 = vmatpush1.bf16.msra.mxu0 %v2553
      %2576 = vmatprep.subr.bf16.mxu0 0
      %2577 = vmatpush1.bf16.msra.mxu0 %v2552
      %2578 = vmatprep.subr.bf16.mxu0 0
      %2579 = vmatpush1.bf16.msra.mxu0 %v2551
      %2580 = vmatprep.subr.bf16.mxu0 0
      %2581 = vmatpush1.bf16.msra.mxu0 %v2550
      %2582 = vmatprep.subr.bf16.mxu0 0
      %2583 = vmatpush2.bf16.msra.mxu0 0
      %2584 = vmatprep.subr.bf16.mxu0 0
      %2585 = vmatpush2.bf16.msra.mxu0 0
      %2586 = vmatprep.subr.bf16.mxu0 0
      %2587 = vmatpush2.bf16.msra.mxu0 0
      %2588 = vmatprep.subr.bf16.mxu0 0
      %2589 = vmatpush2.bf16.msra.mxu0 0
      %2590 = vmatprep.subr.bf16.mxu0 0
      %2591 = vmatpush2.bf16.msra.mxu0 0
      %2592 = vmatprep.subr.bf16.mxu0 0
      %2593 = vmatpush2.bf16.msra.mxu0 0
      %2594 = vmatprep.subr.bf16.mxu0 0
      %2595 = vmatpush2.bf16.msra.mxu0 0
      %2596 = vmatprep.subr.bf16.mxu0 0
      %2597 = vmatpush2.bf16.msra.mxu0 0
      %2598 = vmatprep.mubr.bf16.mxu0 0
      %2599 = vmatmul.mubr.bf16.gmra.mxu0 %v2476
      %v2600 = vpop.f32.mrf.mxu0
      %v2601 = vadd.f32 0.0, %v2600
      %v2602 = vpop.f32.mrf.mxu0
      %v2603 = vpop.f32.mrf.mxu0
      %v2604 = vadd.f32 0.0, %v2603
      %v2605 = vpop.f32.mrf.mxu0
      %2606 = vmatprep.mubr.bf16.mxu0 0
      %2607 = vmatmul.mubr.bf16.gmra.mxu0 %v2485
      %v2608 = vpop.f32.mrf.mxu0
      %v2609 = vadd.f32 0.0, %v2608
      %v2610 = vpop.f32.mrf.mxu0
      %v2611 = vpop.f32.mrf.mxu0
      %v2612 = vadd.f32 0.0, %v2611
      %v2613 = vpop.f32.mrf.mxu0
      %2614 = vmatprep.mubr.bf16.mxu0 0
      %2615 = vmatmul.mubr.bf16.gmra.mxu0 %v2494
      %v2616 = vpop.f32.mrf.mxu0
      %v2617 = vadd.f32 0.0, %v2616
      %v2618 = vpop.f32.mrf.mxu0
      %v2619 = vpop.f32.mrf.mxu0
      %v2620 = vadd.f32 0.0, %v2619
      %v2621 = vpop.f32.mrf.mxu0
      %2622 = vmatprep.mubr.bf16.mxu0 0
      %2623 = vmatmul.mubr.bf16.gmra.mxu0 %v2503
      %v2624 = vpop.f32.mrf.mxu0
      %v2625 = vadd.f32 0.0, %v2624
      %v2626 = vpop.f32.mrf.mxu0
      %v2627 = vpop.f32.mrf.mxu0
      %v2628 = vadd.f32 0.0, %v2627
      %v2629 = vpop.f32.mrf.mxu0
      %2630 = vmatprep.mubr.bf16.mxu0 0
      %2631 = vmatmul.mubr.bf16.gmra.mxu0 %v2512
      %v2632 = vpop.f32.mrf.mxu0
      %v2633 = vadd.f32 0.0, %v2632
      %v2634 = vpop.f32.mrf.mxu0
      %v2635 = vpop.f32.mrf.mxu0
      %v2636 = vadd.f32 0.0, %v2635
      %v2637 = vpop.f32.mrf.mxu0
      %2638 = vdwg.mxu0
      %v2639 = vadd.f32 %v2393, %v2601
      %v2640 = vadd.f32 %v2394, %v2604
      %v2641 = vadd.f32 %v2395, %v2609
      %v2642 = vadd.f32 %v2396, %v2612
      %v2643 = vadd.f32 %v2397, %v2617
      %v2644 = vadd.f32 %v2398, %v2620
      %v2645 = vadd.f32 %v2399, %v2625
      %v2646 = vadd.f32 %v2400, %v2628
      %v2647 = vadd.f32 %v2401, %v2633
      %v2648 = vadd.f32 %v2402, %v2636
      %2649 = vst [vmem:[#allocation3] sm:$0xff] %v2639
      %2650 = vst [vmem:[#allocation3 + $0x8] sm:$0xff] %v2640
      %2651 = vst [vmem:[#allocation3 + $0x10] sm:$0xff] %v2641
      %2652 = vst [vmem:[#allocation3 + $0x18] sm:$0xff] %v2642
      %2653 = vst [vmem:[#allocation3 + $0x20] sm:$0xff] %v2643
      %2654 = vst [vmem:[#allocation3 + $0x28] sm:$0xff] %v2644
      %2655 = vst [vmem:[#allocation3 + $0x30] sm:$0xff] %v2645
      %2656 = vst [vmem:[#allocation3 + $0x38] sm:$0xff] %v2646
      %2657 = vst [vmem:[#allocation3 + $0x40] sm:$0xff] %v2647
      %2658 = vst [vmem:[#allocation3 + $0x48] sm:$0xff] %v2648
      %v2659 = vld [vmem:[#allocation3] sm:$0xff]
      %v2660 = vld [vmem:[#allocation3 + $0x8] sm:$0xff]
      %v2661 = vld [vmem:[#allocation3 + $0x10] sm:$0xff]
      %v2662 = vld [vmem:[#allocation3 + $0x18] sm:$0xff]
      %v2663 = vld [vmem:[#allocation3 + $0x20] sm:$0xff]
      %v2664 = vld [vmem:[#allocation3 + $0x28] sm:$0xff]
      %v2665 = vld [vmem:[#allocation3 + $0x30] sm:$0xff]
      %v2666 = vld [vmem:[#allocation3 + $0x38] sm:$0xff]
      %v2667 = vld [vmem:[#allocation3 + $0x40] sm:$0xff]
      %v2668 = vld [vmem:[#allocation3 + $0x48] sm:$0xff]
      %v2669 = vld [vmem:[#allocation2 + $0x8] sm:$0x8]
      %v2670 = vld [vmem:[#allocation2 + $0xc] sm:$0xf]
      %v2671 = vld [vmem:[#allocation2 + $0x10] sm:$0xf]
      %v2672 = vld [vmem:[#allocation2 + $0x14] sm:$0xf]
      %v2673 = vld [vmem:[#allocation2 + $0x18] sm:$0xf]
      %v2674 = vld [vmem:[#allocation2 + $0x1c] sm:$0xf]
      %v2675 = vld [vmem:[#allocation2 + $0x20] sm:$0xf]
      %v2676 = vld [vmem:[#allocation2 + $0x24] sm:$0xf]
      %v2677 = vld [vmem:[#allocation2 + $0x28] sm:$0xf]
      %v2678 = vld [vmem:[#allocation2 + $0x2c] sm:$0xf]
      %v2679 = vld [vmem:[#allocation2 + $0x30] sm:$0x7]
      %s2680 = scalar_lea.vmem %s3, 512
      %v2681 = vld [vmem:[%s2680] sm:$0xf]
      %v2682 = vld [vmem:[%s2680 + $0x4] sm:$0xf]
      %v2683 = vld [vmem:[%s2680 + $0x8] sm:$0xf]
      %v2684 = vld [vmem:[%s2680 + $0xc] sm:$0xf]
      %v2685 = vld [vmem:[%s2680 + $0x10] sm:$0xf]
      %v2686 = vld [vmem:[%s2680 + $0x14] sm:$0xf]
      %v2687 = vld [vmem:[%s2680 + $0x18] sm:$0xf]
      %v2688 = vld [vmem:[%s2680 + $0x1c] sm:$0xf]
      %v2689 = vld [vmem:[%s2680 + $0x20] sm:$0xf]
      %v2690 = vld [vmem:[%s2680 + $0x24] sm:$0xf]
      %v2691 = vld [vmem:[%s2680 + $0x28] sm:$0xf]
      %v2692 = vld [vmem:[%s2680 + $0x2c] sm:$0xf]
      %v2693 = vld [vmem:[%s2680 + $0x30] sm:$0xf]
      %v2694 = vld [vmem:[%s2680 + $0x34] sm:$0xf]
      %v2695 = vld [vmem:[%s2680 + $0x38] sm:$0xf]
      %v2696 = vld [vmem:[%s2680 + $0x3c] sm:$0xf]
      %v2708 = vunpack.c.l.b16 %v2669
      %v2709 = vunpack.c.l.b16 %v2670
      %v2710 = vunpack.c.l.b16 %v2671
      %v2711 = vunpack.c.l.b16 %v2672
      %v2712 = vunpack.c.l.b16 %v2673
      %v2713 = vunpack.c.l.b16 %v2674
      %v2714 = vunpack.c.l.b16 %v2675
      %v2715 = vunpack.c.l.b16 %v2676
      %v2716 = vunpack.c.l.b16 %v2677
      %v2717 = vunpack.c.l.b16 %v2678
      %v2718 = vunpack.c.l.b16 %v2679
      %v2719 = vpack.c.b16 %v2709, %v2708
      %v2720 = vpack.c.b16 %v2711, %v2710
      %v2721 = vpack.c.b16 %v2713, %v2712
      %v2722 = vpack.c.b16 %v2715, %v2714
      %v2723 = vpack.c.b16 %v2717, %v2716
      %v2724 = vpack.c.b16 %v2718, %v2718
      %vm2725 = vcmask 1044480
      %v2726 = vrot.slane %v2719, 3
      %v2727 = vrot.slane %v2720, 3
      %v2728 = vsel %vm2725, %v2726, %v2727
      %v2729 = vrot.slane %v2721, 3
      %v2730 = vsel %vm2725, %v2727, %v2729
      %v2731 = vrot.slane %v2722, 3
      %v2732 = vsel %vm2725, %v2729, %v2731
      %v2733 = vrot.slane %v2723, 3
      %v2734 = vsel %vm2725, %v2731, %v2733
      %v2735 = vrot.slane %v2724, 3
      %v2736 = vsel %vm2725, %v2733, %v2735
      %v2758 = vunpack.c.l.b16 %v2681
      %v2759 = vunpack.c.l.b16 %v2682
      %v2760 = vunpack.c.l.b16 %v2683
      %v2761 = vunpack.c.l.b16 %v2684
      %v2762 = vunpack.c.l.b16 %v2685
      %v2763 = vunpack.c.l.b16 %v2686
      %v2764 = vunpack.c.l.b16 %v2687
      %v2765 = vunpack.c.l.b16 %v2688
      %v2766 = vunpack.c.l.b16 %v2689
      %v2767 = vunpack.c.l.b16 %v2690
      %v2768 = vunpack.c.l.b16 %v2691
      %v2769 = vunpack.c.l.b16 %v2692
      %v2770 = vunpack.c.l.b16 %v2693
      %v2771 = vunpack.c.l.b16 %v2694
      %v2772 = vunpack.c.l.b16 %v2695
      %v2773 = vunpack.c.l.b16 %v2696
      %v2774 = vpack.c.b16 %v2759, %v2758
      %v2775 = vpack.c.b16 %v2761, %v2760
      %v2776 = vpack.c.b16 %v2763, %v2762
      %v2777 = vpack.c.b16 %v2765, %v2764
      %v2778 = vpack.c.b16 %v2767, %v2766
      %v2779 = vpack.c.b16 %v2769, %v2768
      %v2780 = vpack.c.b16 %v2771, %v2770
      %v2781 = vpack.c.b16 %v2773, %v2772
      %2790 = vmatprep.subr.bf16.mxu0 0
      %2791 = vmatpush1.bf16.msra.mxu0 %v2781
      %2792 = vmatprep.subr.bf16.mxu0 0
      %2793 = vmatpush1.bf16.msra.mxu0 %v2780
      %2794 = vmatprep.subr.bf16.mxu0 0
      %2795 = vmatpush1.bf16.msra.mxu0 %v2779
      %2796 = vmatprep.subr.bf16.mxu0 0
      %2797 = vmatpush1.bf16.msra.mxu0 %v2778
      %2798 = vmatprep.subr.bf16.mxu0 0
      %2799 = vmatpush1.bf16.msra.mxu0 %v2777
      %2800 = vmatprep.subr.bf16.mxu0 0
      %2801 = vmatpush1.bf16.msra.mxu0 %v2776
      %2802 = vmatprep.subr.bf16.mxu0 0
      %2803 = vmatpush1.bf16.msra.mxu0 %v2775
      %2804 = vmatprep.subr.bf16.mxu0 0
      %2805 = vmatpush1.bf16.msra.mxu0 %v2774
      %2806 = vmatprep.subr.bf16.mxu0 0
      %2807 = vmatpush2.bf16.msra.mxu0 0
      %2808 = vmatprep.subr.bf16.mxu0 0
      %2809 = vmatpush2.bf16.msra.mxu0 0
      %2810 = vmatprep.subr.bf16.mxu0 0
      %2811 = vmatpush2.bf16.msra.mxu0 0
      %2812 = vmatprep.subr.bf16.mxu0 0
      %2813 = vmatpush2.bf16.msra.mxu0 0
      %2814 = vmatprep.subr.bf16.mxu0 0
      %2815 = vmatpush2.bf16.msra.mxu0 0
      %2816 = vmatprep.subr.bf16.mxu0 0
      %2817 = vmatpush2.bf16.msra.mxu0 0
      %2818 = vmatprep.subr.bf16.mxu0 0
      %2819 = vmatpush2.bf16.msra.mxu0 0
      %2820 = vmatprep.subr.bf16.mxu0 0
      %2821 = vmatpush2.bf16.msra.mxu0 0
      %2822 = vmatprep.mubr.bf16.mxu0 0
      %2823 = vmatmul.mubr.bf16.gmra.mxu0 %v2728
      %v2824 = vpop.f32.mrf.mxu0
      %v2825 = vadd.f32 0.0, %v2824
      %v2826 = vpop.f32.mrf.mxu0
      %v2827 = vpop.f32.mrf.mxu0
      %v2828 = vadd.f32 0.0, %v2827
      %v2829 = vpop.f32.mrf.mxu0
      %2830 = vmatprep.mubr.bf16.mxu0 0
      %2831 = vmatmul.mubr.bf16.gmra.mxu0 %v2730
      %v2832 = vpop.f32.mrf.mxu0
      %v2833 = vadd.f32 0.0, %v2832
      %v2834 = vpop.f32.mrf.mxu0
      %v2835 = vpop.f32.mrf.mxu0
      %v2836 = vadd.f32 0.0, %v2835
      %v2837 = vpop.f32.mrf.mxu0
      %2838 = vmatprep.mubr.bf16.mxu0 0
      %2839 = vmatmul.mubr.bf16.gmra.mxu0 %v2732
      %v2840 = vpop.f32.mrf.mxu0
      %v2841 = vadd.f32 0.0, %v2840
      %v2842 = vpop.f32.mrf.mxu0
      %v2843 = vpop.f32.mrf.mxu0
      %v2844 = vadd.f32 0.0, %v2843
      %v2845 = vpop.f32.mrf.mxu0
      %2846 = vmatprep.mubr.bf16.mxu0 0
      %2847 = vmatmul.mubr.bf16.gmra.mxu0 %v2734
      %v2848 = vpop.f32.mrf.mxu0
      %v2849 = vadd.f32 0.0, %v2848
      %v2850 = vpop.f32.mrf.mxu0
      %v2851 = vpop.f32.mrf.mxu0
      %v2852 = vadd.f32 0.0, %v2851
      %v2853 = vpop.f32.mrf.mxu0
      %2854 = vmatprep.mubr.bf16.mxu0 0
      %2855 = vmatmul.mubr.bf16.gmra.mxu0 %v2736
      %v2856 = vpop.f32.mrf.mxu0
      %v2857 = vadd.f32 0.0, %v2856
      %v2858 = vpop.f32.mrf.mxu0
      %v2859 = vpop.f32.mrf.mxu0
      %v2860 = vadd.f32 0.0, %v2859
      %v2861 = vpop.f32.mrf.mxu0
      %2862 = vdwg.mxu0
      %v2863 = vadd.f32 %v2659, %v2825
      %v2864 = vadd.f32 %v2660, %v2828
      %v2865 = vadd.f32 %v2661, %v2833
      %v2866 = vadd.f32 %v2662, %v2836
      %v2867 = vadd.f32 %v2663, %v2841
      %v2868 = vadd.f32 %v2664, %v2844
      %v2869 = vadd.f32 %v2665, %v2849
      %v2870 = vadd.f32 %v2666, %v2852
      %v2871 = vadd.f32 %v2667, %v2857
      %v2872 = vadd.f32 %v2668, %v2860
      %2873 = vst [vmem:[#allocation3] sm:$0xff] %v2863
      %2874 = vst [vmem:[#allocation3 + $0x8] sm:$0xff] %v2864
      %2875 = vst [vmem:[#allocation3 + $0x10] sm:$0xff] %v2865
      %2876 = vst [vmem:[#allocation3 + $0x18] sm:$0xff] %v2866
      %2877 = vst [vmem:[#allocation3 + $0x20] sm:$0xff] %v2867
      %2878 = vst [vmem:[#allocation3 + $0x28] sm:$0xff] %v2868
      %2879 = vst [vmem:[#allocation3 + $0x30] sm:$0xff] %v2869
      %2880 = vst [vmem:[#allocation3 + $0x38] sm:$0xff] %v2870
      %2881 = vst [vmem:[#allocation3 + $0x40] sm:$0xff] %v2871
      %2882 = vst [vmem:[#allocation3 + $0x48] sm:$0xff] %v2872
      %vm2883 = vcmp.lt.s32.totalorder %v479, 8
      %vm2884 = vcmp.lt.s32.totalorder %v480, 8
      %vm2885 = vcmp.lt.s32.totalorder %v481, 8
      %vm2886 = vcmp.lt.s32.totalorder %v482, 8
      %vm2887 = vcmp.lt.s32.totalorder %v483, 8
      %vm2888 = vcmp.lt.s32.totalorder %v484, 8
      %vm2889 = vcmp.lt.s32.totalorder %v485, 8
      %vm2890 = vcmp.lt.s32.totalorder %v486, 8
      %vm2891 = vcmp.lt.s32.totalorder %v487, 8
      %vm2892 = vcmp.lt.s32.totalorder %v488, 8
      %v2893 = vld [vmem:[#allocation3] sm:$0xff]
      %v2894 = vld [vmem:[#allocation3 + $0x8] sm:$0xff]
      %v2895 = vld [vmem:[#allocation3 + $0x10] sm:$0xff]
      %v2896 = vld [vmem:[#allocation3 + $0x18] sm:$0xff]
      %v2897 = vld [vmem:[#allocation3 + $0x20] sm:$0xff]
      %v2898 = vld [vmem:[#allocation3 + $0x28] sm:$0xff]
      %v2899 = vld [vmem:[#allocation3 + $0x30] sm:$0xff]
      %v2900 = vld [vmem:[#allocation3 + $0x38] sm:$0xff]
      %v2901 = vld [vmem:[#allocation3 + $0x40] sm:$0xff]
      %v2902 = vld [vmem:[#allocation3 + $0x48] sm:$0xff]
      %v2903 = vsel %vm2883, %v2893, 0.0
      %v2904 = vsel %vm2884, %v2894, 0.0
      %v2905 = vsel %vm2885, %v2895, 0.0
      %v2906 = vsel %vm2886, %v2896, 0.0
      %v2907 = vsel %vm2887, %v2897, 0.0
      %v2908 = vsel %vm2888, %v2898, 0.0
      %v2909 = vsel %vm2889, %v2899, 0.0
      %v2910 = vsel %vm2890, %v2900, 0.0
      %v2911 = vsel %vm2891, %v2901, 0.0
      %v2912 = vsel %vm2892, %v2902, 0.0
      %v2913 = vld [vmem:[%s5] sm:$0x1]
      %v2914 = vadd.f32 %v2903, %v2904
      %v2915 = vadd.f32 %v2914, %v2905
      %v2916 = vadd.f32 %v2915, %v2906
      %v2917 = vadd.f32 %v2916, %v2907
      %v2918 = vadd.f32 %v2917, %v2908
      %v2919 = vadd.f32 %v2918, %v2909
      %v2920 = vadd.f32 %v2919, %v2910
      %v2921 = vadd.f32 %v2920, %v2911
      %v2922 = vadd.f32 %v2921, %v2912
      %v2923 = vrot.slane %v2922, 4
      %v2924 = vadd.f32 %v2922, %v2923
      %v2925 = vrot.slane %v2924, 2
      %v2926 = vadd.f32 %v2924, %v2925
      %v2927 = vrot.slane %v2926, 1
      %v2928 = vadd.f32 %v2926, %v2927
      %v2929 = vadd.f32 %v2913, %v2928
      %2930 = vst [vmem:[%s5] sm:$0x1] %v2929
      %v2931 = vld [vmem:[%s6] sm:$0x1]
      %v2932 = vmul.f32 %v2903, %v2903
      %v2933 = vmul.f32 %v2904, %v2904
      %v2934 = vmul.f32 %v2905, %v2905
      %v2935 = vmul.f32 %v2906, %v2906
      %v2936 = vmul.f32 %v2907, %v2907
      %v2937 = vmul.f32 %v2908, %v2908
      %v2938 = vmul.f32 %v2909, %v2909
      %v2939 = vmul.f32 %v2910, %v2910
      %v2940 = vmul.f32 %v2911, %v2911
      %v2941 = vmul.f32 %v2912, %v2912
      %v2942 = vadd.f32 %v2932, %v2933
      %v2943 = vadd.f32 %v2942, %v2934
      %v2944 = vadd.f32 %v2943, %v2935
      %v2945 = vadd.f32 %v2944, %v2936
      %v2946 = vadd.f32 %v2945, %v2937
      %v2947 = vadd.f32 %v2946, %v2938
      %v2948 = vadd.f32 %v2947, %v2939
      %v2949 = vadd.f32 %v2948, %v2940
      %v2950 = vadd.f32 %v2949, %v2941
      %v2951 = vrot.slane %v2950, 4
      %v2952 = vadd.f32 %v2950, %v2951
      %v2953 = vrot.slane %v2952, 2
      %v2954 = vadd.f32 %v2952, %v2953
      %v2955 = vrot.slane %v2954, 1
      %v2956 = vadd.f32 %v2954, %v2955
      %v2957 = vadd.f32 %v2931, %v2956
      %2958 = vst [vmem:[%s6] sm:$0x1] %v2957
      %v2959 = vpack.c.bf16 %v2904, %v2903
      %v2960 = vpack.c.bf16 %v2906, %v2905
      %v2961 = vpack.c.bf16 %v2908, %v2907
      %v2962 = vpack.c.bf16 %v2910, %v2909
      %v2963 = vpack.c.bf16 %v2912, %v2911
      %v2969 = vunpack.c.l.b16 %v2959
      %v2970 = vunpack.c.h.b16 %v2959
      %v2971 = vunpack.c.l.b16 %v2960
      %v2972 = vunpack.c.h.b16 %v2960
      %v2973 = vunpack.c.l.b16 %v2961
      %v2974 = vunpack.c.h.b16 %v2961
      %v2975 = vunpack.c.l.b16 %v2962
      %v2976 = vunpack.c.h.b16 %v2962
      %v2977 = vunpack.c.l.b16 %v2963
      %v2978 = vunpack.c.h.b16 %v2963
      %v2979 = vpack.c.b16 %v2969, %v2969
      %v2980 = vpack.c.b16 %v2970, %v2970
      %v2981 = vpack.c.b16 %v2971, %v2971
      %v2982 = vpack.c.b16 %v2972, %v2972
      %v2983 = vpack.c.b16 %v2973, %v2973
      %v2984 = vpack.c.b16 %v2974, %v2974
      %v2985 = vpack.c.b16 %v2975, %v2975
      %v2986 = vpack.c.b16 %v2976, %v2976
      %v2987 = vpack.c.b16 %v2977, %v2977
      %v2988 = vpack.c.b16 %v2978, %v2978
      %2999 = vst [vmem:[%s246] sm:$0xf] %v2979
      %3000 = vst [vmem:[%s246 + $0x4] sm:$0xf] %v2980
      %3001 = vst [vmem:[%s246 + $0x8] sm:$0xf] %v2981
      %3002 = vst [vmem:[%s246 + $0xc] sm:$0xf] %v2982
      %3003 = vst [vmem:[%s246 + $0x10] sm:$0xf] %v2983
      %3004 = vst [vmem:[%s246 + $0x14] sm:$0xf] %v2984
      %3005 = vst [vmem:[%s246 + $0x18] sm:$0xf] %v2985
      %3006 = vst [vmem:[%s246 + $0x1c] sm:$0xf] %v2986
      %3007 = vst [vmem:[%s246 + $0x20] sm:$0xf] %v2987
      %3008 = vst [vmem:[%s246 + $0x24] sm:$0xf] %v2988
      %p3009 = scmp.lt.s32.totalorder %s18, 1
      %s3010 = scalar_select %p3009, %s18, 1
      %s3011 = smul.addr %s3010, 10
      %s3012 = smul.addr %s3011, 4
      %s3013 = scalar_lea.vmem %s4, %s3012
      // Predicated region
      $region41: #{resnet_layer_forward.4} parent=35 // pred_check
        %p3014 = pneg %p125
      $region42: #{resnet_layer_forward.4} parent=35 // pred_check_branch
        %3016 = sbr.rel (%p3014) target = $region44
      $region43: #{resnet_layer_forward.4} parent=35 // pred_region
        _
      $region44: #{resnet_layer_forward.4} parent=35 // pred_fallthru
        _
      // Predicated region
      $region45: #{resnet_layer_forward.4} parent=35 // pred_check
        %p3017 = pneg %p146
      $region46: #{resnet_layer_forward.4} parent=35 // pred_check_branch
        %3019 = sbr.rel (%p3017) target = $region48
      $region47: #{resnet_layer_forward.4} parent=35 // pred_region
        _
      $region48: #{resnet_layer_forward.4} parent=35 // pred_fallthru
        _
      // Predicated region
      $region49: #{resnet_layer_forward.4} parent=35 // pred_check
        %p3020 = pneg %p167
      $region50: #{resnet_layer_forward.4} parent=35 // pred_check_branch
        %3022 = sbr.rel (%p3020) target = $region52
      $region51: #{resnet_layer_forward.4} parent=35 // pred_region
        _
      $region52: #{resnet_layer_forward.4} parent=35 // pred_fallthru
        _
      // Predicated region
      $region53: #{resnet_layer_forward.4} parent=35 // pred_check
        %p3023 = pneg %p146
      $region54: #{resnet_layer_forward.4} parent=35 // pred_check_branch
        %3025 = sbr.rel (%p3023) target = $region56
      $region55: #{resnet_layer_forward.4} parent=35 // pred_region
        _
      $region56: #{resnet_layer_forward.4} parent=35 // pred_fallthru
        _
      // Predicated region
      $region57: #{resnet_layer_forward.4} parent=35 // pred_check
        %p3026 = pneg %p167
      $region58: #{resnet_layer_forward.4} parent=35 // pred_check_branch
        %3028 = sbr.rel (%p3026) target = $region60
      $region59: #{resnet_layer_forward.4} parent=35 // pred_region
        _
      $region60: #{resnet_layer_forward.4} parent=35 // pred_fallthru
        _
    $region36: #{resnet_layer_forward.4} parent=5 // pred_fallthru
      _
    %p3029 = scmp.le.s32.totalorder 2, %s13
    // Predicated region
    $region61: #{resnet_layer_forward.4} parent=5 // pred_check
      %p3030 = pneg %p3029
    $region62: #{resnet_layer_forward.4} parent=5 // pred_check_branch
      %3032 = sbr.rel (%p3030) target = $region64
    $region63: #{resnet_layer_forward.4} parent=5 // pred_region
      %s3033 = ssub.s32 %s13, 2
      // Predicated region
      $region65: #{resnet_layer_forward.4} parent=63 // pred_check
        %p3034 = pneg %p131
      $region66: #{resnet_layer_forward.4} parent=63 // pred_check_branch
        %3036 = sbr.rel (%p3034) target = $region68
      $region67: #{resnet_layer_forward.4} parent=63 // pred_region
        %p3037 = scmp.lt.s32.totalorder %s19, 1
        %s3038 = scalar_select %p3037, %s19, 1
        %s3039 = smul.addr %s3038, 10
        %s3040 = smul.addr %s3039, 4
        %s3041 = scalar_lea.vmem %s4, %s3040
      $region68: #{resnet_layer_forward.4} parent=63 // pred_fallthru
        _
    $region64: #{resnet_layer_forward.4} parent=5 // pred_fallthru
      _
  $region6: #{resnet_layer_forward.4} parent=0 // loop_footer
    %s17 = sadd.s32 1, %s13
  $region7: #{resnet_layer_forward.4} parent=0 // loop_footer_branch
    %12 = sbr.rel target = $region3
  $region8: #{resnet_layer_forward.4} parent=0 // loop_exit
    _

</llo_original>
